<compile_context>
chip_gen: v6e
topology: v6e:2x2x1
jax: 0.10.0
libtpu: 0.0.40
codegen_flags: <defaults>
</compile_context>

<pallas_src>
import functools
import math

import jax
import jax.numpy as jnp
from jax.experimental import pallas as pl
from jax.experimental.pallas import tpu as pltpu


def _round_up(x, m):
    return ((x + m - 1) // m) * m


# ----------------------------------------------------------------------------
# Pallas kernel 1: tiled matmul + bias (patch embedding & de-embedding)
# ----------------------------------------------------------------------------
def _linear_kernel(x_ref, w_ref, b_ref, o_ref):
    acc = jnp.dot(x_ref[...], w_ref[...], preferred_element_type=jnp.float32)
    o_ref[...] = (acc + b_ref[...].astype(jnp.float32)).astype(o_ref.dtype)


def linear(x, w, b, *, out_dtype=None, tm=256, tn=512):
    """x:(M,K) @ w:(K,N) + b:(1,N) -> (M,N).

    Grid over (M tiles, N tiles); N is padded up to a multiple of 128 so the
    output stores are lane-dense (pad is sliced off afterwards in JAX).
    """
    M, K = x.shape
    N = w.shape[1]
    out_dtype = out_dtype if out_dtype is not None else x.dtype

    tm = min(tm, _round_up(M, 8))
    tn = min(tn, _round_up(N, 128))
    Mp, Np = _round_up(M, tm), _round_up(N, tn)
    if Mp != M:
        x = jnp.pad(x, ((0, Mp - M), (0, 0)))
    if Np != N:
        w = jnp.pad(w, ((0, 0), (0, Np - N)))
        b = jnp.pad(b, ((0, 0), (0, Np - N)))

    cost = pl.CostEstimate(
        flops=2 * Mp * K * Np,
        transcendentals=0,
        bytes_accessed=(Mp * K + K * Np + Np) * x.dtype.itemsize
        + Mp * Np * jnp.dtype(out_dtype).itemsize,
    )

    out = pl.pallas_call(
        _linear_kernel,
        grid=(Mp // tm, Np // tn),
        in_specs=[
            pl.BlockSpec((tm, K), lambda i, j: (i, 0)),
            pl.BlockSpec((K, tn), lambda i, j: (0, j)),
            pl.BlockSpec((1, tn), lambda i, j: (0, j)),
        ],
        out_specs=pl.BlockSpec((tm, tn), lambda i, j: (i, j)),
        out_shape=jax.ShapeDtypeStruct((Mp, Np), out_dtype),
        compiler_params=pltpu.CompilerParams(
            dimension_semantics=("parallel", "parallel"),
            vmem_limit_bytes=64 * 1024 * 1024,
        ),
        cost_estimate=cost,
    )(x, w, b)
    if (Mp, Np) != (M, N):
        out = out[:M, :N]
    return out


# ----------------------------------------------------------------------------
# Pallas kernel 2: fused transformer encoder layer (grid = batch x query tiles)
# ----------------------------------------------------------------------------
_ENC_PARAM_ORDER = ("ln1_g", "ln1_b", "wqkv", "bqkv", "wo_h", "bo",
                    "ln2_g", "ln2_b", "w1", "b1", "w2", "b2")


def _make_encoder_kernel(num_heads, head_dim):
    scale = 1.0 / math.sqrt(head_dim)
    gelu_c = math.sqrt(2.0 / math.pi)
    f32 = jnp.float32
    bf16 = jnp.bfloat16

    def kernel(xt_ref, xf_ref, g1_ref, b1_ref, wqkv_ref, bqkv_ref, wo_ref,
               bo_ref, g2_ref, b2_ref, w1_ref, bb1_ref, w2_ref, bb2_ref,
               o_ref):
        x_t = xt_ref[0].astype(f32)        # (tq, D) residual rows of this tile
        x_f = xf_ref[0].astype(f32)        # (N, D)  full sequence (keys/values)

        def ln(v, g_ref, b_ref):
            mu = jnp.mean(v, axis=-1, keepdims=True)
            var = jnp.mean(jnp.square(v - mu), axis=-1, keepdims=True)
            return ((v - mu) * jax.lax.rsqrt(var + 1e-5)
                    * g_ref[...].astype(f32) + b_ref[...].astype(f32))

        # --- multi-head self-attention (pre-LN) ---
        h_f = ln(x_f, g1_ref, b1_ref).astype(bf16)   # keys / values source
        h_t = ln(x_t, g1_ref, b1_ref).astype(bf16)   # queries source

        acc = jnp.zeros_like(x_t)                    # (tq, D) f32 accumulator
        for hh in range(num_heads):
            q = (jnp.dot(h_t, wqkv_ref[0, hh], preferred_element_type=f32)
                 + bqkv_ref[0, hh].astype(f32))
            k = (jnp.dot(h_f, wqkv_ref[1, hh], preferred_element_type=f32)
                 + bqkv_ref[1, hh].astype(f32))
            v = (jnp.dot(h_f, wqkv_ref[2, hh], preferred_element_type=f32)
                 + bqkv_ref[2, hh].astype(f32))
            # (tq, dh) x (N, dh)^T -> (tq, N), contraction on last dims
            s = jax.lax.dot_general(
                q.astype(bf16), k.astype(bf16), (((1,), (1,)), ((), ())),
                preferred_element_type=f32) * scale
            s = s - jnp.max(s, axis=-1, keepdims=True)
            p = jnp.exp(s)
            p = p * pl.reciprocal(jnp.sum(p, axis=-1, keepdims=True),
                                  approx=True)
            pv = jnp.dot(p.astype(bf16), v.astype(bf16),
                         preferred_element_type=f32)        # (tq, dh)
            acc = acc + jnp.dot(pv.astype(bf16), wo_ref[hh],
                                preferred_element_type=f32)  # (tq, D)
        x_t = x_t + acc + bo_ref[...].astype(f32)

        # --- MLP (pre-LN, GELU tanh approximation) ---
        h2 = ln(x_t, g2_ref, b2_ref).astype(bf16)
        m = (jnp.dot(h2, w1_ref[...], preferred_element_type=f32)
             + bb1_ref[...].astype(f32))
        m = 0.5 * m * (1.0 + jnp.tanh(gelu_c * (m + 0.044715 * m * m * m)))
        m = (jnp.dot(m.astype(bf16), w2_ref[...], preferred_element_type=f32)
             + bb2_ref[...].astype(f32))

        o_ref[0] = (x_t + m).astype(o_ref.dtype)

    return kernel


def encoder_layer(x, lp, num_heads, *, tq=None):
    """x: (B, N, D) bf16 -> (B, N, D) bf16.  Grid = (batch, query tiles)."""
    B, N, D = x.shape
    assert D % num_heads == 0, "embed_dim must be divisible by num_heads"
    head_dim = D // num_heads
    if tq is None:
        # Token-tile the query rows when the sequence is long (caps the (tq,N)
        # score block and the (tq, mlp) activation; also feeds both v7x cores).
        tq = 256 if (N > 256 and N % 256 == 0) else N
    nq = N // tq

    kernel = _make_encoder_kernel(num_heads, head_dim)
    weights = [lp[name] for name in _ENC_PARAM_ORDER]

    def full_spec(arr):
        nd = arr.ndim
        return pl.BlockSpec(arr.shape, lambda b, qi, _nd=nd: (0,) * _nd)

    in_specs = [
        pl.BlockSpec((1, tq, D), lambda b, qi: (b, qi, 0)),   # residual rows
        pl.BlockSpec((1, N, D), lambda b, qi: (b, 0, 0)),     # full sequence
    ] + [full_spec(w) for w in weights]
    # TODO(synk): on v7x, mark the constant-index weight specs
    # pipeline_mode=pl.Buffered(1) to drop their double buffers.

    mlp_dim = lp["w1"].shape[-1]
    itemsize = x.dtype.itemsize
    flops = B * (8 * N * D * D + 4 * N * N * D + 4 * N * D * mlp_dim)
    transc = B * (num_heads * N * N + N * mlp_dim)
    bytes_acc = (3 * B * N * D) * itemsize + sum(
        w.size * w.dtype.itemsize for w in weights)

    return pl.pallas_call(
        kernel,
        grid=(B, nq),
        in_specs=in_specs,
        out_specs=pl.BlockSpec((1, tq, D), lambda b, qi: (b, qi, 0)),
        out_shape=jax.ShapeDtypeStruct((B, N, D), x.dtype),
        compiler_params=pltpu.CompilerParams(
            dimension_semantics=("parallel", "parallel"),
            vmem_limit_bytes=64 * 1024 * 1024,
        ),
        cost_estimate=pl.CostEstimate(
            flops=flops, transcendentals=transc, bytes_accessed=bytes_acc),
    )(x, x, *weights)


# ----------------------------------------------------------------------------
# Full ViT forward (Pallas kernels + JAX reshape/transpose glue)
# ----------------------------------------------------------------------------
def vit_forward(x, p, cfg):
    B, C, H, W = x.shape
    ph, pw = cfg["patch_size_h"], cfg["patch_size_w"]
    Hp, Wp = H // ph, W // pw
    D, Cout = cfg["embed_dim"], cfg["out_channels"]

    # PatchEmbeddingConv: Conv2d(C, D, kernel=(ph,pw), stride=(ph,pw)) == matmul
    patches = x.reshape(B, C, Hp, ph, Wp, pw).transpose(0, 2, 4, 1, 3, 5)
    patches = patches.reshape(B * Hp * Wp, C * ph * pw).astype(p["patch_w"].dtype)
    tok = linear(patches, p["patch_w"], p["patch_b"]).reshape(B, Hp * Wp, D)
    tok = tok + p["pos_emb"]                       # learned positional embedding

    # Transformer encoder stack (each layer = one fused Pallas kernel)
    for lp in p["layers"]:
        tok = encoder_layer(tok, lp, cfg["num_heads"])

    # de_embedding: Linear(D, ph*pw*Cout) as a tiled Pallas matmul (lane-dense
    # padded output, final permute done in JAX)
    y = linear(tok.reshape(B * Hp * Wp, D), p["deembed_w"], p["deembed_b"],
               out_dtype=jnp.float32)

    # view(B,Hp,Wp,ph,pw,Cout).permute(0,5,1,3,2,4).reshape(B,Cout,H,W)
    y = y.reshape(B, Hp, Wp, ph, pw, Cout).transpose(0, 5, 1, 3, 2, 4)
    return y.reshape(B, Cout, H, W)


# ----------------------------------------------------------------------------
# Pure-JAX reference (mirrors the kernel's dtype policy for tight validation)
# ----------------------------------------------------------------------------
def _encoder_ref(x, lp, num_heads):
    f32, bf16 = jnp.float32, jnp.bfloat16
    B, N, D = x.shape
    dh = D // num_heads
    scale = 1.0 / math.sqrt(dh)

    def ln(v, g, b):
        mu = v.mean(-1, keepdims=True)
        var = ((v - mu) ** 2).mean(-1, keepdims=True)
        return (v - mu) * jax.lax.rsqrt(var + 1e-5) * g.astype(f32) + b.astype(f32)

    x32 = x.astype(f32)
    h = ln(x32, lp["ln1_g"], lp["ln1_b"]).astype(bf16)

    def proj(i):
        return (jnp.einsum("bnd,hdk->bhnk", h, lp["wqkv"][i],
                           preferred_element_type=f32)
                + lp["bqkv"][i][None].astype(f32))

    q, k, v = proj(0), proj(1), proj(2)
    s = jnp.einsum("bhqk,bhnk->bhqn", q.astype(bf16), k.astype(bf16),
                   preferred_element_type=f32) * scale
    s = s - s.max(-1, keepdims=True)
    pr = jnp.exp(s)
    pr = pr / pr.sum(-1, keepdims=True)
    pv = jnp.einsum("bhqn,bhnk->bhqk", pr.astype(bf16), v.astype(bf16),
                    preferred_element_type=f32)
    attn = (jnp.einsum("bhqk,hkd->bqd", pv.astype(bf16), lp["wo_h"],
                       preferred_element_type=f32)
            + lp["bo"].astype(f32))
    x32 = x32 + attn

    h2 = ln(x32, lp["ln2_g"], lp["ln2_b"]).astype(bf16)
    m = jnp.dot(h2, lp["w1"], preferred_element_type=f32) + lp["b1"].astype(f32)
    c = math.sqrt(2.0 / math.pi)
    m = 0.5 * m * (1.0 + jnp.tanh(c * (m + 0.044715 * m ** 3)))
    m = jnp.dot(m.astype(bf16), lp["w2"], preferred_element_type=f32) + lp["b2"].astype(f32)
    return (x32 + m).astype(bf16)


def vit_reference(x, p, cfg):
    f32, bf16 = jnp.float32, jnp.bfloat16
    B, C, H, W = x.shape
    ph, pw = cfg["patch_size_h"], cfg["patch_size_w"]
    Hp, Wp = H // ph, W // pw
    D, Cout = cfg["embed_dim"], cfg["out_channels"]
    patches = x.reshape(B, C, Hp, ph, Wp, pw).transpose(0, 2, 4, 1, 3, 5)
    patches = patches.reshape(B, Hp * Wp, C * ph * pw).astype(bf16)
    tok = (jnp.dot(patches, p["patch_w"], preferred_element_type=f32)
           + p["patch_b"].astype(f32)).astype(bf16)
    tok = tok + p["pos_emb"]
    for lp in p["layers"]:
        tok = _encoder_ref(tok, lp, cfg["num_heads"])
    y = (jnp.dot(tok, p["deembed_w"], preferred_element_type=f32)
         + p["deembed_b"].astype(f32))
    y = y.reshape(B, Hp, Wp, ph, pw, Cout).transpose(0, 5, 1, 3, 2, 4)
    return y.reshape(B, Cout, H, W)


# ----------------------------------------------------------------------------
# Parameter init (PyTorch-like layout, f32) + host-side device preparation
# ----------------------------------------------------------------------------
def init_params(key, cfg, num_patches):
    D, C = cfg["embed_dim"], cfg["in_channels"]
    ph, pw, Cout = cfg["patch_size_h"], cfg["patch_size_w"], cfg["out_channels"]
    mlp = cfg["mlp_dim"]

    def nrm(k, shape, std=0.02):
        return std * jax.random.normal(k, shape, jnp.float32)

    keys = iter(jax.random.split(key, 8 + 8 * cfg["num_layers"]))
    params = {
        "conv_w": nrm(next(keys), (D, C, ph, pw)),
        "conv_b": jnp.zeros((1, D), jnp.float32),
        "pos_emb": nrm(next(keys), (1, num_patches, D)),
        "deembed_w": nrm(next(keys), (D, ph * pw * Cout)),
        "deembed_b": jnp.zeros((1, ph * pw * Cout), jnp.float32),
        "layers": [],
    }
    for _ in range(cfg["num_layers"]):
        lp = {
            "ln1_g": jnp.ones((1, D), jnp.float32),
            "ln1_b": jnp.zeros((1, D), jnp.float32),
            "wq": nrm(next(keys), (D, D)), "bq": jnp.zeros((1, D), jnp.float32),
            "wk": nrm(next(keys), (D, D)), "bk": jnp.zeros((1, D), jnp.float32),
            "wv": nrm(next(keys), (D, D)), "bv": jnp.zeros((1, D), jnp.float32),
            "wo": nrm(next(keys), (D, D)), "bo": jnp.zeros((1, D), jnp.float32),
            "ln2_g": jnp.ones((1, D), jnp.float32),
            "ln2_b": jnp.zeros((1, D), jnp.float32),
            "w1": nrm(next(keys), (D, mlp)), "b1": jnp.zeros((1, mlp), jnp.float32),
            "w2": nrm(next(keys), (mlp, D)), "b2": jnp.zeros((1, D), jnp.float32),
        }
        params["layers"].append(lp)
    return params


def prepare_params(params, cfg, dtype=jnp.bfloat16):
    """Cast to bf16 and pre-stack per-head QKV / output-projection weights."""
    D, Hh = cfg["embed_dim"], cfg["num_heads"]
    assert D % Hh == 0
    dh = D // Hh
    C, ph, pw = cfg["in_channels"], cfg["patch_size_h"], cfg["patch_size_w"]

    def c(a):
        return a.astype(dtype)

    def split_w(w):   # (D, D) -> (H, D, dh)
        return w.reshape(D, Hh, dh).transpose(1, 0, 2)

    def split_b(b):   # (1, D) -> (H, 1, dh)
        return b.reshape(Hh, dh)[:, None, :]

    dp = {
        "patch_w": c(params["conv_w"].reshape(D, C * ph * pw).T),
        "patch_b": c(params["conv_b"]),
        "pos_emb": c(params["pos_emb"]),
        "deembed_w": c(params["deembed_w"]),
        "deembed_b": c(params["deembed_b"]),
        "layers": [],
    }
    for lp in params["layers"]:
        dp["layers"].append({
            "ln1_g": c(lp["ln1_g"]), "ln1_b": c(lp["ln1_b"]),
            "wqkv": c(jnp.stack([split_w(lp["wq"]), split_w(lp["wk"]),
                                 split_w(lp["wv"])])),          # (3, H, D, dh)
            "bqkv": c(jnp.stack([split_b(lp["bq"]), split_b(lp["bk"]),
                                 split_b(lp["bv"])])),          # (3, H, 1, dh)
            "wo_h": c(lp["wo"].reshape(Hh, dh, D)),             # (H, dh, D)
            "bo": c(lp["bo"]),
            "ln2_g": c(lp["ln2_g"]), "ln2_b": c(lp["ln2_b"]),
            "w1": c(lp["w1"]), "b1": c(lp["b1"]),
            "w2": c(lp["w2"]), "b2": c(lp["b2"]),
        })
    return dp


if __name__ == "__main__":
    cfg = dict(
        in_channels=4, out_channels=3,
        patch_size_h=4, patch_size_w=4,
        embed_dim=32, num_heads=4, num_layers=2, mlp_dim=64,
    )
    B, H, W = 2, 16, 16

    key = jax.random.PRNGKey(0)
    key, xk = jax.random.split(key)
    x = jax.random.normal(xk, (B, cfg["in_channels"], H, W), jnp.float32)

    num_patches = (H // cfg["patch_size_h"]) * (W // cfg["patch_size_w"])
    params = init_params(key, cfg, num_patches)
    dparams = prepare_params(params, cfg)          # bf16, per-head stacked

    fwd = jax.jit(functools.partial(vit_forward, cfg=cfg))
    out = jax.block_until_ready(fwd(x, dparams))

    ref = vit_reference(x, dparams, cfg)
    assert out.shape == (B, cfg["out_channels"], H, W), out.shape
    err = float(jnp.max(jnp.abs(out - ref)))
    assert jnp.allclose(out, ref, rtol=2e-2, atol=5e-3), f"max abs err {err}"

    print("KERNEL_OK")
</pallas_src>

<mosaic_0001>
module attributes {stable_mosaic.version = 11 : i64} {
  func.func @_linear_kernel(%arg0: i32, %arg1: i32, %arg2: memref<32x64xbf16, #tpu.memory_space<vmem>>, %arg3: memref<64x128xbf16, #tpu.memory_space<vmem>>, %arg4: memref<1x128xbf16, #tpu.memory_space<vmem>>, %arg5: memref<32x128xbf16, #tpu.memory_space<vmem>>) attributes {dimension_semantics = [#tpu.dimension_semantics<parallel>, #tpu.dimension_semantics<parallel>], iteration_bounds = array<i64: 1, 1>, scalar_prefetch = 0 : i64, scratch_operands = 0 : i64, tpu.core_type = #tpu.core_type<tc>, window_params = [{transform_indices = @transform_0, window_bounds = array<i64: 32, 64>}, {transform_indices = @transform_1, window_bounds = array<i64: 64, 128>}, {transform_indices = @transform_2, window_bounds = array<i64: 1, 128>}, {transform_indices = @transform_3, window_bounds = array<i64: 32, 128>}]} {
    %c0 = arith.constant 0 : index
    %c0_0 = arith.constant 0 : index
    %0 = vector.load %arg2[%c0, %c0_0] : memref<32x64xbf16, #tpu.memory_space<vmem>>, vector<32x64xbf16>
    %c0_1 = arith.constant 0 : index
    %c0_2 = arith.constant 0 : index
    %1 = vector.load %arg3[%c0_1, %c0_2] : memref<64x128xbf16, #tpu.memory_space<vmem>>, vector<64x128xbf16>
    %cst = arith.constant dense<0.000000e+00> : vector<32x128xf32>
    %2 = tpu.matmul %0, %1, %cst {dimension_numbers = #tpu.dot_dimension_numbers<[1], [0], [0], [1], [0, 0, 1, 1], [], []>} : vector<32x64xbf16>, vector<64x128xbf16>, vector<32x128xf32> -> vector<32x128xf32>
    %c0_3 = arith.constant 0 : index
    %c0_4 = arith.constant 0 : index
    %3 = vector.load %arg4[%c0_3, %c0_4] : memref<1x128xbf16, #tpu.memory_space<vmem>>, vector<1x128xbf16>
    %4 = arith.extf %3 : vector<1x128xbf16> to vector<1x128xf32>
    %5 = vector.broadcast %4 : vector<1x128xf32> to vector<32x128xf32>
    %6 = arith.addf %2, %5 : vector<32x128xf32>
    %7 = arith.truncf %6 : vector<32x128xf32> to vector<32x128xbf16>
    %c0_5 = arith.constant 0 : index
    %c0_6 = arith.constant 0 : index
    %8 = vector.load %arg5[%c0_5, %c0_6] : memref<32x128xbf16, #tpu.memory_space<vmem>>, vector<32x128xbf16>
    tpu.vector_store %arg5[%c0_5, %c0_6], %7 {strides = array<i32>} : memref<32x128xbf16, #tpu.memory_space<vmem>>, vector<32x128xbf16>,
    return
  }
  func.func @transform_0(%arg0: i32, %arg1: i32) -> (i32, i32) {
    %c0_i32 = arith.constant 0 : i32
    %c0_i32_0 = arith.constant 0 : i32
    return %arg0, %c0_i32 : i32, i32
  }
  func.func @transform_1(%arg0: i32, %arg1: i32) -> (i32, i32) {
    %c0_i32 = arith.constant 0 : i32
    %c0_i32_0 = arith.constant 0 : i32
    return %c0_i32, %arg1 : i32, i32
  }
  func.func @transform_2(%arg0: i32, %arg1: i32) -> (i32, i32) {
    %c0_i32 = arith.constant 0 : i32
    %c0_i32_0 = arith.constant 0 : i32
    return %c0_i32, %arg1 : i32, i32
  }
  func.func @transform_3(%arg0: i32, %arg1: i32) -> (i32, i32) {
    %c0_i32 = arith.constant 0 : i32
    return %arg0, %arg1 : i32, i32
  }
}

module attributes {stable_mosaic.version = 11 : i64} {
  func.func @_linear_kernel(%arg0: i32, %arg1: i32, %arg2: memref<32x32xbf16, #tpu.memory_space<vmem>>, %arg3: memref<32x128xbf16, #tpu.memory_space<vmem>>, %arg4: memref<1x128xbf16, #tpu.memory_space<vmem>>, %arg5: memref<32x128xf32, #tpu.memory_space<vmem>>) attributes {dimension_semantics = [#tpu.dimension_semantics<parallel>, #tpu.dimension_semantics<parallel>], iteration_bounds = array<i64: 1, 1>, scalar_prefetch = 0 : i64, scratch_operands = 0 : i64, tpu.core_type = #tpu.core_type<tc>, window_params = [{transform_indices = @transform_0, window_bounds = array<i64: 32, 32>}, {transform_indices = @transform_1, window_bounds = array<i64: 32, 128>}, {transform_indices = @transform_2, window_bounds = array<i64: 1, 128>}, {transform_indices = @transform_3, window_bounds = array<i64: 32, 128>}]} {
    %c0 = arith.constant 0 : index
    %c0_0 = arith.constant 0 : index
    %0 = vector.load %arg2[%c0, %c0_0] : memref<32x32xbf16, #tpu.memory_space<vmem>>, vector<32x32xbf16>
    %c0_1 = arith.constant 0 : index
    %c0_2 = arith.constant 0 : index
    %1 = vector.load %arg3[%c0_1, %c0_2] : memref<32x128xbf16, #tpu.memory_space<vmem>>, vector<32x128xbf16>
    %cst = arith.constant dense<0.000000e+00> : vector<32x128xf32>
    %2 = tpu.matmul %0, %1, %cst {dimension_numbers = #tpu.dot_dimension_numbers<[1], [0], [0], [1], [0, 0, 1, 1], [], []>} : vector<32x32xbf16>, vector<32x128xbf16>, vector<32x128xf32> -> vector<32x128xf32>
    %c0_3 = arith.constant 0 : index
    %c0_4 = arith.constant 0 : index
    %3 = vector.load %arg4[%c0_3, %c0_4] : memref<1x128xbf16, #tpu.memory_space<vmem>>, vector<1x128xbf16>
    %4 = arith.extf %3 : vector<1x128xbf16> to vector<1x128xf32>
    %5 = vector.broadcast %4 : vector<1x128xf32> to vector<32x128xf32>
    %6 = arith.addf %2, %5 : vector<32x128xf32>
    %c0_5 = arith.constant 0 : index
    %c0_6 = arith.constant 0 : index
    %7 = vector.load %arg5[%c0_5, %c0_6] : memref<32x128xf32, #tpu.memory_space<vmem>>, vector<32x128xf32>
    tpu.vector_store %arg5[%c0_5, %c0_6], %6 {strides = array<i32>} : memref<32x128xf32, #tpu.memory_space<vmem>>, vector<32x128xf32>,
    return
  }
  func.func @transform_0(%arg0: i32, %arg1: i32) -> (i32, i32) {
    %c0_i32 = arith.constant 0 : i32
    %c0_i32_0 = arith.constant 0 : i32
    return %arg0, %c0_i32 : i32, i32
  }
  func.func @transform_1(%arg0: i32, %arg1: i32) -> (i32, i32) {
    %c0_i32 = arith.constant 0 : i32
    %c0_i32_0 = arith.constant 0 : i32
    return %c0_i32, %arg1 : i32, i32
  }
  func.func @transform_2(%arg0: i32, %arg1: i32) -> (i32, i32) {
    %c0_i32 = arith.constant 0 : i32
    %c0_i32_0 = arith.constant 0 : i32
    return %c0_i32, %arg1 : i32, i32
  }
  func.func @transform_3(%arg0: i32, %arg1: i32) -> (i32, i32) {
    %c0_i32 = arith.constant 0 : i32
    return %arg0, %arg1 : i32, i32
  }
}

module attributes {stable_mosaic.version = 11 : i64} {
  func.func @kernel(%arg0: i32, %arg1: i32, %arg2: memref<1x16x32xbf16, #tpu.memory_space<vmem>>, %arg3: memref<1x16x32xbf16, #tpu.memory_space<vmem>>, %arg4: memref<1x32xbf16, #tpu.memory_space<vmem>>, %arg5: memref<1x32xbf16, #tpu.memory_space<vmem>>, %arg6: memref<3x4x32x8xbf16, #tpu.memory_space<vmem>>, %arg7: memref<3x4x1x8xbf16, #tpu.memory_space<vmem>>, %arg8: memref<4x8x32xbf16, #tpu.memory_space<vmem>>, %arg9: memref<1x32xbf16, #tpu.memory_space<vmem>>, %arg10: memref<1x32xbf16, #tpu.memory_space<vmem>>, %arg11: memref<1x32xbf16, #tpu.memory_space<vmem>>, %arg12: memref<32x64xbf16, #tpu.memory_space<vmem>>, %arg13: memref<1x64xbf16, #tpu.memory_space<vmem>>, %arg14: memref<64x32xbf16, #tpu.memory_space<vmem>>, %arg15: memref<1x32xbf16, #tpu.memory_space<vmem>>, %arg16: memref<1x16x32xbf16, #tpu.memory_space<vmem>>) attributes {dimension_semantics = [#tpu.dimension_semantics<parallel>, #tpu.dimension_semantics<parallel>], iteration_bounds = array<i64: 2, 1>, scalar_prefetch = 0 : i64, scratch_operands = 0 : i64, tpu.core_type = #tpu.core_type<tc>, window_params = [{transform_indices = @transform_0, window_bounds = array<i64: 1, 16, 32>}, {transform_indices = @transform_1, window_bounds = array<i64: 1, 16, 32>}, {pipeline_mode = #tpu.pipeline_mode<synchronous>, transform_indices = @transform_2, window_bounds = array<i64: 1, 32>}, {pipeline_mode = #tpu.pipeline_mode<synchronous>, transform_indices = @transform_3, window_bounds = array<i64: 1, 32>}, {pipeline_mode = #tpu.pipeline_mode<synchronous>, transform_indices = @transform_4, window_bounds = array<i64: 3, 4, 32, 8>}, {pipeline_mode = #tpu.pipeline_mode<synchronous>, transform_indices = @transform_5, window_bounds = array<i64: 3, 4, 1, 8>}, {pipeline_mode = #tpu.pipeline_mode<synchronous>, transform_indices = @transform_6, window_bounds = array<i64: 4, 8, 32>}, {pipeline_mode = #tpu.pipeline_mode<synchronous>, transform_indices = @transform_7, window_bounds = array<i64: 1, 32>}, {pipeline_mode = #tpu.pipeline_mode<synchronous>, transform_indices = @transform_8, window_bounds = array<i64: 1, 32>}, {pipeline_mode = #tpu.pipeline_mode<synchronous>, transform_indices = @transform_9, window_bounds = array<i64: 1, 32>}, {pipeline_mode = #tpu.pipeline_mode<synchronous>, transform_indices = @transform_10, window_bounds = array<i64: 32, 64>}, {pipeline_mode = #tpu.pipeline_mode<synchronous>, transform_indices = @transform_11, window_bounds = array<i64: 1, 64>}, {pipeline_mode = #tpu.pipeline_mode<synchronous>, transform_indices = @transform_12, window_bounds = array<i64: 64, 32>}, {pipeline_mode = #tpu.pipeline_mode<synchronous>, transform_indices = @transform_13, window_bounds = array<i64: 1, 32>}, {transform_indices = @transform_14, window_bounds = array<i64: 1, 16, 32>}]} {
    %c0 = arith.constant 0 : index
    %c0_0 = arith.constant 0 : index
    %c0_1 = arith.constant 0 : index
    %0 = vector.load %arg2[%c0, %c0_0, %c0_1] : memref<1x16x32xbf16, #tpu.memory_space<vmem>>, vector<1x16x32xbf16>
    %1 = vector.shape_cast %0 : vector<1x16x32xbf16> to vector<16x32xbf16>
    %2 = arith.extf %1 : vector<16x32xbf16> to vector<16x32xf32>
    %c0_2 = arith.constant 0 : index
    %c0_3 = arith.constant 0 : index
    %c0_4 = arith.constant 0 : index
    %3 = vector.load %arg3[%c0_2, %c0_3, %c0_4] : memref<1x16x32xbf16, #tpu.memory_space<vmem>>, vector<1x16x32xbf16>
    %4 = vector.shape_cast %3 : vector<1x16x32xbf16> to vector<16x32xbf16>
    %5 = arith.extf %4 : vector<16x32xbf16> to vector<16x32xf32>
    %cst = arith.constant dense<0.000000e+00> : vector<16xf32>
    %6 = vector.multi_reduction <add>, %5, %cst [1] : vector<16x32xf32> to vector<16xf32>
    %7 = vector.shape_cast %6 : vector<16xf32> to vector<16x1xf32>
    %cst_5 = arith.constant 3.200000e+01 : f32
    %8 = vector.broadcast %cst_5 : f32 to vector<16x1xf32>
    %9 = arith.divf %7, %8 : vector<16x1xf32>
    %10 = vector.broadcast %9 : vector<16x1xf32> to vector<16x32xf32>
    %11 = arith.subf %5, %10 : vector<16x32xf32>
    %12 = arith.mulf %11, %11 : vector<16x32xf32>
    %cst_6 = arith.constant dense<0.000000e+00> : vector<16xf32>
    %13 = vector.multi_reduction <add>, %12, %cst_6 [1] : vector<16x32xf32> to vector<16xf32>
    %14 = vector.shape_cast %13 : vector<16xf32> to vector<16x1xf32>
    %cst_7 = arith.constant 3.200000e+01 : f32
    %15 = vector.broadcast %cst_7 : f32 to vector<16x1xf32>
    %16 = arith.divf %14, %15 : vector<16x1xf32>
    %17 = vector.broadcast %9 : vector<16x1xf32> to vector<16x32xf32>
    %18 = arith.subf %5, %17 : vector<16x32xf32>
    %cst_8 = arith.constant 9.99999974E-6 : f32
    %19 = vector.broadcast %cst_8 : f32 to vector<16x1xf32>
    %20 = arith.addf %16, %19 : vector<16x1xf32>
    %21 = math.rsqrt %20 : vector<16x1xf32>
    %22 = vector.broadcast %21 : vector<16x1xf32> to vector<16x32xf32>
    %23 = arith.mulf %18, %22 : vector<16x32xf32>
    %c0_9 = arith.constant 0 : index
    %c0_10 = arith.constant 0 : index
    %24 = vector.load %arg4[%c0_9, %c0_10] : memref<1x32xbf16, #tpu.memory_space<vmem>>, vector<1x32xbf16>
    %25 = arith.extf %24 : vector<1x32xbf16> to vector<1x32xf32>
    %26 = vector.broadcast %25 : vector<1x32xf32> to vector<16x32xf32>
    %27 = arith.mulf %23, %26 : vector<16x32xf32>
    %c0_11 = arith.constant 0 : index
    %c0_12 = arith.constant 0 : index
    %28 = vector.load %arg5[%c0_11, %c0_12] : memref<1x32xbf16, #tpu.memory_space<vmem>>, vector<1x32xbf16>
    %29 = arith.extf %28 : vector<1x32xbf16> to vector<1x32xf32>
    %30 = vector.broadcast %29 : vector<1x32xf32> to vector<16x32xf32>
    %31 = arith.addf %27, %30 : vector<16x32xf32>
    %32 = arith.truncf %31 : vector<16x32xf32> to vector<16x32xbf16>
    %cst_13 = arith.constant dense<0.000000e+00> : vector<16xf32>
    %33 = vector.multi_reduction <add>, %2, %cst_13 [1] : vector<16x32xf32> to vector<16xf32>
    %34 = vector.shape_cast %33 : vector<16xf32> to vector<16x1xf32>
    %cst_14 = arith.constant 3.200000e+01 : f32
    %35 = vector.broadcast %cst_14 : f32 to vector<16x1xf32>
    %36 = arith.divf %34, %35 : vector<16x1xf32>
    %37 = vector.broadcast %36 : vector<16x1xf32> to vector<16x32xf32>
    %38 = arith.subf %2, %37 : vector<16x32xf32>
    %39 = arith.mulf %38, %38 : vector<16x32xf32>
    %cst_15 = arith.constant dense<0.000000e+00> : vector<16xf32>
    %40 = vector.multi_reduction <add>, %39, %cst_15 [1] : vector<16x32xf32> to vector<16xf32>
    %41 = vector.shape_cast %40 : vector<16xf32> to vector<16x1xf32>
    %cst_16 = arith.constant 3.200000e+01 : f32
    %42 = vector.broadcast %cst_16 : f32 to vector<16x1xf32>
    %43 = arith.divf %41, %42 : vector<16x1xf32>
    %44 = vector.broadcast %36 : vector<16x1xf32> to vector<16x32xf32>
    %45 = arith.subf %2, %44 : vector<16x32xf32>
    %cst_17 = arith.constant 9.99999974E-6 : f32
    %46 = vector.broadcast %cst_17 : f32 to vector<16x1xf32>
    %47 = arith.addf %43, %46 : vector<16x1xf32>
    %48 = math.rsqrt %47 : vector<16x1xf32>
    %49 = vector.broadcast %48 : vector<16x1xf32> to vector<16x32xf32>
    %50 = arith.mulf %45, %49 : vector<16x32xf32>
    %c0_18 = arith.constant 0 : index
    %c0_19 = arith.constant 0 : index
    %51 = vector.load %arg4[%c0_18, %c0_19] : memref<1x32xbf16, #tpu.memory_space<vmem>>, vector<1x32xbf16>
    %52 = arith.extf %51 : vector<1x32xbf16> to vector<1x32xf32>
    %53 = vector.broadcast %52 : vector<1x32xf32> to vector<16x32xf32>
    %54 = arith.mulf %50, %53 : vector<16x32xf32>
    %c0_20 = arith.constant 0 : index
    %c0_21 = arith.constant 0 : index
    %55 = vector.load %arg5[%c0_20, %c0_21] : memref<1x32xbf16, #tpu.memory_space<vmem>>, vector<1x32xbf16>
    %56 = arith.extf %55 : vector<1x32xbf16> to vector<1x32xf32>
    %57 = vector.broadcast %56 : vector<1x32xf32> to vector<16x32xf32>
    %58 = arith.addf %54, %57 : vector<16x32xf32>
    %59 = arith.truncf %58 : vector<16x32xf32> to vector<16x32xbf16>
    %cst_22 = arith.constant 0.000000e+00 : f32
    %60 = vector.broadcast %cst_22 : f32 to vector<16x32xf32>
    %c0_23 = arith.constant 0 : index
    %c0_24 = arith.constant 0 : index
    %c0_25 = arith.constant 0 : index
    %c0_26 = arith.constant 0 : index
    %61 = vector.load %arg6[%c0_23, %c0_24, %c0_25, %c0_26] : memref<3x4x32x8xbf16, #tpu.memory_space<vmem>>, vector<1x1x32x8xbf16>
    %62 = vector.shape_cast %61 : vector<1x1x32x8xbf16> to vector<32x8xbf16>
    %cst_27 = arith.constant dense<0.000000e+00> : vector<16x8xf32>
    %63 = tpu.matmul %59, %62, %cst_27 {dimension_numbers = #tpu.dot_dimension_numbers<[1], [0], [0], [1], [0, 0, 1, 1], [], []>} : vector<16x32xbf16>, vector<32x8xbf16>, vector<16x8xf32> -> vector<16x8xf32>
    %c0_28 = arith.constant 0 : index
    %c0_29 = arith.constant 0 : index
    %c0_30 = arith.constant 0 : index
    %c0_31 = arith.constant 0 : index
    %64 = vector.load %arg7[%c0_28, %c0_29, %c0_30, %c0_31] : memref<3x4x1x8xbf16, #tpu.memory_space<vmem>>, vector<1x1x1x8xbf16>
    %65 = vector.shape_cast %64 : vector<1x1x1x8xbf16> to vector<1x8xbf16>
    %66 = arith.extf %65 : vector<1x8xbf16> to vector<1x8xf32>
    %67 = vector.broadcast %66 : vector<1x8xf32> to vector<16x8xf32>
    %68 = arith.addf %63, %67 : vector<16x8xf32>
    %c1 = arith.constant 1 : index
    %c0_32 = arith.constant 0 : index
    %c0_33 = arith.constant 0 : index
    %c0_34 = arith.constant 0 : index
    %69 = vector.load %arg6[%c1, %c0_32, %c0_33, %c0_34] : memref<3x4x32x8xbf16, #tpu.memory_space<vmem>>, vector<1x1x32x8xbf16>
    %70 = vector.shape_cast %69 : vector<1x1x32x8xbf16> to vector<32x8xbf16>
    %cst_35 = arith.constant dense<0.000000e+00> : vector<16x8xf32>
    %71 = tpu.matmul %32, %70, %cst_35 {dimension_numbers = #tpu.dot_dimension_numbers<[1], [0], [0], [1], [0, 0, 1, 1], [], []>} : vector<16x32xbf16>, vector<32x8xbf16>, vector<16x8xf32> -> vector<16x8xf32>
    %c1_36 = arith.constant 1 : index
    %c0_37 = arith.constant 0 : index
    %c0_38 = arith.constant 0 : index
    %c0_39 = arith.constant 0 : index
    %72 = vector.load %arg7[%c1_36, %c0_37, %c0_38, %c0_39] : memref<3x4x1x8xbf16, #tpu.memory_space<vmem>>, vector<1x1x1x8xbf16>
    %73 = vector.shape_cast %72 : vector<1x1x1x8xbf16> to vector<1x8xbf16>
    %74 = arith.extf %73 : vector<1x8xbf16> to vector<1x8xf32>
    %75 = vector.broadcast %74 : vector<1x8xf32> to vector<16x8xf32>
    %76 = arith.addf %71, %75 : vector<16x8xf32>
    %c2 = arith.constant 2 : index
    %c0_40 = arith.constant 0 : index
    %c0_41 = arith.constant 0 : index
    %c0_42 = arith.constant 0 : index
    %77 = vector.load %arg6[%c2, %c0_40, %c0_41, %c0_42] : memref<3x4x32x8xbf16, #tpu.memory_space<vmem>>, vector<1x1x32x8xbf16>
    %78 = vector.shape_cast %77 : vector<1x1x32x8xbf16> to vector<32x8xbf16>
    %cst_43 = arith.constant dense<0.000000e+00> : vector<16x8xf32>
    %79 = tpu.matmul %32, %78, %cst_43 {dimension_numbers = #tpu.dot_dimension_numbers<[1], [0], [0], [1], [0, 0, 1, 1], [], []>} : vector<16x32xbf16>, vector<32x8xbf16>, vector<16x8xf32> -> vector<16x8xf32>
    %c2_44 = arith.constant 2 : index
    %c0_45 = arith.constant 0 : index
    %c0_46 = arith.constant 0 : index
    %c0_47 = arith.constant 0 : index
    %80 = vector.load %arg7[%c2_44, %c0_45, %c0_46, %c0_47] : memref<3x4x1x8xbf16, #tpu.memory_space<vmem>>, vector<1x1x1x8xbf16>
    %81 = vector.shape_cast %80 : vector<1x1x1x8xbf16> to vector<1x8xbf16>
    %82 = arith.extf %81 : vector<1x8xbf16> to vector<1x8xf32>
    %83 = vector.broadcast %82 : vector<1x8xf32> to vector<16x8xf32>
    %84 = arith.addf %79, %83 : vector<16x8xf32>
    %85 = arith.truncf %68 : vector<16x8xf32> to vector<16x8xbf16>
    %86 = arith.truncf %76 : vector<16x8xf32> to vector<16x8xbf16>
    %cst_48 = arith.constant dense<0.000000e+00> : vector<16x16xf32>
    %87 = tpu.matmul %85, %86, %cst_48 {dimension_numbers = #tpu.dot_dimension_numbers<[1], [1], [0], [0], [0, 0, 1, 0], [], []>} : vector<16x8xbf16>, vector<16x8xbf16>, vector<16x16xf32> -> vector<16x16xf32>
    %cst_49 = arith.constant 0.353553385 : f32
    %88 = vector.broadcast %cst_49 : f32 to vector<16x16xf32>
    %89 = arith.mulf %87, %88 : vector<16x16xf32>
    %cst_50 = arith.constant dense<0xFF800000> : vector<16xf32>
    %90 = vector.multi_reduction <maximumf>, %89, %cst_50 [1] : vector<16x16xf32> to vector<16xf32>
    %91 = vector.shape_cast %90 : vector<16xf32> to vector<16x1xf32>
    %92 = vector.broadcast %91 : vector<16x1xf32> to vector<16x16xf32>
    %93 = arith.subf %89, %92 : vector<16x16xf32>
    %94 = math.exp %93 : vector<16x16xf32>
    %cst_51 = arith.constant dense<0.000000e+00> : vector<16xf32>
    %95 = vector.multi_reduction <add>, %94, %cst_51 [1] : vector<16x16xf32> to vector<16xf32>
    %96 = vector.shape_cast %95 : vector<16xf32> to vector<16x1xf32>
    %97 = tpu.reciprocal %96 {approx = true} : vector<16x1xf32> -> vector<16x1xf32>
    %98 = vector.broadcast %97 : vector<16x1xf32> to vector<16x16xf32>
    %99 = arith.mulf %94, %98 : vector<16x16xf32>
    %100 = arith.truncf %99 : vector<16x16xf32> to vector<16x16xbf16>
    %101 = arith.truncf %84 : vector<16x8xf32> to vector<16x8xbf16>
    %cst_52 = arith.constant dense<0.000000e+00> : vector<16x8xf32>
    %102 = tpu.matmul %100, %101, %cst_52 {dimension_numbers = #tpu.dot_dimension_numbers<[1], [0], [0], [1], [0, 0, 1, 1], [], []>} : vector<16x16xbf16>, vector<16x8xbf16>, vector<16x8xf32> -> vector<16x8xf32>
    %103 = arith.truncf %102 : vector<16x8xf32> to vector<16x8xbf16>
    %c0_53 = arith.constant 0 : index
    %c0_54 = arith.constant 0 : index
    %c0_55 = arith.constant 0 : index
    %104 = vector.load %arg8[%c0_53, %c0_54, %c0_55] : memref<4x8x32xbf16, #tpu.memory_space<vmem>>, vector<1x8x32xbf16>
    %105 = vector.shape_cast %104 : vector<1x8x32xbf16> to vector<8x32xbf16>
    %cst_56 = arith.constant dense<0.000000e+00> : vector<16x32xf32>
    %106 = tpu.matmul %103, %105, %cst_56 {dimension_numbers = #tpu.dot_dimension_numbers<[1], [0], [0], [1], [0, 0, 1, 1], [], []>} : vector<16x8xbf16>, vector<8x32xbf16>, vector<16x32xf32> -> vector<16x32xf32>
    %107 = arith.addf %60, %106 : vector<16x32xf32>
    %c0_57 = arith.constant 0 : index
    %c1_58 = arith.constant 1 : index
    %c0_59 = arith.constant 0 : index
    %c0_60 = arith.constant 0 : index
    %108 = vector.load %arg6[%c0_57, %c1_58, %c0_59, %c0_60] : memref<3x4x32x8xbf16, #tpu.memory_space<vmem>>, vector<1x1x32x8xbf16>
    %109 = vector.shape_cast %108 : vector<1x1x32x8xbf16> to vector<32x8xbf16>
    %cst_61 = arith.constant dense<0.000000e+00> : vector<16x8xf32>
    %110 = tpu.matmul %59, %109, %cst_61 {dimension_numbers = #tpu.dot_dimension_numbers<[1], [0], [0], [1], [0, 0, 1, 1], [], []>} : vector<16x32xbf16>, vector<32x8xbf16>, vector<16x8xf32> -> vector<16x8xf32>
    %c0_62 = arith.constant 0 : index
    %c1_63 = arith.constant 1 : index
    %c0_64 = arith.constant 0 : index
    %c0_65 = arith.constant 0 : index
    %111 = vector.load %arg7[%c0_62, %c1_63, %c0_64, %c0_65] : memref<3x4x1x8xbf16, #tpu.memory_space<vmem>>, vector<1x1x1x8xbf16>
    %112 = vector.shape_cast %111 : vector<1x1x1x8xbf16> to vector<1x8xbf16>
    %113 = arith.extf %112 : vector<1x8xbf16> to vector<1x8xf32>
    %114 = vector.broadcast %113 : vector<1x8xf32> to vector<16x8xf32>
    %115 = arith.addf %110, %114 : vector<16x8xf32>
    %c1_66 = arith.constant 1 : index
    %c1_67 = arith.constant 1 : index
    %c0_68 = arith.constant 0 : index
    %c0_69 = arith.constant 0 : index
    %116 = vector.load %arg6[%c1_66, %c1_67, %c0_68, %c0_69] : memref<3x4x32x8xbf16, #tpu.memory_space<vmem>>, vector<1x1x32x8xbf16>
    %117 = vector.shape_cast %116 : vector<1x1x32x8xbf16> to vector<32x8xbf16>
    %cst_70 = arith.constant dense<0.000000e+00> : vector<16x8xf32>
    %118 = tpu.matmul %32, %117, %cst_70 {dimension_numbers = #tpu.dot_dimension_numbers<[1], [0], [0], [1], [0, 0, 1, 1], [], []>} : vector<16x32xbf16>, vector<32x8xbf16>, vector<16x8xf32> -> vector<16x8xf32>
    %c1_71 = arith.constant 1 : index
    %c1_72 = arith.constant 1 : index
    %c0_73 = arith.constant 0 : index
    %c0_74 = arith.constant 0 : index
    %119 = vector.load %arg7[%c1_71, %c1_72, %c0_73, %c0_74] : memref<3x4x1x8xbf16, #tpu.memory_space<vmem>>, vector<1x1x1x8xbf16>
    %120 = vector.shape_cast %119 : vector<1x1x1x8xbf16> to vector<1x8xbf16>
    %121 = arith.extf %120 : vector<1x8xbf16> to vector<1x8xf32>
    %122 = vector.broadcast %121 : vector<1x8xf32> to vector<16x8xf32>
    %123 = arith.addf %118, %122 : vector<16x8xf32>
    %c2_75 = arith.constant 2 : index
    %c1_76 = arith.constant 1 : index
    %c0_77 = arith.constant 0 : index
    %c0_78 = arith.constant 0 : index
    %124 = vector.load %arg6[%c2_75, %c1_76, %c0_77, %c0_78] : memref<3x4x32x8xbf16, #tpu.memory_space<vmem>>, vector<1x1x32x8xbf16>
    %125 = vector.shape_cast %124 : vector<1x1x32x8xbf16> to vector<32x8xbf16>
    %cst_79 = arith.constant dense<0.000000e+00> : vector<16x8xf32>
    %126 = tpu.matmul %32, %125, %cst_79 {dimension_numbers = #tpu.dot_dimension_numbers<[1], [0], [0], [1], [0, 0, 1, 1], [], []>} : vector<16x32xbf16>, vector<32x8xbf16>, vector<16x8xf32> -> vector<16x8xf32>
    %c2_80 = arith.constant 2 : index
    %c1_81 = arith.constant 1 : index
    %c0_82 = arith.constant 0 : index
    %c0_83 = arith.constant 0 : index
    %127 = vector.load %arg7[%c2_80, %c1_81, %c0_82, %c0_83] : memref<3x4x1x8xbf16, #tpu.memory_space<vmem>>, vector<1x1x1x8xbf16>
    %128 = vector.shape_cast %127 : vector<1x1x1x8xbf16> to vector<1x8xbf16>
    %129 = arith.extf %128 : vector<1x8xbf16> to vector<1x8xf32>
    %130 = vector.broadcast %129 : vector<1x8xf32> to vector<16x8xf32>
    %131 = arith.addf %126, %130 : vector<16x8xf32>
    %132 = arith.truncf %115 : vector<16x8xf32> to vector<16x8xbf16>
    %133 = arith.truncf %123 : vector<16x8xf32> to vector<16x8xbf16>
    %cst_84 = arith.constant dense<0.000000e+00> : vector<16x16xf32>
    %134 = tpu.matmul %132, %133, %cst_84 {dimension_numbers = #tpu.dot_dimension_numbers<[1], [1], [0], [0], [0, 0, 1, 0], [], []>} : vector<16x8xbf16>, vector<16x8xbf16>, vector<16x16xf32> -> vector<16x16xf32>
    %cst_85 = arith.constant 0.353553385 : f32
    %135 = vector.broadcast %cst_85 : f32 to vector<16x16xf32>
    %136 = arith.mulf %134, %135 : vector<16x16xf32>
    %cst_86 = arith.constant dense<0xFF800000> : vector<16xf32>
    %137 = vector.multi_reduction <maximumf>, %136, %cst_86 [1] : vector<16x16xf32> to vector<16xf32>
    %138 = vector.shape_cast %137 : vector<16xf32> to vector<16x1xf32>
    %139 = vector.broadcast %138 : vector<16x1xf32> to vector<16x16xf32>
    %140 = arith.subf %136, %139 : vector<16x16xf32>
    %141 = math.exp %140 : vector<16x16xf32>
    %cst_87 = arith.constant dense<0.000000e+00> : vector<16xf32>
    %142 = vector.multi_reduction <add>, %141, %cst_87 [1] : vector<16x16xf32> to vector<16xf32>
    %143 = vector.shape_cast %142 : vector<16xf32> to vector<16x1xf32>
    %144 = tpu.reciprocal %143 {approx = true} : vector<16x1xf32> -> vector<16x1xf32>
    %145 = vector.broadcast %144 : vector<16x1xf32> to vector<16x16xf32>
    %146 = arith.mulf %141, %145 : vector<16x16xf32>
    %147 = arith.truncf %146 : vector<16x16xf32> to vector<16x16xbf16>
    %148 = arith.truncf %131 : vector<16x8xf32> to vector<16x8xbf16>
    %cst_88 = arith.constant dense<0.000000e+00> : vector<16x8xf32>
    %149 = tpu.matmul %147, %148, %cst_88 {dimension_numbers = #tpu.dot_dimension_numbers<[1], [0], [0], [1], [0, 0, 1, 1], [], []>} : vector<16x16xbf16>, vector<16x8xbf16>, vector<16x8xf32> -> vector<16x8xf32>
    %150 = arith.truncf %149 : vector<16x8xf32> to vector<16x8xbf16>
    %c1_89 = arith.constant 1 : index
    %c0_90 = arith.constant 0 : index
    %c0_91 = arith.constant 0 : index
    %151 = vector.load %arg8[%c1_89, %c0_90, %c0_91] : memref<4x8x32xbf16, #tpu.memory_space<vmem>>, vector<1x8x32xbf16>
    %152 = vector.shape_cast %151 : vector<1x8x32xbf16> to vector<8x32xbf16>
    %cst_92 = arith.constant dense<0.000000e+00> : vector<16x32xf32>
    %153 = tpu.matmul %150, %152, %cst_92 {dimension_numbers = #tpu.dot_dimension_numbers<[1], [0], [0], [1], [0, 0, 1, 1], [], []>} : vector<16x8xbf16>, vector<8x32xbf16>, vector<16x32xf32> -> vector<16x32xf32>
    %154 = arith.addf %107, %153 : vector<16x32xf32>
    %c0_93 = arith.constant 0 : index
    %c2_94 = arith.constant 2 : index
    %c0_95 = arith.constant 0 : index
    %c0_96 = arith.constant 0 : index
    %155 = vector.load %arg6[%c0_93, %c2_94, %c0_95, %c0_96] : memref<3x4x32x8xbf16, #tpu.memory_space<vmem>>, vector<1x1x32x8xbf16>
    %156 = vector.shape_cast %155 : vector<1x1x32x8xbf16> to vector<32x8xbf16>
    %cst_97 = arith.constant dense<0.000000e+00> : vector<16x8xf32>
    %157 = tpu.matmul %59, %156, %cst_97 {dimension_numbers = #tpu.dot_dimension_numbers<[1], [0], [0], [1], [0, 0, 1, 1], [], []>} : vector<16x32xbf16>, vector<32x8xbf16>, vector<16x8xf32> -> vector<16x8xf32>
    %c0_98 = arith.constant 0 : index
    %c2_99 = arith.constant 2 : index
    %c0_100 = arith.constant 0 : index
    %c0_101 = arith.constant 0 : index
    %158 = vector.load %arg7[%c0_98, %c2_99, %c0_100, %c0_101] : memref<3x4x1x8xbf16, #tpu.memory_space<vmem>>, vector<1x1x1x8xbf16>
    %159 = vector.shape_cast %158 : vector<1x1x1x8xbf16> to vector<1x8xbf16>
    %160 = arith.extf %159 : vector<1x8xbf16> to vector<1x8xf32>
    %161 = vector.broadcast %160 : vector<1x8xf32> to vector<16x8xf32>
    %162 = arith.addf %157, %161 : vector<16x8xf32>
    %c1_102 = arith.constant 1 : index
    %c2_103 = arith.constant 2 : index
    %c0_104 = arith.constant 0 : index
    %c0_105 = arith.constant 0 : index
    %163 = vector.load %arg6[%c1_102, %c2_103, %c0_104, %c0_105] : memref<3x4x32x8xbf16, #tpu.memory_space<vmem>>, vector<1x1x32x8xbf16>
    %164 = vector.shape_cast %163 : vector<1x1x32x8xbf16> to vector<32x8xbf16>
    %cst_106 = arith.constant dense<0.000000e+00> : vector<16x8xf32>
    %165 = tpu.matmul %32, %164, %cst_106 {dimension_numbers = #tpu.dot_dimension_numbers<[1], [0], [0], [1], [0, 0, 1, 1], [], []>} : vector<16x32xbf16>, vector<32x8xbf16>, vector<16x8xf32> -> vector<16x8xf32>
    %c1_107 = arith.constant 1 : index
    %c2_108 = arith.constant 2 : index
    %c0_109 = arith.constant 0 : index
    %c0_110 = arith.constant 0 : index
    %166 = vector.load %arg7[%c1_107, %c2_108, %c0_109, %c0_110] : memref<3x4x1x8xbf16, #tpu.memory_space<vmem>>, vector<1x1x1x8xbf16>
    %167 = vector.shape_cast %166 : vector<1x1x1x8xbf16> to vector<1x8xbf16>
    %168 = arith.extf %167 : vector<1x8xbf16> to vector<1x8xf32>
    %169 = vector.broadcast %168 : vector<1x8xf32> to vector<16x8xf32>
    %170 = arith.addf %165, %169 : vector<16x8xf32>
    %c2_111 = arith.constant 2 : index
    %c2_112 = arith.constant 2 : index
    %c0_113 = arith.constant 0 : index
    %c0_114 = arith.constant 0 : index
    %171 = vector.load %arg6[%c2_111, %c2_112, %c0_113, %c0_114] : memref<3x4x32x8xbf16, #tpu.memory_space<vmem>>, vector<1x1x32x8xbf16>
    %172 = vector.shape_cast %171 : vector<1x1x32x8xbf16> to vector<32x8xbf16>
    %cst_115 = arith.constant dense<0.000000e+00> : vector<16x8xf32>
    %173 = tpu.matmul %32, %172, %cst_115 {dimension_numbers = #tpu.dot_dimension_numbers<[1], [0], [0], [1], [0, 0, 1, 1], [], []>} : vector<16x32xbf16>, vector<32x8xbf16>, vector<16x8xf32> -> vector<16x8xf32>
    %c2_116 = arith.constant 2 : index
    %c2_117 = arith.constant 2 : index
    %c0_118 = arith.constant 0 : index
    %c0_119 = arith.constant 0 : index
    %174 = vector.load %arg7[%c2_116, %c2_117, %c0_118, %c0_119] : memref<3x4x1x8xbf16, #tpu.memory_space<vmem>>, vector<1x1x1x8xbf16>
    %175 = vector.shape_cast %174 : vector<1x1x1x8xbf16> to vector<1x8xbf16>
    %176 = arith.extf %175 : vector<1x8xbf16> to vector<1x8xf32>
    %177 = vector.broadcast %176 : vector<1x8xf32> to vector<16x8xf32>
    %178 = arith.addf %173, %177 : vector<16x8xf32>
    %179 = arith.truncf %162 : vector<16x8xf32> to vector<16x8xbf16>
    %180 = arith.truncf %170 : vector<16x8xf32> to vector<16x8xbf16>
    %cst_120 = arith.constant dense<0.000000e+00> : vector<16x16xf32>
    %181 = tpu.matmul %179, %180, %cst_120 {dimension_numbers = #tpu.dot_dimension_numbers<[1], [1], [0], [0], [0, 0, 1, 0], [], []>} : vector<16x8xbf16>, vector<16x8xbf16>, vector<16x16xf32> -> vector<16x16xf32>
    %cst_121 = arith.constant 0.353553385 : f32
    %182 = vector.broadcast %cst_121 : f32 to vector<16x16xf32>
    %183 = arith.mulf %181, %182 : vector<16x16xf32>
    %cst_122 = arith.constant dense<0xFF800000> : vector<16xf32>
    %184 = vector.multi_reduction <maximumf>, %183, %cst_122 [1] : vector<16x16xf32> to vector<16xf32>
    %185 = vector.shape_cast %184 : vector<16xf32> to vector<16x1xf32>
    %186 = vector.broadcast %185 : vector<16x1xf32> to vector<16x16xf32>
    %187 = arith.subf %183, %186 : vector<16x16xf32>
    %188 = math.exp %187 : vector<16x16xf32>
    %cst_123 = arith.constant dense<0.000000e+00> : vector<16xf32>
    %189 = vector.multi_reduction <add>, %188, %cst_123 [1] : vector<16x16xf32> to vector<16xf32>
    %190 = vector.shape_cast %189 : vector<16xf32> to vector<16x1xf32>
    %191 = tpu.reciprocal %190 {approx = true} : vector<16x1xf32> -> vector<16x1xf32>
    %192 = vector.broadcast %191 : vector<16x1xf32> to vector<16x16xf32>
    %193 = arith.mulf %188, %192 : vector<16x16xf32>
    %194 = arith.truncf %193 : vector<16x16xf32> to vector<16x16xbf16>
    %195 = arith.truncf %178 : vector<16x8xf32> to vector<16x8xbf16>
    %cst_124 = arith.constant dense<0.000000e+00> : vector<16x8xf32>
    %196 = tpu.matmul %194, %195, %cst_124 {dimension_numbers = #tpu.dot_dimension_numbers<[1], [0], [0], [1], [0, 0, 1, 1], [], []>} : vector<16x16xbf16>, vector<16x8xbf16>, vector<16x8xf32> -> vector<16x8xf32>
    %197 = arith.truncf %196 : vector<16x8xf32> to vector<16x8xbf16>
    %c2_125 = arith.constant 2 : index
    %c0_126 = arith.constant 0 : index
    %c0_127 = arith.constant 0 : index
    %198 = vector.load %arg8[%c2_125, %c0_126, %c0_127] : memref<4x8x32xbf16, #tpu.memory_space<vmem>>, vector<1x8x32xbf16>
    %199 = vector.shape_cast %198 : vector<1x8x32xbf16> to vector<8x32xbf16>
    %cst_128 = arith.constant dense<0.000000e+00> : vector<16x32xf32>
    %200 = tpu.matmul %197, %199, %cst_128 {dimension_numbers = #tpu.dot_dimension_numbers<[1], [0], [0], [1], [0, 0, 1, 1], [], []>} : vector<16x8xbf16>, vector<8x32xbf16>, vector<16x32xf32> -> vector<16x32xf32>
    %201 = arith.addf %154, %200 : vector<16x32xf32>
    %c0_129 = arith.constant 0 : index
    %c3 = arith.constant 3 : index
    %c0_130 = arith.constant 0 : index
    %c0_131 = arith.constant 0 : index
    %202 = vector.load %arg6[%c0_129, %c3, %c0_130, %c0_131] : memref<3x4x32x8xbf16, #tpu.memory_space<vmem>>, vector<1x1x32x8xbf16>
    %203 = vector.shape_cast %202 : vector<1x1x32x8xbf16> to vector<32x8xbf16>
    %cst_132 = arith.constant dense<0.000000e+00> : vector<16x8xf32>
    %204 = tpu.matmul %59, %203, %cst_132 {dimension_numbers = #tpu.dot_dimension_numbers<[1], [0], [0], [1], [0, 0, 1, 1], [], []>} : vector<16x32xbf16>, vector<32x8xbf16>, vector<16x8xf32> -> vector<16x8xf32>
    %c0_133 = arith.constant 0 : index
    %c3_134 = arith.constant 3 : index
    %c0_135 = arith.constant 0 : index
    %c0_136 = arith.constant 0 : index
    %205 = vector.load %arg7[%c0_133, %c3_134, %c0_135, %c0_136] : memref<3x4x1x8xbf16, #tpu.memory_space<vmem>>, vector<1x1x1x8xbf16>
    %206 = vector.shape_cast %205 : vector<1x1x1x8xbf16> to vector<1x8xbf16>
    %207 = arith.extf %206 : vector<1x8xbf16> to vector<1x8xf32>
    %208 = vector.broadcast %207 : vector<1x8xf32> to vector<16x8xf32>
    %209 = arith.addf %204, %208 : vector<16x8xf32>
    %c1_137 = arith.constant 1 : index
    %c3_138 = arith.constant 3 : index
    %c0_139 = arith.constant 0 : index
    %c0_140 = arith.constant 0 : index
    %210 = vector.load %arg6[%c1_137, %c3_138, %c0_139, %c0_140] : memref<3x4x32x8xbf16, #tpu.memory_space<vmem>>, vector<1x1x32x8xbf16>
    %211 = vector.shape_cast %210 : vector<1x1x32x8xbf16> to vector<32x8xbf16>
    %cst_141 = arith.constant dense<0.000000e+00> : vector<16x8xf32>
    %212 = tpu.matmul %32, %211, %cst_141 {dimension_numbers = #tpu.dot_dimension_numbers<[1], [0], [0], [1], [0, 0, 1, 1], [], []>} : vector<16x32xbf16>, vector<32x8xbf16>, vector<16x8xf32> -> vector<16x8xf32>
    %c1_142 = arith.constant 1 : index
    %c3_143 = arith.constant 3 : index
    %c0_144 = arith.constant 0 : index
    %c0_145 = arith.constant 0 : index
    %213 = vector.load %arg7[%c1_142, %c3_143, %c0_144, %c0_145] : memref<3x4x1x8xbf16, #tpu.memory_space<vmem>>, vector<1x1x1x8xbf16>
    %214 = vector.shape_cast %213 : vector<1x1x1x8xbf16> to vector<1x8xbf16>
    %215 = arith.extf %214 : vector<1x8xbf16> to vector<1x8xf32>
    %216 = vector.broadcast %215 : vector<1x8xf32> to vector<16x8xf32>
    %217 = arith.addf %212, %216 : vector<16x8xf32>
    %c2_146 = arith.constant 2 : index
    %c3_147 = arith.constant 3 : index
    %c0_148 = arith.constant 0 : index
    %c0_149 = arith.constant 0 : index
    %218 = vector.load %arg6[%c2_146, %c3_147, %c0_148, %c0_149] : memref<3x4x32x8xbf16, #tpu.memory_space<vmem>>, vector<1x1x32x8xbf16>
    %219 = vector.shape_cast %218 : vector<1x1x32x8xbf16> to vector<32x8xbf16>
    %cst_150 = arith.constant dense<0.000000e+00> : vector<16x8xf32>
    %220 = tpu.matmul %32, %219, %cst_150 {dimension_numbers = #tpu.dot_dimension_numbers<[1], [0], [0], [1], [0, 0, 1, 1], [], []>} : vector<16x32xbf16>, vector<32x8xbf16>, vector<16x8xf32> -> vector<16x8xf32>
    %c2_151 = arith.constant 2 : index
    %c3_152 = arith.constant 3 : index
    %c0_153 = arith.constant 0 : index
    %c0_154 = arith.constant 0 : index
    %221 = vector.load %arg7[%c2_151, %c3_152, %c0_153, %c0_154] : memref<3x4x1x8xbf16, #tpu.memory_space<vmem>>, vector<1x1x1x8xbf16>
    %222 = vector.shape_cast %221 : vector<1x1x1x8xbf16> to vector<1x8xbf16>
    %223 = arith.extf %222 : vector<1x8xbf16> to vector<1x8xf32>
    %224 = vector.broadcast %223 : vector<1x8xf32> to vector<16x8xf32>
    %225 = arith.addf %220, %224 : vector<16x8xf32>
    %226 = arith.truncf %209 : vector<16x8xf32> to vector<16x8xbf16>
    %227 = arith.truncf %217 : vector<16x8xf32> to vector<16x8xbf16>
    %cst_155 = arith.constant dense<0.000000e+00> : vector<16x16xf32>
    %228 = tpu.matmul %226, %227, %cst_155 {dimension_numbers = #tpu.dot_dimension_numbers<[1], [1], [0], [0], [0, 0, 1, 0], [], []>} : vector<16x8xbf16>, vector<16x8xbf16>, vector<16x16xf32> -> vector<16x16xf32>
    %cst_156 = arith.constant 0.353553385 : f32
    %229 = vector.broadcast %cst_156 : f32 to vector<16x16xf32>
    %230 = arith.mulf %228, %229 : vector<16x16xf32>
    %cst_157 = arith.constant dense<0xFF800000> : vector<16xf32>
    %231 = vector.multi_reduction <maximumf>, %230, %cst_157 [1] : vector<16x16xf32> to vector<16xf32>
    %232 = vector.shape_cast %231 : vector<16xf32> to vector<16x1xf32>
    %233 = vector.broadcast %232 : vector<16x1xf32> to vector<16x16xf32>
    %234 = arith.subf %230, %233 : vector<16x16xf32>
    %235 = math.exp %234 : vector<16x16xf32>
    %cst_158 = arith.constant dense<0.000000e+00> : vector<16xf32>
    %236 = vector.multi_reduction <add>, %235, %cst_158 [1] : vector<16x16xf32> to vector<16xf32>
    %237 = vector.shape_cast %236 : vector<16xf32> to vector<16x1xf32>
    %238 = tpu.reciprocal %237 {approx = true} : vector<16x1xf32> -> vector<16x1xf32>
    %239 = vector.broadcast %238 : vector<16x1xf32> to vector<16x16xf32>
    %240 = arith.mulf %235, %239 : vector<16x16xf32>
    %241 = arith.truncf %240 : vector<16x16xf32> to vector<16x16xbf16>
    %242 = arith.truncf %225 : vector<16x8xf32> to vector<16x8xbf16>
    %cst_159 = arith.constant dense<0.000000e+00> : vector<16x8xf32>
    %243 = tpu.matmul %241, %242, %cst_159 {dimension_numbers = #tpu.dot_dimension_numbers<[1], [0], [0], [1], [0, 0, 1, 1], [], []>} : vector<16x16xbf16>, vector<16x8xbf16>, vector<16x8xf32> -> vector<16x8xf32>
    %244 = arith.truncf %243 : vector<16x8xf32> to vector<16x8xbf16>
    %c3_160 = arith.constant 3 : index
    %c0_161 = arith.constant 0 : index
    %c0_162 = arith.constant 0 : index
    %245 = vector.load %arg8[%c3_160, %c0_161, %c0_162] : memref<4x8x32xbf16, #tpu.memory_space<vmem>>, vector<1x8x32xbf16>
    %246 = vector.shape_cast %245 : vector<1x8x32xbf16> to vector<8x32xbf16>
    %cst_163 = arith.constant dense<0.000000e+00> : vector<16x32xf32>
    %247 = tpu.matmul %244, %246, %cst_163 {dimension_numbers = #tpu.dot_dimension_numbers<[1], [0], [0], [1], [0, 0, 1, 1], [], []>} : vector<16x8xbf16>, vector<8x32xbf16>, vector<16x32xf32> -> vector<16x32xf32>
    %248 = arith.addf %201, %247 : vector<16x32xf32>
    %249 = arith.addf %2, %248 : vector<16x32xf32>
    %c0_164 = arith.constant 0 : index
    %c0_165 = arith.constant 0 : index
    %250 = vector.load %arg9[%c0_164, %c0_165] : memref<1x32xbf16, #tpu.memory_space<vmem>>, vector<1x32xbf16>
    %251 = arith.extf %250 : vector<1x32xbf16> to vector<1x32xf32>
    %252 = vector.broadcast %251 : vector<1x32xf32> to vector<16x32xf32>
    %253 = arith.addf %249, %252 : vector<16x32xf32>
    %cst_166 = arith.constant dense<0.000000e+00> : vector<16xf32>
    %254 = vector.multi_reduction <add>, %253, %cst_166 [1] : vector<16x32xf32> to vector<16xf32>
    %255 = vector.shape_cast %254 : vector<16xf32> to vector<16x1xf32>
    %cst_167 = arith.constant 3.200000e+01 : f32
    %256 = vector.broadcast %cst_167 : f32 to vector<16x1xf32>
    %257 = arith.divf %255, %256 : vector<16x1xf32>
    %258 = vector.broadcast %257 : vector<16x1xf32> to vector<16x32xf32>
    %259 = arith.subf %253, %258 : vector<16x32xf32>
    %260 = arith.mulf %259, %259 : vector<16x32xf32>
    %cst_168 = arith.constant dense<0.000000e+00> : vector<16xf32>
    %261 = vector.multi_reduction <add>, %260, %cst_168 [1] : vector<16x32xf32> to vector<16xf32>
    %262 = vector.shape_cast %261 : vector<16xf32> to vector<16x1xf32>
    %cst_169 = arith.constant 3.200000e+01 : f32
    %263 = vector.broadcast %cst_169 : f32 to vector<16x1xf32>
    %264 = arith.divf %262, %263 : vector<16x1xf32>
    %265 = vector.broadcast %257 : vector<16x1xf32> to vector<16x32xf32>
    %266 = arith.subf %253, %265 : vector<16x32xf32>
    %cst_170 = arith.constant 9.99999974E-6 : f32
    %267 = vector.broadcast %cst_170 : f32 to vector<16x1xf32>
    %268 = arith.addf %264, %267 : vector<16x1xf32>
    %269 = math.rsqrt %268 : vector<16x1xf32>
    %270 = vector.broadcast %269 : vector<16x1xf32> to vector<16x32xf32>
    %271 = arith.mulf %266, %270 : vector<16x32xf32>
    %c0_171 = arith.constant 0 : index
    %c0_172 = arith.constant 0 : index
    %272 = vector.load %arg10[%c0_171, %c0_172] : memref<1x32xbf16, #tpu.memory_space<vmem>>, vector<1x32xbf16>
    %273 = arith.extf %272 : vector<1x32xbf16> to vector<1x32xf32>
    %274 = vector.broadcast %273 : vector<1x32xf32> to vector<16x32xf32>
    %275 = arith.mulf %271, %274 : vector<16x32xf32>
    %c0_173 = arith.constant 0 : index
    %c0_174 = arith.constant 0 : index
    %276 = vector.load %arg11[%c0_173, %c0_174] : memref<1x32xbf16, #tpu.memory_space<vmem>>, vector<1x32xbf16>
    %277 = arith.extf %276 : vector<1x32xbf16> to vector<1x32xf32>
    %278 = vector.broadcast %277 : vector<1x32xf32> to vector<16x32xf32>
    %279 = arith.addf %275, %278 : vector<16x32xf32>
    %280 = arith.truncf %279 : vector<16x32xf32> to vector<16x32xbf16>
    %c0_175 = arith.constant 0 : index
    %c0_176 = arith.constant 0 : index
    %281 = vector.load %arg12[%c0_175, %c0_176] : memref<32x64xbf16, #tpu.memory_space<vmem>>, vector<32x64xbf16>
    %cst_177 = arith.constant dense<0.000000e+00> : vector<16x64xf32>
    %282 = tpu.matmul %280, %281, %cst_177 {dimension_numbers = #tpu.dot_dimension_numbers<[1], [0], [0], [1], [0, 0, 1, 1], [], []>} : vector<16x32xbf16>, vector<32x64xbf16>, vector<16x64xf32> -> vector<16x64xf32>
    %c0_178 = arith.constant 0 : index
    %c0_179 = arith.constant 0 : index
    %283 = vector.load %arg13[%c0_178, %c0_179] : memref<1x64xbf16, #tpu.memory_space<vmem>>, vector<1x64xbf16>
    %284 = arith.extf %283 : vector<1x64xbf16> to vector<1x64xf32>
    %285 = vector.broadcast %284 : vector<1x64xf32> to vector<16x64xf32>
    %286 = arith.addf %282, %285 : vector<16x64xf32>
    %cst_180 = arith.constant 5.000000e-01 : f32
    %287 = vector.broadcast %cst_180 : f32 to vector<16x64xf32>
    %288 = arith.mulf %287, %286 : vector<16x64xf32>
    %cst_181 = arith.constant 4.471500e-02 : f32
    %289 = vector.broadcast %cst_181 : f32 to vector<16x64xf32>
    %290 = arith.mulf %289, %286 : vector<16x64xf32>
    %291 = arith.mulf %290, %286 : vector<16x64xf32>
    %292 = arith.mulf %291, %286 : vector<16x64xf32>
    %293 = arith.addf %286, %292 : vector<16x64xf32>
    %cst_182 = arith.constant 0.797884583 : f32
    %294 = vector.broadcast %cst_182 : f32 to vector<16x64xf32>
    %295 = arith.mulf %294, %293 : vector<16x64xf32>
    %296 = math.tanh %295 : vector<16x64xf32>
    %cst_183 = arith.constant 1.000000e+00 : f32
    %297 = vector.broadcast %cst_183 : f32 to vector<16x64xf32>
    %298 = arith.addf %297, %296 : vector<16x64xf32>
    %299 = arith.mulf %288, %298 : vector<16x64xf32>
    %300 = arith.truncf %299 : vector<16x64xf32> to vector<16x64xbf16>
    %c0_184 = arith.constant 0 : index
    %c0_185 = arith.constant 0 : index
    %301 = vector.load %arg14[%c0_184, %c0_185] : memref<64x32xbf16, #tpu.memory_space<vmem>>, vector<64x32xbf16>
    %cst_186 = arith.constant dense<0.000000e+00> : vector<16x32xf32>
    %302 = tpu.matmul %300, %301, %cst_186 {dimension_numbers = #tpu.dot_dimension_numbers<[1], [0], [0], [1], [0, 0, 1, 1], [], []>} : vector<16x64xbf16>, vector<64x32xbf16>, vector<16x32xf32> -> vector<16x32xf32>
    %c0_187 = arith.constant 0 : index
    %c0_188 = arith.constant 0 : index
    %303 = vector.load %arg15[%c0_187, %c0_188] : memref<1x32xbf16, #tpu.memory_space<vmem>>, vector<1x32xbf16>
    %304 = arith.extf %303 : vector<1x32xbf16> to vector<1x32xf32>
    %305 = vector.broadcast %304 : vector<1x32xf32> to vector<16x32xf32>
    %306 = arith.addf %302, %305 : vector<16x32xf32>
    %307 = arith.addf %253, %306 : vector<16x32xf32>
    %308 = arith.truncf %307 : vector<16x32xf32> to vector<16x32xbf16>
    %c0_189 = arith.constant 0 : index
    %c0_190 = arith.constant 0 : index
    %c0_191 = arith.constant 0 : index
    %309 = vector.load %arg16[%c0_189, %c0_190, %c0_191] : memref<1x16x32xbf16, #tpu.memory_space<vmem>>, vector<1x16x32xbf16>
    %310 = vector.shape_cast %309 : vector<1x16x32xbf16> to vector<16x32xbf16>
    %311 = vector.shape_cast %308 : vector<16x32xbf16> to vector<1x16x32xbf16>
    tpu.vector_store %arg16[%c0_189, %c0_190, %c0_191], %311 {strides = array<i32>} : memref<1x16x32xbf16, #tpu.memory_space<vmem>>, vector<1x16x32xbf16>,
    return
  }
  func.func @transform_0(%arg0: i32, %arg1: i32) -> (i32, i32, i32) {
    %c0_i32 = arith.constant 0 : i32
    %c0_i32_0 = arith.constant 0 : i32
    return %arg0, %arg1, %c0_i32 : i32, i32, i32
  }
  func.func @transform_1(%arg0: i32, %arg1: i32) -> (i32, i32, i32) {
    %c0_i32 = arith.constant 0 : i32
    %c0_i32_0 = arith.constant 0 : i32
    %c0_i32_1 = arith.constant 0 : i32
    return %arg0, %c0_i32, %c0_i32_0 : i32, i32, i32
  }
  func.func @transform_2(%arg0: i32, %arg1: i32) -> (i32, i32) {
    %c0_i32 = arith.constant 0 : i32
    %c0_i32_0 = arith.constant 0 : i32
    %c0_i32_1 = arith.constant 0 : i32
    return %c0_i32, %c0_i32_0 : i32, i32
  }
  func.func @transform_3(%arg0: i32, %arg1: i32) -> (i32, i32) {
    %c0_i32 = arith.constant 0 : i32
    %c0_i32_0 = arith.constant 0 : i32
    %c0_i32_1 = arith.constant 0 : i32
    return %c0_i32, %c0_i32_0 : i32, i32
  }
  func.func @transform_4(%arg0: i32, %arg1: i32) -> (i32, i32, i32, i32) {
    %c0_i32 = arith.constant 0 : i32
    %c0_i32_0 = arith.constant 0 : i32
    %c0_i32_1 = arith.constant 0 : i32
    %c0_i32_2 = arith.constant 0 : i32
    %c0_i32_3 = arith.constant 0 : i32
    return %c0_i32, %c0_i32_0, %c0_i32_1, %c0_i32_2 : i32, i32, i32, i32
  }
  func.func @transform_5(%arg0: i32, %arg1: i32) -> (i32, i32, i32, i32) {
    %c0_i32 = arith.constant 0 : i32
    %c0_i32_0 = arith.constant 0 : i32
    %c0_i32_1 = arith.constant 0 : i32
    %c0_i32_2 = arith.constant 0 : i32
    %c0_i32_3 = arith.constant 0 : i32
    return %c0_i32, %c0_i32_0, %c0_i32_1, %c0_i32_2 : i32, i32, i32, i32
  }
  func.func @transform_6(%arg0: i32, %arg1: i32) -> (i32, i32, i32) {
    %c0_i32 = arith.constant 0 : i32
    %c0_i32_0 = arith.constant 0 : i32
    %c0_i32_1 = arith.constant 0 : i32
    %c0_i32_2 = arith.constant 0 : i32
    return %c0_i32, %c0_i32_0, %c0_i32_1 : i32, i32, i32
  }
  func.func @transform_7(%arg0: i32, %arg1: i32) -> (i32, i32) {
    %c0_i32 = arith.constant 0 : i32
    %c0_i32_0 = arith.constant 0 : i32
    %c0_i32_1 = arith.constant 0 : i32
    return %c0_i32, %c0_i32_0 : i32, i32
  }
  func.func @transform_8(%arg0: i32, %arg1: i32) -> (i32, i32) {
    %c0_i32 = arith.constant 0 : i32
    %c0_i32_0 = arith.constant 0 : i32
    %c0_i32_1 = arith.constant 0 : i32
    return %c0_i32, %c0_i32_0 : i32, i32
  }
  func.func @transform_9(%arg0: i32, %arg1: i32) -> (i32, i32) {
    %c0_i32 = arith.constant 0 : i32
    %c0_i32_0 = arith.constant 0 : i32
    %c0_i32_1 = arith.constant 0 : i32
    return %c0_i32, %c0_i32_0 : i32, i32
  }
  func.func @transform_10(%arg0: i32, %arg1: i32) -> (i32, i32) {
    %c0_i32 = arith.constant 0 : i32
    %c0_i32_0 = arith.constant 0 : i32
    %c0_i32_1 = arith.constant 0 : i32
    return %c0_i32, %c0_i32_0 : i32, i32
  }
  func.func @transform_11(%arg0: i32, %arg1: i32) -> (i32, i32) {
    %c0_i32 = arith.constant 0 : i32
    %c0_i32_0 = arith.constant 0 : i32
    %c0_i32_1 = arith.constant 0 : i32
    return %c0_i32, %c0_i32_0 : i32, i32
  }
  func.func @transform_12(%arg0: i32, %arg1: i32) -> (i32, i32) {
    %c0_i32 = arith.constant 0 : i32
    %c0_i32_0 = arith.constant 0 : i32
    %c0_i32_1 = arith.constant 0 : i32
    return %c0_i32, %c0_i32_0 : i32, i32
  }
  func.func @transform_13(%arg0: i32, %arg1: i32) -> (i32, i32) {
    %c0_i32 = arith.constant 0 : i32
    %c0_i32_0 = arith.constant 0 : i32
    %c0_i32_1 = arith.constant 0 : i32
    return %c0_i32, %c0_i32_0 : i32, i32
  }
  func.func @transform_14(%arg0: i32, %arg1: i32) -> (i32, i32, i32) {
    %c0_i32 = arith.constant 0 : i32
    %c0_i32_0 = arith.constant 0 : i32
    return %arg0, %arg1, %c0_i32 : i32, i32, i32
  }
}

</mosaic_0001>

<llo_original>
// kernel: vit_forward.4
$region0: #{vit_forward.4}
  #allocation0 [shape = 'u32[]', space=smem, size = 0x4, offset = 0x4, fixed_abs, tag = 'smem constant byte address 0x4 - core index']
  #allocation1 [shape = 'u32[144,128]{1,0:T(1,128)}', space=vmem, size = 0x12000, scoped, tag = 'internal scratch']
  %s0 = inlined_call_operand.vmem [shape: bf16[32,64], index: 0, kind: input, shape index: {}]
  %s1 = inlined_call_operand.vmem [shape: bf16[64,128], index: 1, kind: input, shape index: {}]
  %s2 = inlined_call_operand.vmem [shape: bf16[1,128], index: 2, kind: input, shape index: {}]
  %s3 = inlined_call_operand.vmem [shape: bf16[32,128], index: 3, kind: output, shape index: {}]
  %s4 = sld [smem:[#allocation0]]
  $region22: #{vit_forward.4} parent=0
    _
  %s6 = ssub.s32 1, %s4
  %s7 = scalar_select 0, %s6, %s4
  // Predicated region
  $region2: #{vit_forward.4} parent=0 // pred_check
    _
  $region3: #{vit_forward.4} parent=0 // pred_check_branch
    %9 = sbr.rel (0) target = $region5
  $region4: #{vit_forward.4} parent=0 // pred_region
    _
  $region5: #{vit_forward.4} parent=0 // pred_fallthru
    _
  // Predicated region
  $region6: #{vit_forward.4} parent=0 // pred_check
    _
  $region7: #{vit_forward.4} parent=0 // pred_check_branch
    %11 = sbr.rel (0) target = $region9
  $region8: #{vit_forward.4} parent=0 // pred_region
    _
  $region9: #{vit_forward.4} parent=0 // pred_fallthru
    _
  // Predicated region
  $region10: #{vit_forward.4} parent=0 // pred_check
    _
  $region11: #{vit_forward.4} parent=0 // pred_check_branch
    %13 = sbr.rel (0) target = $region13
  $region12: #{vit_forward.4} parent=0 // pred_region
    _
  $region13: #{vit_forward.4} parent=0 // pred_fallthru
    _
  %v15 = vld [vmem:[%s0] sm:$0xf]
  %v16 = vld [vmem:[%s0 + $0x4] sm:$0xf]
  %v17 = vld [vmem:[%s0 + $0x8] sm:$0xf]
  %v18 = vld [vmem:[%s0 + $0xc] sm:$0xf]
  %v19 = vld [vmem:[%s1] sm:$0xf]
  %v20 = vld [vmem:[%s1 + $0x4] sm:$0xf]
  %v21 = vld [vmem:[%s1 + $0x8] sm:$0xf]
  %v22 = vld [vmem:[%s1 + $0xc] sm:$0xf]
  %v23 = vld [vmem:[%s1 + $0x10] sm:$0xf]
  %v24 = vld [vmem:[%s1 + $0x14] sm:$0xf]
  %v25 = vld [vmem:[%s1 + $0x18] sm:$0xf]
  %v26 = vld [vmem:[%s1 + $0x1c] sm:$0xf]
  %v27 = vld [vmem:[%s2] sm:$0x1]
  %v28 = vunpack.c.l.bf16 %v27
  %v29 = vlaneseq
  %v30 = vshrl.u32 %v29, 7
  %v31 = vsub.s32 0, %v30
  %v32 = vrot.slane %v28, %v31
  %v37 = vunpack.c.l.b16 %v15
  %v38 = vunpack.c.l.b16 %v16
  %v39 = vunpack.c.l.b16 %v17
  %v40 = vunpack.c.l.b16 %v18
  %v41 = vpack.c.b16 %v38, %v37
  %v42 = vpack.c.b16 %v40, %v39
  %v51 = vunpack.c.l.b16 %v19
  %v52 = vunpack.c.l.b16 %v20
  %v53 = vunpack.c.l.b16 %v21
  %v54 = vunpack.c.l.b16 %v22
  %v55 = vunpack.c.l.b16 %v23
  %v56 = vunpack.c.l.b16 %v24
  %v57 = vunpack.c.l.b16 %v25
  %v58 = vunpack.c.l.b16 %v26
  %v59 = vpack.c.b16 %v52, %v51
  %v60 = vpack.c.b16 %v54, %v53
  %v61 = vpack.c.b16 %v56, %v55
  %v62 = vpack.c.b16 %v58, %v57
  %vm67 = vcmask 523264
  %v69 = vsel %vm67, %v41, 0
  %v72 = vsel %vm67, %v42, 0
  %74 = vmatprep.subr.bf16.mxu0 0
  %75 = vmatpush1.bf16.msra.mxu0 0
  %76 = vmatprep.subr.bf16.mxu0 0
  %77 = vmatpush1.bf16.msra.mxu0 0
  %78 = vmatprep.subr.bf16.mxu0 0
  %79 = vmatpush1.bf16.msra.mxu0 0
  %80 = vmatprep.subr.bf16.mxu0 0
  %81 = vmatpush1.bf16.msra.mxu0 0
  %82 = vmatprep.subr.bf16.mxu0 0
  %83 = vmatpush1.bf16.msra.mxu0 %v62
  %84 = vmatprep.subr.bf16.mxu0 0
  %85 = vmatpush1.bf16.msra.mxu0 %v61
  %86 = vmatprep.subr.bf16.mxu0 0
  %87 = vmatpush1.bf16.msra.mxu0 %v60
  %88 = vmatprep.subr.bf16.mxu0 0
  %89 = vmatpush1.bf16.msra.mxu0 %v59
  %90 = vmatprep.subr.bf16.mxu0 0
  %91 = vmatpush2.bf16.msra.mxu0 0
  %92 = vmatprep.subr.bf16.mxu0 0
  %93 = vmatpush2.bf16.msra.mxu0 0
  %94 = vmatprep.subr.bf16.mxu0 0
  %95 = vmatpush2.bf16.msra.mxu0 0
  %96 = vmatprep.subr.bf16.mxu0 0
  %97 = vmatpush2.bf16.msra.mxu0 0
  %98 = vmatprep.subr.bf16.mxu0 0
  %99 = vmatpush2.bf16.msra.mxu0 0
  %100 = vmatprep.subr.bf16.mxu0 0
  %101 = vmatpush2.bf16.msra.mxu0 0
  %102 = vmatprep.subr.bf16.mxu0 0
  %103 = vmatpush2.bf16.msra.mxu0 0
  %104 = vmatprep.subr.bf16.mxu0 0
  %105 = vmatpush2.bf16.msra.mxu0 0
  %106 = vmatprep.mubr.bf16.mxu0 0
  %107 = vmatmul.mubr.bf16.gmra.mxu0 %v69
  %v108 = vpop.f32.mrf.mxu0
  %v109 = vadd.f32 %v32, %v108
  %v110 = vpop.f32.mrf.mxu0
  %v111 = vpop.f32.mrf.mxu0
  %v112 = vadd.f32 %v32, %v111
  %v113 = vpop.f32.mrf.mxu0
  %114 = vmatprep.mubr.bf16.mxu0 0
  %115 = vmatmul.mubr.bf16.gmra.mxu0 %v72
  %v116 = vpop.f32.mrf.mxu0
  %v117 = vadd.f32 %v32, %v116
  %v118 = vpop.f32.mrf.mxu0
  %v119 = vpop.f32.mrf.mxu0
  %v120 = vadd.f32 %v32, %v119
  %v121 = vpop.f32.mrf.mxu0
  %122 = vdwg.mxu0
  %v123 = vpack.c.bf16 %v112, %v109
  %v124 = vpack.c.bf16 %v120, %v117
  %v127 = vunpack.c.l.b16 %v123
  %v128 = vunpack.c.h.b16 %v123
  %v129 = vunpack.c.l.b16 %v124
  %v130 = vunpack.c.h.b16 %v124
  %v131 = vpack.c.b16 %v127, %v127
  %v132 = vpack.c.b16 %v128, %v128
  %v133 = vpack.c.b16 %v129, %v129
  %v134 = vpack.c.b16 %v130, %v130
  %139 = vst [vmem:[%s3] sm:$0xf] %v131
  %140 = vst [vmem:[%s3 + $0x4] sm:$0xf] %v132
  %141 = vst [vmem:[%s3 + $0x8] sm:$0xf] %v133
  %142 = vst [vmem:[%s3 + $0xc] sm:$0xf] %v134
  // Predicated region
  $region14: #{vit_forward.4} parent=0 // pred_check
    _
  $region15: #{vit_forward.4} parent=0 // pred_check_branch
    %144 = sbr.rel (0) target = $region17
  $region16: #{vit_forward.4} parent=0 // pred_region
    _
  $region17: #{vit_forward.4} parent=0 // pred_fallthru
    _
  // Predicated region
  $region18: #{vit_forward.4} parent=0 // pred_check
    _
  $region19: #{vit_forward.4} parent=0 // pred_check_branch
    %146 = sbr.rel (0) target = $region21
  $region20: #{vit_forward.4} parent=0 // pred_region
    _
  $region21: #{vit_forward.4} parent=0 // pred_fallthru
    _

// kernel: vit_forward.7
$region0: #{vit_forward.7}
  #allocation0 [shape = 'u32[]', space=smem, size = 0x4, offset = 0x4, fixed_abs, tag = 'smem constant byte address 0x4 - core index']
  #allocation1 [shape = 'u32[144,128]{1,0:T(1,128)}', space=vmem, size = 0x12000, scoped, tag = 'internal scratch']
  %s0 = inlined_call_operand.vmem [shape: bf16[32,32], index: 0, kind: input, shape index: {}]
  %s1 = inlined_call_operand.vmem [shape: bf16[32,128], index: 1, kind: input, shape index: {}]
  %s2 = inlined_call_operand.vmem [shape: bf16[1,128], index: 2, kind: input, shape index: {}]
  %s3 = inlined_call_operand.vmem [shape: f32[32,128], index: 3, kind: output, shape index: {}]
  %s4 = sld [smem:[#allocation0]]
  $region22: #{vit_forward.7} parent=0
    _
  %s6 = ssub.s32 1, %s4
  %s7 = scalar_select 0, %s6, %s4
  // Predicated region
  $region2: #{vit_forward.7} parent=0 // pred_check
    _
  $region3: #{vit_forward.7} parent=0 // pred_check_branch
    %9 = sbr.rel (0) target = $region5
  $region4: #{vit_forward.7} parent=0 // pred_region
    _
  $region5: #{vit_forward.7} parent=0 // pred_fallthru
    _
  // Predicated region
  $region6: #{vit_forward.7} parent=0 // pred_check
    _
  $region7: #{vit_forward.7} parent=0 // pred_check_branch
    %11 = sbr.rel (0) target = $region9
  $region8: #{vit_forward.7} parent=0 // pred_region
    _
  $region9: #{vit_forward.7} parent=0 // pred_fallthru
    _
  // Predicated region
  $region10: #{vit_forward.7} parent=0 // pred_check
    _
  $region11: #{vit_forward.7} parent=0 // pred_check_branch
    %13 = sbr.rel (0) target = $region13
  $region12: #{vit_forward.7} parent=0 // pred_region
    _
  $region13: #{vit_forward.7} parent=0 // pred_fallthru
    _
  %v15 = vld [vmem:[%s0] sm:$0xf]
  %v16 = vld [vmem:[%s0 + $0x4] sm:$0xf]
  %v17 = vld [vmem:[%s0 + $0x8] sm:$0xf]
  %v18 = vld [vmem:[%s0 + $0xc] sm:$0xf]
  %v19 = vld [vmem:[%s1] sm:$0xf]
  %v20 = vld [vmem:[%s1 + $0x4] sm:$0xf]
  %v21 = vld [vmem:[%s1 + $0x8] sm:$0xf]
  %v22 = vld [vmem:[%s1 + $0xc] sm:$0xf]
  %v23 = vld [vmem:[%s2] sm:$0x1]
  %v24 = vunpack.c.l.bf16 %v23
  %v25 = vlaneseq
  %v26 = vshrl.u32 %v25, 7
  %v27 = vsub.s32 0, %v26
  %v28 = vrot.slane %v24, %v27
  %v33 = vunpack.c.l.b16 %v15
  %v34 = vunpack.c.l.b16 %v16
  %v35 = vunpack.c.l.b16 %v17
  %v36 = vunpack.c.l.b16 %v18
  %v37 = vpack.c.b16 %v34, %v33
  %v38 = vpack.c.b16 %v36, %v35
  %v43 = vunpack.c.l.b16 %v19
  %v44 = vunpack.c.l.b16 %v20
  %v45 = vunpack.c.l.b16 %v21
  %v46 = vunpack.c.l.b16 %v22
  %v47 = vpack.c.b16 %v44, %v43
  %v48 = vpack.c.b16 %v46, %v45
  %vm51 = vcmask 261120
  %v53 = vsel %vm51, %v37, 0
  %v56 = vsel %vm51, %v38, 0
  %58 = vmatprep.subr.bf16.mxu0 0
  %59 = vmatpush1.bf16.msra.mxu0 0
  %60 = vmatprep.subr.bf16.mxu0 0
  %61 = vmatpush1.bf16.msra.mxu0 0
  %62 = vmatprep.subr.bf16.mxu0 0
  %63 = vmatpush1.bf16.msra.mxu0 0
  %64 = vmatprep.subr.bf16.mxu0 0
  %65 = vmatpush1.bf16.msra.mxu0 0
  %66 = vmatprep.subr.bf16.mxu0 0
  %67 = vmatpush1.bf16.msra.mxu0 0
  %68 = vmatprep.subr.bf16.mxu0 0
  %69 = vmatpush1.bf16.msra.mxu0 0
  %70 = vmatprep.subr.bf16.mxu0 0
  %71 = vmatpush1.bf16.msra.mxu0 %v48
  %72 = vmatprep.subr.bf16.mxu0 0
  %73 = vmatpush1.bf16.msra.mxu0 %v47
  %74 = vmatprep.subr.bf16.mxu0 0
  %75 = vmatpush2.bf16.msra.mxu0 0
  %76 = vmatprep.subr.bf16.mxu0 0
  %77 = vmatpush2.bf16.msra.mxu0 0
  %78 = vmatprep.subr.bf16.mxu0 0
  %79 = vmatpush2.bf16.msra.mxu0 0
  %80 = vmatprep.subr.bf16.mxu0 0
  %81 = vmatpush2.bf16.msra.mxu0 0
  %82 = vmatprep.subr.bf16.mxu0 0
  %83 = vmatpush2.bf16.msra.mxu0 0
  %84 = vmatprep.subr.bf16.mxu0 0
  %85 = vmatpush2.bf16.msra.mxu0 0
  %86 = vmatprep.subr.bf16.mxu0 0
  %87 = vmatpush2.bf16.msra.mxu0 0
  %88 = vmatprep.subr.bf16.mxu0 0
  %89 = vmatpush2.bf16.msra.mxu0 0
  %90 = vmatprep.mubr.bf16.mxu0 0
  %91 = vmatmul.mubr.bf16.gmra.mxu0 %v53
  %v92 = vpop.f32.mrf.mxu0
  %v93 = vadd.f32 %v28, %v92
  %v94 = vpop.f32.mrf.mxu0
  %v95 = vpop.f32.mrf.mxu0
  %v96 = vadd.f32 %v28, %v95
  %v97 = vpop.f32.mrf.mxu0
  %98 = vmatprep.mubr.bf16.mxu0 0
  %99 = vmatmul.mubr.bf16.gmra.mxu0 %v56
  %v100 = vpop.f32.mrf.mxu0
  %v101 = vadd.f32 %v28, %v100
  %v102 = vpop.f32.mrf.mxu0
  %v103 = vpop.f32.mrf.mxu0
  %v104 = vadd.f32 %v28, %v103
  %v105 = vpop.f32.mrf.mxu0
  %106 = vdwg.mxu0
  %107 = vst [vmem:[%s3] sm:$0xff] %v93
  %108 = vst [vmem:[%s3 + $0x8] sm:$0xff] %v96
  %109 = vst [vmem:[%s3 + $0x10] sm:$0xff] %v101
  %110 = vst [vmem:[%s3 + $0x18] sm:$0xff] %v104
  // Predicated region
  $region14: #{vit_forward.7} parent=0 // pred_check
    _
  $region15: #{vit_forward.7} parent=0 // pred_check_branch
    %112 = sbr.rel (0) target = $region17
  $region16: #{vit_forward.7} parent=0 // pred_region
    _
  $region17: #{vit_forward.7} parent=0 // pred_fallthru
    _
  // Predicated region
  $region18: #{vit_forward.7} parent=0 // pred_check
    _
  $region19: #{vit_forward.7} parent=0 // pred_check_branch
    %114 = sbr.rel (0) target = $region21
  $region20: #{vit_forward.7} parent=0 // pred_region
    _
  $region21: #{vit_forward.7} parent=0 // pred_fallthru
    _

// kernel: vit_forward.5
$region0: #{vit_forward.5}
  #allocation0 [shape = 'u32[]', space=smem, size = 0x4, offset = 0x4, fixed_abs, tag = 'smem constant byte address 0x4 - core index']
  #allocation1 [shape = 'u32[144,128]{1,0:T(1,128)}', space=vmem, size = 0x12000, scoped, tag = 'internal scratch']
  %s0 = inlined_call_operand.vmem [shape: bf16[2,16,32], index: 0, kind: input, shape index: {}, may-alias: {0,1}]
  %s1 = inlined_call_operand.vmem [shape: bf16[2,16,32], index: 1, kind: input, shape index: {}, may-alias: {0,1}]
  %s2 = inlined_call_operand.vmem [shape: bf16[1,32], index: 2, kind: input, shape index: {}]
  %s3 = inlined_call_operand.vmem [shape: bf16[1,32], index: 3, kind: input, shape index: {}]
  %s4 = inlined_call_operand.vmem [shape: bf16[3,4,32,8], index: 4, kind: input, shape index: {}]
  %s5 = inlined_call_operand.vmem [shape: bf16[3,4,1,8], index: 5, kind: input, shape index: {}]
  %s6 = inlined_call_operand.vmem [shape: bf16[4,8,32], index: 6, kind: input, shape index: {}]
  %s7 = inlined_call_operand.vmem [shape: bf16[1,32], index: 7, kind: input, shape index: {}]
  %s8 = inlined_call_operand.vmem [shape: bf16[1,32], index: 8, kind: input, shape index: {}]
  %s9 = inlined_call_operand.vmem [shape: bf16[1,32], index: 9, kind: input, shape index: {}]
  %s10 = inlined_call_operand.vmem [shape: bf16[32,64], index: 10, kind: input, shape index: {}]
  %s11 = inlined_call_operand.vmem [shape: bf16[1,64], index: 11, kind: input, shape index: {}]
  %s12 = inlined_call_operand.vmem [shape: bf16[64,32], index: 12, kind: input, shape index: {}]
  %s13 = inlined_call_operand.vmem [shape: bf16[1,32], index: 13, kind: input, shape index: {}]
  %s14 = inlined_call_operand.vmem [shape: bf16[2,16,32], index: 14, kind: output, shape index: {}]
  %s15 = sld [smem:[#allocation0]]
  $region89: #{vit_forward.5} parent=0
    _
  %s17 = ssub.s32 1, %s15
  %s18 = scalar_select 0, %s17, %s15
  loop: start=0, step=1, limit=4
  $region2: #{vit_forward.5} parent=0 // loop_pre_header
    _
  $region3: #{vit_forward.5} parent=0 // loop_header
    %s20 = sphi 0, %s24
    %p21 = scmp.ge.s32.totalorder %s20, 4
    %s27 = sphi 0, %s39
    %s28 = sphi 0, %s35
    %s29 = sphi 0, %s27
    %s30 = sphi 0, %s28
    %s31 = sphi 0, %s29
    %s32 = sphi 0, %s30
    %s44 = sphi 0, %s46
    %s47 = sphi 0, %s44
    %s48 = sphi 0, %s47
    %s64 = sphi 0, %s48
    %s70 = sphi 0, %s72
    %s73 = sphi 0, %s70
    %s74 = sphi 0, %s73
    %s90 = sphi 0, %s74
    %s94 = sphi 0, %s94
    %s96 = sphi 0, %s94
    %s97 = sphi 0, %s96
    %s111 = sphi 0, %s97
    %s115 = sphi 0, %s115
    %s117 = sphi 0, %s115
    %s118 = sphi 0, %s117
    %s132 = sphi 0, %s118
    %s136 = sphi 0, %s136
    %s138 = sphi 0, %s136
    %s139 = sphi 0, %s138
    %s153 = sphi 0, %s139
    %s157 = sphi 0, %s157
    %s159 = sphi 0, %s157
    %s160 = sphi 0, %s159
    %s174 = sphi 0, %s160
    %s178 = sphi 0, %s178
    %s180 = sphi 0, %s178
    %s181 = sphi 0, %s180
    %s195 = sphi 0, %s181
    %s199 = sphi 0, %s199
    %s201 = sphi 0, %s199
    %s202 = sphi 0, %s201
    %s216 = sphi 0, %s202
    %s220 = sphi 0, %s220
    %s222 = sphi 0, %s220
    %s223 = sphi 0, %s222
    %s237 = sphi 0, %s223
    %s241 = sphi 0, %s241
    %s243 = sphi 0, %s241
    %s244 = sphi 0, %s243
    %s258 = sphi 0, %s244
    %s262 = sphi 0, %s262
    %s264 = sphi 0, %s262
    %s265 = sphi 0, %s264
    %s279 = sphi 0, %s265
    %s283 = sphi 0, %s283
    %s285 = sphi 0, %s283
    %s286 = sphi 0, %s285
    %s300 = sphi 0, %s286
    %s304 = sphi 0, %s304
    %s306 = sphi 0, %s304
    %s307 = sphi 0, %s306
    %s321 = sphi 0, %s307
    %s325 = sphi 0, %s325
    %s327 = sphi 0, %s325
    %s328 = sphi 0, %s327
    %s342 = sphi 0, %s328
    %s350 = sphi 0, %s352
    %s353 = sphi 0, %s350
    %s354 = sphi 0, %s353
    %s370 = sphi 0, %s354
  $region4: #{vit_forward.5} parent=0 // loop_header_branch
    %23 = sbr.rel (%p21) target = $region8
  $region5: #{vit_forward.5} parent=0 // loop_body
    %s25 = ssub.s32 %s20, 1
    %s26 = ssub.s32 %s20, 2
    %s33 = sadd.s32 1, %s28
    %p34 = scmp.ge.s32.totalorder %s33, 1
    %s35 = scalar_select %p34, 0, %s33
    %s36 = sadd.s32 1, %s27
    %s37 = scalar_select %p34, %s36, %s27
    %p38 = scmp.ge.s32.totalorder %s37, 2
    %s39 = scalar_select %p38, 0, %s37
    %s40 = ssub.s32 %s27, %s39
    %s41 = ssub.s32 %s28, %s35
    %s42 = sor.u32 %s40, %s41
    %p43 = scmp.eq.s32.totalorder %s42, 0
    %s45 = sadd.s32 %s44, 1
    %s46 = scalar_select %p43, %s44, %s45
    %p49 = pneg %p43
    %p50 = scmp.eq.s32.totalorder %s20, 1
    %p51 = por %p49, %p50
    %p52 = scmp.ne.s32.totalorder %s44, %s47
    %p53 = scmp.eq.s32.totalorder %s20, 0
    %p54 = por %p52, %p53
    %p55 = scmp.ne.s32.totalorder %s44, %s47
    %p56 = scmp.eq.s32.totalorder %s25, 1
    %p57 = por %p55, %p56
    %p58 = scmp.ne.s32.totalorder %s47, %s48
    %p59 = scmp.eq.s32.totalorder %s25, 0
    %p60 = por %p58, %p59
    %p61 = scmp.ne.s32.totalorder %s47, %s48
    %p62 = scmp.eq.s32.totalorder %s26, 1
    %p63 = por %p61, %p62
    %p65 = scmp.ne.s32.totalorder %s48, %s64
    %p66 = scmp.eq.s32.totalorder %s26, 0
    %p67 = por %p65, %p66
    %s68 = ssub.s32 %s27, %s39
    %p69 = scmp.eq.s32.totalorder %s68, 0
    %s71 = sadd.s32 %s70, 1
    %s72 = scalar_select %p69, %s70, %s71
    %p75 = pneg %p69
    %p76 = scmp.eq.s32.totalorder %s20, 1
    %p77 = por %p75, %p76
    %p78 = scmp.ne.s32.totalorder %s70, %s73
    %p79 = scmp.eq.s32.totalorder %s20, 0
    %p80 = por %p78, %p79
    %p81 = scmp.ne.s32.totalorder %s70, %s73
    %p82 = scmp.eq.s32.totalorder %s25, 1
    %p83 = por %p81, %p82
    %p84 = scmp.ne.s32.totalorder %s73, %s74
    %p85 = scmp.eq.s32.totalorder %s25, 0
    %p86 = por %p84, %p85
    %p87 = scmp.ne.s32.totalorder %s73, %s74
    %p88 = scmp.eq.s32.totalorder %s26, 1
    %p89 = por %p87, %p88
    %p91 = scmp.ne.s32.totalorder %s74, %s90
    %p92 = scmp.eq.s32.totalorder %s26, 0
    %p93 = por %p91, %p92
    %s95 = sadd.s32 %s94, 1
    %p98 = scmp.eq.s32.totalorder %s20, 1
    %p99 = scmp.ne.s32.totalorder %s94, %s96
    %p100 = scmp.eq.s32.totalorder %s20, 0
    %p101 = por %p99, %p100
    %p102 = scmp.ne.s32.totalorder %s94, %s96
    %p103 = scmp.eq.s32.totalorder %s25, 1
    %p104 = por %p102, %p103
    %p105 = scmp.ne.s32.totalorder %s96, %s97
    %p106 = scmp.eq.s32.totalorder %s25, 0
    %p107 = por %p105, %p106
    %p108 = scmp.ne.s32.totalorder %s96, %s97
    %p109 = scmp.eq.s32.totalorder %s26, 1
    %p110 = por %p108, %p109
    %p112 = scmp.ne.s32.totalorder %s97, %s111
    %p113 = scmp.eq.s32.totalorder %s26, 0
    %p114 = por %p112, %p113
    %s116 = sadd.s32 %s115, 1
    %p119 = scmp.eq.s32.totalorder %s20, 1
    %p120 = scmp.ne.s32.totalorder %s115, %s117
    %p121 = scmp.eq.s32.totalorder %s20, 0
    %p122 = por %p120, %p121
    %p123 = scmp.ne.s32.totalorder %s115, %s117
    %p124 = scmp.eq.s32.totalorder %s25, 1
    %p125 = por %p123, %p124
    %p126 = scmp.ne.s32.totalorder %s117, %s118
    %p127 = scmp.eq.s32.totalorder %s25, 0
    %p128 = por %p126, %p127
    %p129 = scmp.ne.s32.totalorder %s117, %s118
    %p130 = scmp.eq.s32.totalorder %s26, 1
    %p131 = por %p129, %p130
    %p133 = scmp.ne.s32.totalorder %s118, %s132
    %p134 = scmp.eq.s32.totalorder %s26, 0
    %p135 = por %p133, %p134
    %s137 = sadd.s32 %s136, 1
    %p140 = scmp.eq.s32.totalorder %s20, 1
    %p141 = scmp.ne.s32.totalorder %s136, %s138
    %p142 = scmp.eq.s32.totalorder %s20, 0
    %p143 = por %p141, %p142
    %p144 = scmp.ne.s32.totalorder %s136, %s138
    %p145 = scmp.eq.s32.totalorder %s25, 1
    %p146 = por %p144, %p145
    %p147 = scmp.ne.s32.totalorder %s138, %s139
    %p148 = scmp.eq.s32.totalorder %s25, 0
    %p149 = por %p147, %p148
    %p150 = scmp.ne.s32.totalorder %s138, %s139
    %p151 = scmp.eq.s32.totalorder %s26, 1
    %p152 = por %p150, %p151
    %p154 = scmp.ne.s32.totalorder %s139, %s153
    %p155 = scmp.eq.s32.totalorder %s26, 0
    %p156 = por %p154, %p155
    %s158 = sadd.s32 %s157, 1
    %p161 = scmp.eq.s32.totalorder %s20, 1
    %p162 = scmp.ne.s32.totalorder %s157, %s159
    %p163 = scmp.eq.s32.totalorder %s20, 0
    %p164 = por %p162, %p163
    %p165 = scmp.ne.s32.totalorder %s157, %s159
    %p166 = scmp.eq.s32.totalorder %s25, 1
    %p167 = por %p165, %p166
    %p168 = scmp.ne.s32.totalorder %s159, %s160
    %p169 = scmp.eq.s32.totalorder %s25, 0
    %p170 = por %p168, %p169
    %p171 = scmp.ne.s32.totalorder %s159, %s160
    %p172 = scmp.eq.s32.totalorder %s26, 1
    %p173 = por %p171, %p172
    %p175 = scmp.ne.s32.totalorder %s160, %s174
    %p176 = scmp.eq.s32.totalorder %s26, 0
    %p177 = por %p175, %p176
    %s179 = sadd.s32 %s178, 1
    %p182 = scmp.eq.s32.totalorder %s20, 1
    %p183 = scmp.ne.s32.totalorder %s178, %s180
    %p184 = scmp.eq.s32.totalorder %s20, 0
    %p185 = por %p183, %p184
    %p186 = scmp.ne.s32.totalorder %s178, %s180
    %p187 = scmp.eq.s32.totalorder %s25, 1
    %p188 = por %p186, %p187
    %p189 = scmp.ne.s32.totalorder %s180, %s181
    %p190 = scmp.eq.s32.totalorder %s25, 0
    %p191 = por %p189, %p190
    %p192 = scmp.ne.s32.totalorder %s180, %s181
    %p193 = scmp.eq.s32.totalorder %s26, 1
    %p194 = por %p192, %p193
    %p196 = scmp.ne.s32.totalorder %s181, %s195
    %p197 = scmp.eq.s32.totalorder %s26, 0
    %p198 = por %p196, %p197
    %s200 = sadd.s32 %s199, 1
    %p203 = scmp.eq.s32.totalorder %s20, 1
    %p204 = scmp.ne.s32.totalorder %s199, %s201
    %p205 = scmp.eq.s32.totalorder %s20, 0
    %p206 = por %p204, %p205
    %p207 = scmp.ne.s32.totalorder %s199, %s201
    %p208 = scmp.eq.s32.totalorder %s25, 1
    %p209 = por %p207, %p208
    %p210 = scmp.ne.s32.totalorder %s201, %s202
    %p211 = scmp.eq.s32.totalorder %s25, 0
    %p212 = por %p210, %p211
    %p213 = scmp.ne.s32.totalorder %s201, %s202
    %p214 = scmp.eq.s32.totalorder %s26, 1
    %p215 = por %p213, %p214
    %p217 = scmp.ne.s32.totalorder %s202, %s216
    %p218 = scmp.eq.s32.totalorder %s26, 0
    %p219 = por %p217, %p218
    %s221 = sadd.s32 %s220, 1
    %p224 = scmp.eq.s32.totalorder %s20, 1
    %p225 = scmp.ne.s32.totalorder %s220, %s222
    %p226 = scmp.eq.s32.totalorder %s20, 0
    %p227 = por %p225, %p226
    %p228 = scmp.ne.s32.totalorder %s220, %s222
    %p229 = scmp.eq.s32.totalorder %s25, 1
    %p230 = por %p228, %p229
    %p231 = scmp.ne.s32.totalorder %s222, %s223
    %p232 = scmp.eq.s32.totalorder %s25, 0
    %p233 = por %p231, %p232
    %p234 = scmp.ne.s32.totalorder %s222, %s223
    %p235 = scmp.eq.s32.totalorder %s26, 1
    %p236 = por %p234, %p235
    %p238 = scmp.ne.s32.totalorder %s223, %s237
    %p239 = scmp.eq.s32.totalorder %s26, 0
    %p240 = por %p238, %p239
    %s242 = sadd.s32 %s241, 1
    %p245 = scmp.eq.s32.totalorder %s20, 1
    %p246 = scmp.ne.s32.totalorder %s241, %s243
    %p247 = scmp.eq.s32.totalorder %s20, 0
    %p248 = por %p246, %p247
    %p249 = scmp.ne.s32.totalorder %s241, %s243
    %p250 = scmp.eq.s32.totalorder %s25, 1
    %p251 = por %p249, %p250
    %p252 = scmp.ne.s32.totalorder %s243, %s244
    %p253 = scmp.eq.s32.totalorder %s25, 0
    %p254 = por %p252, %p253
    %p255 = scmp.ne.s32.totalorder %s243, %s244
    %p256 = scmp.eq.s32.totalorder %s26, 1
    %p257 = por %p255, %p256
    %p259 = scmp.ne.s32.totalorder %s244, %s258
    %p260 = scmp.eq.s32.totalorder %s26, 0
    %p261 = por %p259, %p260
    %s263 = sadd.s32 %s262, 1
    %p266 = scmp.eq.s32.totalorder %s20, 1
    %p267 = scmp.ne.s32.totalorder %s262, %s264
    %p268 = scmp.eq.s32.totalorder %s20, 0
    %p269 = por %p267, %p268
    %p270 = scmp.ne.s32.totalorder %s262, %s264
    %p271 = scmp.eq.s32.totalorder %s25, 1
    %p272 = por %p270, %p271
    %p273 = scmp.ne.s32.totalorder %s264, %s265
    %p274 = scmp.eq.s32.totalorder %s25, 0
    %p275 = por %p273, %p274
    %p276 = scmp.ne.s32.totalorder %s264, %s265
    %p277 = scmp.eq.s32.totalorder %s26, 1
    %p278 = por %p276, %p277
    %p280 = scmp.ne.s32.totalorder %s265, %s279
    %p281 = scmp.eq.s32.totalorder %s26, 0
    %p282 = por %p280, %p281
    %s284 = sadd.s32 %s283, 1
    %p287 = scmp.eq.s32.totalorder %s20, 1
    %p288 = scmp.ne.s32.totalorder %s283, %s285
    %p289 = scmp.eq.s32.totalorder %s20, 0
    %p290 = por %p288, %p289
    %p291 = scmp.ne.s32.totalorder %s283, %s285
    %p292 = scmp.eq.s32.totalorder %s25, 1
    %p293 = por %p291, %p292
    %p294 = scmp.ne.s32.totalorder %s285, %s286
    %p295 = scmp.eq.s32.totalorder %s25, 0
    %p296 = por %p294, %p295
    %p297 = scmp.ne.s32.totalorder %s285, %s286
    %p298 = scmp.eq.s32.totalorder %s26, 1
    %p299 = por %p297, %p298
    %p301 = scmp.ne.s32.totalorder %s286, %s300
    %p302 = scmp.eq.s32.totalorder %s26, 0
    %p303 = por %p301, %p302
    %s305 = sadd.s32 %s304, 1
    %p308 = scmp.eq.s32.totalorder %s20, 1
    %p309 = scmp.ne.s32.totalorder %s304, %s306
    %p310 = scmp.eq.s32.totalorder %s20, 0
    %p311 = por %p309, %p310
    %p312 = scmp.ne.s32.totalorder %s304, %s306
    %p313 = scmp.eq.s32.totalorder %s25, 1
    %p314 = por %p312, %p313
    %p315 = scmp.ne.s32.totalorder %s306, %s307
    %p316 = scmp.eq.s32.totalorder %s25, 0
    %p317 = por %p315, %p316
    %p318 = scmp.ne.s32.totalorder %s306, %s307
    %p319 = scmp.eq.s32.totalorder %s26, 1
    %p320 = por %p318, %p319
    %p322 = scmp.ne.s32.totalorder %s307, %s321
    %p323 = scmp.eq.s32.totalorder %s26, 0
    %p324 = por %p322, %p323
    %s326 = sadd.s32 %s325, 1
    %p329 = scmp.eq.s32.totalorder %s20, 1
    %p330 = scmp.ne.s32.totalorder %s325, %s327
    %p331 = scmp.eq.s32.totalorder %s20, 0
    %p332 = por %p330, %p331
    %p333 = scmp.ne.s32.totalorder %s325, %s327
    %p334 = scmp.eq.s32.totalorder %s25, 1
    %p335 = por %p333, %p334
    %p336 = scmp.ne.s32.totalorder %s327, %s328
    %p337 = scmp.eq.s32.totalorder %s25, 0
    %p338 = por %p336, %p337
    %p339 = scmp.ne.s32.totalorder %s327, %s328
    %p340 = scmp.eq.s32.totalorder %s26, 1
    %p341 = por %p339, %p340
    %p343 = scmp.ne.s32.totalorder %s328, %s342
    %p344 = scmp.eq.s32.totalorder %s26, 0
    %p345 = por %p343, %p344
    %s346 = ssub.s32 %s27, %s39
    %s347 = ssub.s32 %s28, %s35
    %s348 = sor.u32 %s346, %s347
    %p349 = scmp.eq.s32.totalorder %s348, 0
    %s351 = sadd.s32 %s350, 1
    %s352 = scalar_select %p349, %s350, %s351
    %p355 = pneg %p349
    %p356 = scmp.eq.s32.totalorder %s20, 1
    %p357 = por %p355, %p356
    %p358 = scmp.ne.s32.totalorder %s350, %s353
    %p359 = scmp.eq.s32.totalorder %s20, 0
    %p360 = por %p358, %p359
    %p361 = scmp.ne.s32.totalorder %s350, %s353
    %p362 = scmp.eq.s32.totalorder %s25, 1
    %p363 = por %p361, %p362
    %p364 = scmp.ne.s32.totalorder %s353, %s354
    %p365 = scmp.eq.s32.totalorder %s25, 0
    %p366 = por %p364, %p365
    %p367 = scmp.ne.s32.totalorder %s353, %s354
    %p368 = scmp.eq.s32.totalorder %s26, 1
    %p369 = por %p367, %p368
    %p371 = scmp.ne.s32.totalorder %s354, %s370
    %p372 = scmp.eq.s32.totalorder %s26, 0
    %p373 = por %p371, %p372
    %p374 = scmp.le.s32.totalorder 1, %s20
    %p375 = scmp.lt.s32.totalorder %s20, 3
    %p376 = pnand %p374, %p375
    %p377 = pneg %p376
    // Predicated region
    $region9: #{vit_forward.5} parent=5 // pred_check
      _
    $region10: #{vit_forward.5} parent=5 // pred_check_branch
      %379 = sbr.rel (%p376) target = $region12
    $region11: #{vit_forward.5} parent=5 // pred_region
      %s380 = ssub.s32 %s20, 1
      // Predicated region
      $region13: #{vit_forward.5} parent=11 // pred_check
        %p381 = pneg %p107
      $region14: #{vit_forward.5} parent=11 // pred_check_branch
        %383 = sbr.rel (%p381) target = $region16
      $region15: #{vit_forward.5} parent=11 // pred_region
        _
      $region16: #{vit_forward.5} parent=11 // pred_fallthru
        _
      // Predicated region
      $region17: #{vit_forward.5} parent=11 // pred_check
        %p384 = pneg %p128
      $region18: #{vit_forward.5} parent=11 // pred_check_branch
        %386 = sbr.rel (%p384) target = $region20
      $region19: #{vit_forward.5} parent=11 // pred_region
        _
      $region20: #{vit_forward.5} parent=11 // pred_fallthru
        _
      // Predicated region
      $region21: #{vit_forward.5} parent=11 // pred_check
        %p387 = pneg %p149
      $region22: #{vit_forward.5} parent=11 // pred_check_branch
        %389 = sbr.rel (%p387) target = $region24
      $region23: #{vit_forward.5} parent=11 // pred_region
        _
      $region24: #{vit_forward.5} parent=11 // pred_fallthru
        _
      // Predicated region
      $region25: #{vit_forward.5} parent=11 // pred_check
        %p390 = pneg %p170
      $region26: #{vit_forward.5} parent=11 // pred_check_branch
        %392 = sbr.rel (%p390) target = $region28
      $region27: #{vit_forward.5} parent=11 // pred_region
        _
      $region28: #{vit_forward.5} parent=11 // pred_fallthru
        _
      // Predicated region
      $region29: #{vit_forward.5} parent=11 // pred_check
        %p393 = pneg %p191
      $region30: #{vit_forward.5} parent=11 // pred_check_branch
        %395 = sbr.rel (%p393) target = $region32
      $region31: #{vit_forward.5} parent=11 // pred_region
        _
      $region32: #{vit_forward.5} parent=11 // pred_fallthru
        _
      // Predicated region
      $region33: #{vit_forward.5} parent=11 // pred_check
        %p396 = pneg %p212
      $region34: #{vit_forward.5} parent=11 // pred_check_branch
        %398 = sbr.rel (%p396) target = $region36
      $region35: #{vit_forward.5} parent=11 // pred_region
        _
      $region36: #{vit_forward.5} parent=11 // pred_fallthru
        _
      // Predicated region
      $region37: #{vit_forward.5} parent=11 // pred_check
        %p399 = pneg %p233
      $region38: #{vit_forward.5} parent=11 // pred_check_branch
        %401 = sbr.rel (%p399) target = $region40
      $region39: #{vit_forward.5} parent=11 // pred_region
        _
      $region40: #{vit_forward.5} parent=11 // pred_fallthru
        _
      // Predicated region
      $region41: #{vit_forward.5} parent=11 // pred_check
        %p402 = pneg %p254
      $region42: #{vit_forward.5} parent=11 // pred_check_branch
        %404 = sbr.rel (%p402) target = $region44
      $region43: #{vit_forward.5} parent=11 // pred_region
        _
      $region44: #{vit_forward.5} parent=11 // pred_fallthru
        _
      // Predicated region
      $region45: #{vit_forward.5} parent=11 // pred_check
        %p405 = pneg %p275
      $region46: #{vit_forward.5} parent=11 // pred_check_branch
        %407 = sbr.rel (%p405) target = $region48
      $region47: #{vit_forward.5} parent=11 // pred_region
        _
      $region48: #{vit_forward.5} parent=11 // pred_fallthru
        _
      // Predicated region
      $region49: #{vit_forward.5} parent=11 // pred_check
        %p408 = pneg %p296
      $region50: #{vit_forward.5} parent=11 // pred_check_branch
        %410 = sbr.rel (%p408) target = $region52
      $region51: #{vit_forward.5} parent=11 // pred_region
        _
      $region52: #{vit_forward.5} parent=11 // pred_fallthru
        _
      // Predicated region
      $region53: #{vit_forward.5} parent=11 // pred_check
        %p411 = pneg %p317
      $region54: #{vit_forward.5} parent=11 // pred_check_branch
        %413 = sbr.rel (%p411) target = $region56
      $region55: #{vit_forward.5} parent=11 // pred_region
        _
      $region56: #{vit_forward.5} parent=11 // pred_fallthru
        _
      // Predicated region
      $region57: #{vit_forward.5} parent=11 // pred_check
        %p414 = pneg %p338
      $region58: #{vit_forward.5} parent=11 // pred_check_branch
        %416 = sbr.rel (%p414) target = $region60
      $region59: #{vit_forward.5} parent=11 // pred_region
        _
      $region60: #{vit_forward.5} parent=11 // pred_fallthru
        _
    $region12: #{vit_forward.5} parent=5 // pred_fallthru
      _
    %p417 = scmp.lt.s32.totalorder %s20, 2
    // Predicated region
    $region61: #{vit_forward.5} parent=5 // pred_check
      %p418 = pneg %p417
    $region62: #{vit_forward.5} parent=5 // pred_check_branch
      %420 = sbr.rel (%p418) target = $region64
    $region63: #{vit_forward.5} parent=5 // pred_region
      // Predicated region
      $region65: #{vit_forward.5} parent=63 // pred_check
        %p421 = pneg %p54
      $region66: #{vit_forward.5} parent=63 // pred_check_branch
        %423 = sbr.rel (%p421) target = $region68
      $region67: #{vit_forward.5} parent=63 // pred_region
        %s424 = smul.u32 2, %s28
        %p425 = scmp.lt.s32.totalorder %s27, 1
        %s426 = scalar_select %p425, %s27, 1
        %p427 = scmp.lt.s32.totalorder %s424, 1
        %s428 = scalar_select %p427, %s424, 1
        %s429 = smul.addr %s426, 2
        %s430 = sadd.s32 %s428, %s429
        %s431 = smul.addr %s430, 4
        %s432 = scalar_lea.vmem %s0, %s431
        %s433 = smul.u32 2, %s28
      $region68: #{vit_forward.5} parent=63 // pred_fallthru
        _
      // Predicated region
      $region69: #{vit_forward.5} parent=63 // pred_check
        %p434 = pneg %p80
      $region70: #{vit_forward.5} parent=63 // pred_check_branch
        %436 = sbr.rel (%p434) target = $region72
      $region71: #{vit_forward.5} parent=63 // pred_region
        %p437 = scmp.lt.s32.totalorder %s27, 1
        %s438 = scalar_select %p437, %s27, 1
        %s439 = smul.addr %s438, 2
        %s440 = smul.addr %s439, 4
        %s441 = scalar_lea.vmem %s1, %s440
      $region72: #{vit_forward.5} parent=63 // pred_fallthru
        _
    $region64: #{vit_forward.5} parent=5 // pred_fallthru
      _
    %p442 = scmp.le.s32.totalorder 1, %s20
    %p443 = scmp.lt.s32.totalorder %s20, 3
    %p444 = pnand %p442, %p443
    %p445 = pneg %p444
    // Predicated region
    $region73: #{vit_forward.5} parent=5 // pred_check
      _
    $region74: #{vit_forward.5} parent=5 // pred_check_branch
      %447 = sbr.rel (%p444) target = $region76
    $region75: #{vit_forward.5} parent=5 // pred_region
      %s448 = ssub.s32 %s20, 1
      %s449 = smul.u32 2, %s30
      %p450 = scmp.lt.s32.totalorder %s29, 1
      %s451 = scalar_select %p450, %s29, 1
      %p452 = scmp.lt.s32.totalorder %s449, 1
      %s453 = scalar_select %p452, %s449, 1
      %s454 = smul.addr %s451, 2
      %s455 = sadd.s32 %s453, %s454
      %s456 = smul.addr %s455, 4
      %s457 = scalar_lea.vmem %s0, %s456
      %p458 = pneg %p60
      %p459 = pneg %p57
      %p460 = scmp.lt.s32.totalorder %s29, 1
      %s461 = scalar_select %p460, %s29, 1
      %s462 = smul.addr %s461, 2
      %s463 = smul.addr %s462, 4
      %s464 = scalar_lea.vmem %s1, %s463
      %p465 = pneg %p86
      %p466 = pneg %p83
      %p467 = pneg %p107
      %p468 = pneg %p104
      %p469 = pneg %p128
      %p470 = pneg %p125
      %p471 = pneg %p149
      %p472 = pneg %p146
      %p473 = pneg %p170
      %p474 = pneg %p167
      %p475 = pneg %p191
      %p476 = pneg %p188
      %p477 = pneg %p212
      %p478 = pneg %p209
      %p479 = pneg %p233
      %p480 = pneg %p230
      %p481 = pneg %p254
      %p482 = pneg %p251
      %p483 = pneg %p275
      %p484 = pneg %p272
      %p485 = pneg %p296
      %p486 = pneg %p293
      %p487 = pneg %p317
      %p488 = pneg %p314
      %p489 = pneg %p338
      %p490 = pneg %p335
      %p491 = pneg %p366
      %p492 = pneg %p363
      %s493 = smul.u32 2, %s30
      %p494 = scmp.lt.s32.totalorder %s29, 1
      %s495 = scalar_select %p494, %s29, 1
      %p496 = scmp.lt.s32.totalorder %s493, 1
      %s497 = scalar_select %p496, %s493, 1
      %s498 = smul.addr %s495, 2
      %s499 = sadd.s32 %s497, %s498
      %s500 = smul.addr %s499, 4
      %s501 = scalar_lea.vmem %s14, %s500
      %s502 = smul.u32 2, %s30
      %p503 = scmp.lt.s32.totalorder %s29, 1
      %s504 = scalar_select %p503, %s29, 1
      %p505 = scmp.lt.s32.totalorder %s502, 1
      %s506 = scalar_select %p505, %s502, 1
      %s507 = smul.addr %s504, 2
      %s508 = sadd.s32 %s506, %s507
      %s509 = smul.addr %s508, 4
      %s510 = scalar_lea.vmem %s0, %s509
      %s511 = smul.u32 2, %s30
      %p512 = scmp.lt.s32.totalorder %s29, 1
      %s513 = scalar_select %p512, %s29, 1
      %s514 = smul.addr %s513, 2
      %s515 = smul.addr %s514, 4
      %s516 = scalar_lea.vmem %s1, %s515
      %s517 = smul.u32 2, %s30
      %p518 = scmp.lt.s32.totalorder %s29, 1
      %s519 = scalar_select %p518, %s29, 1
      %p520 = scmp.lt.s32.totalorder %s517, 1
      %s521 = scalar_select %p520, %s517, 1
      %s522 = smul.addr %s519, 2
      %s523 = sadd.s32 %s521, %s522
      %s524 = smul.addr %s523, 4
      %s525 = scalar_lea.vmem %s14, %s524
      %s526 = smul.u32 2, %s30
      %v528 = vld [vmem:[%s510] sm:$0xf]
      %v529 = vld [vmem:[%s510 + $0x4] sm:$0xf]
      %v530 = vunpack.c.l.bf16 %v528
      %v531 = vunpack.c.l.bf16 %v529
      %v532 = vld [vmem:[%s516] sm:$0xf]
      %v533 = vld [vmem:[%s516 + $0x4] sm:$0xf]
      %v534 = vunpack.c.l.bf16 %v532
      %v535 = vunpack.c.l.bf16 %v533
      %vm536 = vcmask 261120
      %v537 = vsel %vm536, %v534, 0.0
      %538 = vadd.xlane.f32.xlu0 %v537
      %v539 = vpop.xlane.xlu0 %538
      %v540 = vsel %vm536, %v535, 0.0
      %541 = vadd.xlane.f32.xlu0 %v540
      %v542 = vpop.xlane.xlu0 %541
      %v543 = vrcp.pop 32.0
      %v544 = vmul.f32 %v539, %v543
      %v545 = vmul.f32 %v542, %v543
      %v546 = vsub.f32 %v534, %v544
      %v547 = vsub.f32 %v535, %v545
      %v548 = vmul.f32 %v546, %v546
      %v549 = vmul.f32 %v547, %v547
      %v550 = vsel %vm536, %v548, 0.0
      %551 = vadd.xlane.f32.xlu0 %v550
      %v552 = vpop.xlane.xlu0 %551
      %v553 = vsel %vm536, %v549, 0.0
      %554 = vadd.xlane.f32.xlu0 %v553
      %v555 = vpop.xlane.xlu0 %554
      %v556 = vmul.f32 %v552, %v543
      %v557 = vmul.f32 %v555, %v543
      %v558 = vadd.f32 %v556, 1e-05
      %v559 = vadd.f32 %v557, 1e-05
      %v560 = vrsqrt.pop %v558
      %v561 = vrsqrt.pop %v559
      %v562 = vmul.f32 %v546, %v560
      %v563 = vmul.f32 %v547, %v561
      %v564 = vld [vmem:[%s2] sm:$0x1]
      %v565 = vunpack.c.l.bf16 %v564
      %v566 = vlaneseq
      %v567 = vshrl.u32 %v566, 7
      %v568 = vsub.s32 0, %v567
      %v569 = vrot.slane %v565, %v568
      %v570 = vmul.f32 %v562, %v569
      %v571 = vmul.f32 %v563, %v569
      %v572 = vld [vmem:[%s3] sm:$0x1]
      %v573 = vunpack.c.l.bf16 %v572
      %v574 = vlaneseq
      %v575 = vshrl.u32 %v574, 7
      %v576 = vsub.s32 0, %v575
      %v577 = vrot.slane %v573, %v576
      %v578 = vadd.f32 %v570, %v577
      %v579 = vadd.f32 %v571, %v577
      %v580 = vpack.c.bf16 %v579, %v578
      %v581 = vsel %vm536, %v530, 0.0
      %582 = vadd.xlane.f32.xlu0 %v581
      %v583 = vpop.xlane.xlu0 %582
      %v584 = vsel %vm536, %v531, 0.0
      %585 = vadd.xlane.f32.xlu0 %v584
      %v586 = vpop.xlane.xlu0 %585
      %v587 = vmul.f32 %v583, %v543
      %v588 = vmul.f32 %v586, %v543
      %v589 = vsub.f32 %v530, %v587
      %v590 = vsub.f32 %v531, %v588
      %v591 = vmul.f32 %v589, %v589
      %v592 = vmul.f32 %v590, %v590
      %v593 = vsel %vm536, %v591, 0.0
      %594 = vadd.xlane.f32.xlu0 %v593
      %v595 = vpop.xlane.xlu0 %594
      %v596 = vsel %vm536, %v592, 0.0
      %597 = vadd.xlane.f32.xlu0 %v596
      %v598 = vpop.xlane.xlu0 %597
      %v599 = vmul.f32 %v595, %v543
      %v600 = vmul.f32 %v598, %v543
      %v601 = vadd.f32 %v599, 1e-05
      %v602 = vadd.f32 %v600, 1e-05
      %v603 = vrsqrt.pop %v601
      %v604 = vrsqrt.pop %v602
      %v605 = vmul.f32 %v589, %v603
      %v606 = vmul.f32 %v590, %v604
      %v607 = vmul.f32 %v605, %v569
      %v608 = vmul.f32 %v606, %v569
      %v609 = vadd.f32 %v607, %v577
      %v610 = vadd.f32 %v608, %v577
      %v611 = vpack.c.bf16 %v610, %v609
      %v612 = vld [vmem:[%s4] sm:$0xf]
      %v613 = vld [vmem:[%s4 + $0x4] sm:$0xf]
      %v614 = vld [vmem:[%s4 + $0x8] sm:$0xf]
      %v615 = vld [vmem:[%s4 + $0xc] sm:$0xf]
      %v616 = vld [vmem:[%s5] sm:$0x1]
      %v617 = vunpack.c.l.bf16 %v616
      %v618 = vlaneseq
      %v619 = vshrl.u32 %v618, 7
      %v620 = vsub.s32 0, %v619
      %v621 = vrot.slane %v617, %v620
      %v626 = vunpack.c.l.b16 %v612
      %v627 = vunpack.c.l.b16 %v613
      %v628 = vunpack.c.l.b16 %v614
      %v629 = vunpack.c.l.b16 %v615
      %v630 = vpack.c.b16 %v627, %v626
      %v631 = vpack.c.b16 %v629, %v628
      %v635 = vsel %vm536, %v611, 0
      %637 = vmatprep.subr.bf16.mxu0 0
      %638 = vmatpush1.bf16.msra.mxu0 0
      %639 = vmatprep.subr.bf16.mxu0 0
      %640 = vmatpush1.bf16.msra.mxu0 0
      %641 = vmatprep.subr.bf16.mxu0 0
      %642 = vmatpush1.bf16.msra.mxu0 0
      %643 = vmatprep.subr.bf16.mxu0 0
      %644 = vmatpush1.bf16.msra.mxu0 0
      %645 = vmatprep.subr.bf16.mxu0 0
      %646 = vmatpush1.bf16.msra.mxu0 0
      %647 = vmatprep.subr.bf16.mxu0 0
      %648 = vmatpush1.bf16.msra.mxu0 0
      %649 = vmatprep.subr.bf16.mxu0 0
      %650 = vmatpush1.bf16.msra.mxu0 %v631
      %651 = vmatprep.subr.bf16.mxu0 0
      %652 = vmatpush1.bf16.msra.mxu0 %v630
      %653 = vmatprep.subr.bf16.mxu0 0
      %654 = vmatpush2.bf16.msra.mxu0 0
      %655 = vmatprep.subr.bf16.mxu0 0
      %656 = vmatpush2.bf16.msra.mxu0 0
      %657 = vmatprep.subr.bf16.mxu0 0
      %658 = vmatpush2.bf16.msra.mxu0 0
      %659 = vmatprep.subr.bf16.mxu0 0
      %660 = vmatpush2.bf16.msra.mxu0 0
      %661 = vmatprep.subr.bf16.mxu0 0
      %662 = vmatpush2.bf16.msra.mxu0 0
      %663 = vmatprep.subr.bf16.mxu0 0
      %664 = vmatpush2.bf16.msra.mxu0 0
      %665 = vmatprep.subr.bf16.mxu0 0
      %666 = vmatpush2.bf16.msra.mxu0 0
      %667 = vmatprep.subr.bf16.mxu0 0
      %668 = vmatpush2.bf16.msra.mxu0 0
      %669 = vmatprep.mubr.bf16.mxu0 0
      %670 = vmatmul.mubr.bf16.gmra.mxu0 %v635
      %v671 = vpop.f32.mrf.mxu0
      %v672 = vadd.f32 %v621, %v671
      %v673 = vpop.f32.mrf.mxu0
      %v674 = vpop.f32.mrf.mxu0
      %v675 = vadd.f32 %v621, %v674
      %v676 = vpop.f32.mrf.mxu0
      %677 = vdwg.mxu0
      %s678 = scalar_lea.vmem %s4, 64
      %v679 = vld [vmem:[%s678] sm:$0xf]
      %v680 = vld [vmem:[%s678 + $0x4] sm:$0xf]
      %v681 = vld [vmem:[%s678 + $0x8] sm:$0xf]
      %v682 = vld [vmem:[%s678 + $0xc] sm:$0xf]
      %s683 = scalar_lea.vmem %s5, 4
      %v684 = vld [vmem:[%s683] sm:$0x1]
      %v685 = vunpack.c.l.bf16 %v684
      %v686 = vlaneseq
      %v687 = vshrl.u32 %v686, 7
      %v688 = vsub.s32 0, %v687
      %v689 = vrot.slane %v685, %v688
      %v694 = vunpack.c.l.b16 %v679
      %v695 = vunpack.c.l.b16 %v680
      %v696 = vunpack.c.l.b16 %v681
      %v697 = vunpack.c.l.b16 %v682
      %v698 = vpack.c.b16 %v695, %v694
      %v699 = vpack.c.b16 %v697, %v696
      %v703 = vsel %vm536, %v580, 0
      %705 = vmatprep.subr.bf16.mxu0 0
      %706 = vmatpush1.bf16.msra.mxu0 0
      %707 = vmatprep.subr.bf16.mxu0 0
      %708 = vmatpush1.bf16.msra.mxu0 0
      %709 = vmatprep.subr.bf16.mxu0 0
      %710 = vmatpush1.bf16.msra.mxu0 0
      %711 = vmatprep.subr.bf16.mxu0 0
      %712 = vmatpush1.bf16.msra.mxu0 0
      %713 = vmatprep.subr.bf16.mxu0 0
      %714 = vmatpush1.bf16.msra.mxu0 0
      %715 = vmatprep.subr.bf16.mxu0 0
      %716 = vmatpush1.bf16.msra.mxu0 0
      %717 = vmatprep.subr.bf16.mxu0 0
      %718 = vmatpush1.bf16.msra.mxu0 %v699
      %719 = vmatprep.subr.bf16.mxu0 0
      %720 = vmatpush1.bf16.msra.mxu0 %v698
      %721 = vmatprep.subr.bf16.mxu0 0
      %722 = vmatpush2.bf16.msra.mxu0 0
      %723 = vmatprep.subr.bf16.mxu0 0
      %724 = vmatpush2.bf16.msra.mxu0 0
      %725 = vmatprep.subr.bf16.mxu0 0
      %726 = vmatpush2.bf16.msra.mxu0 0
      %727 = vmatprep.subr.bf16.mxu0 0
      %728 = vmatpush2.bf16.msra.mxu0 0
      %729 = vmatprep.subr.bf16.mxu0 0
      %730 = vmatpush2.bf16.msra.mxu0 0
      %731 = vmatprep.subr.bf16.mxu0 0
      %732 = vmatpush2.bf16.msra.mxu0 0
      %733 = vmatprep.subr.bf16.mxu0 0
      %734 = vmatpush2.bf16.msra.mxu0 0
      %735 = vmatprep.subr.bf16.mxu0 0
      %736 = vmatpush2.bf16.msra.mxu0 0
      %737 = vmatprep.mubr.bf16.mxu0 0
      %738 = vmatmul.mubr.bf16.gmra.mxu0 %v703
      %v739 = vpop.f32.mrf.mxu0
      %v740 = vadd.f32 %v689, %v739
      %v741 = vpop.f32.mrf.mxu0
      %v742 = vpop.f32.mrf.mxu0
      %v743 = vadd.f32 %v689, %v742
      %v744 = vpop.f32.mrf.mxu0
      %745 = vdwg.mxu0
      %s746 = scalar_lea.vmem %s4, 128
      %v747 = vld [vmem:[%s746] sm:$0xf]
      %v748 = vld [vmem:[%s746 + $0x4] sm:$0xf]
      %v749 = vld [vmem:[%s746 + $0x8] sm:$0xf]
      %v750 = vld [vmem:[%s746 + $0xc] sm:$0xf]
      %s751 = scalar_lea.vmem %s5, 8
      %v752 = vld [vmem:[%s751] sm:$0x1]
      %v753 = vunpack.c.l.bf16 %v752
      %v754 = vlaneseq
      %v755 = vshrl.u32 %v754, 7
      %v756 = vsub.s32 0, %v755
      %v757 = vrot.slane %v753, %v756
      %v762 = vunpack.c.l.b16 %v747
      %v763 = vunpack.c.l.b16 %v748
      %v764 = vunpack.c.l.b16 %v749
      %v765 = vunpack.c.l.b16 %v750
      %v766 = vpack.c.b16 %v763, %v762
      %v767 = vpack.c.b16 %v765, %v764
      %770 = vmatprep.subr.bf16.mxu0 0
      %771 = vmatpush1.bf16.msra.mxu0 0
      %772 = vmatprep.subr.bf16.mxu0 0
      %773 = vmatpush1.bf16.msra.mxu0 0
      %774 = vmatprep.subr.bf16.mxu0 0
      %775 = vmatpush1.bf16.msra.mxu0 0
      %776 = vmatprep.subr.bf16.mxu0 0
      %777 = vmatpush1.bf16.msra.mxu0 0
      %778 = vmatprep.subr.bf16.mxu0 0
      %779 = vmatpush1.bf16.msra.mxu0 0
      %780 = vmatprep.subr.bf16.mxu0 0
      %781 = vmatpush1.bf16.msra.mxu0 0
      %782 = vmatprep.subr.bf16.mxu0 0
      %783 = vmatpush1.bf16.msra.mxu0 %v767
      %784 = vmatprep.subr.bf16.mxu0 0
      %785 = vmatpush1.bf16.msra.mxu0 %v766
      %786 = vmatprep.subr.bf16.mxu0 0
      %787 = vmatpush2.bf16.msra.mxu0 0
      %788 = vmatprep.subr.bf16.mxu0 0
      %789 = vmatpush2.bf16.msra.mxu0 0
      %790 = vmatprep.subr.bf16.mxu0 0
      %791 = vmatpush2.bf16.msra.mxu0 0
      %792 = vmatprep.subr.bf16.mxu0 0
      %793 = vmatpush2.bf16.msra.mxu0 0
      %794 = vmatprep.subr.bf16.mxu0 0
      %795 = vmatpush2.bf16.msra.mxu0 0
      %796 = vmatprep.subr.bf16.mxu0 0
      %797 = vmatpush2.bf16.msra.mxu0 0
      %798 = vmatprep.subr.bf16.mxu0 0
      %799 = vmatpush2.bf16.msra.mxu0 0
      %800 = vmatprep.subr.bf16.mxu0 0
      %801 = vmatpush2.bf16.msra.mxu0 0
      %802 = vmatprep.mubr.bf16.mxu0 0
      %803 = vmatmul.mubr.bf16.gmra.mxu0 %v703
      %v804 = vpop.f32.mrf.mxu0
      %v805 = vadd.f32 %v757, %v804
      %v806 = vpop.f32.mrf.mxu0
      %v807 = vpop.f32.mrf.mxu0
      %v808 = vadd.f32 %v757, %v807
      %v809 = vpop.f32.mrf.mxu0
      %810 = vdwg.mxu0
      %v811 = vpack.c.bf16 %v675, %v672
      %v812 = vpack.c.bf16 %v743, %v740
      %vm813 = vcmask 64512
      %v815 = vsel %vm813, %v811, 0
      %v818 = vsel %vm813, %v812, 0
      %820 = vmatprep.subr.bf16.mxu0 0
      %821 = vmatpush1.bf16.xpose.msra.mxu0 0
      %822 = vmatprep.subr.bf16.mxu0 0
      %823 = vmatpush1.bf16.xpose.msra.mxu0 0
      %824 = vmatprep.subr.bf16.mxu0 0
      %825 = vmatpush1.bf16.xpose.msra.mxu0 0
      %826 = vmatprep.subr.bf16.mxu0 0
      %827 = vmatpush1.bf16.xpose.msra.mxu0 0
      %828 = vmatprep.subr.bf16.mxu0 0
      %829 = vmatpush1.bf16.xpose.msra.mxu0 0
      %830 = vmatprep.subr.bf16.mxu0 0
      %831 = vmatpush1.bf16.xpose.msra.mxu0 0
      %832 = vmatprep.subr.bf16.mxu0 0
      %833 = vmatpush1.bf16.xpose.msra.mxu0 0
      %834 = vmatprep.subr.bf16.mxu0 0
      %835 = vmatpush1.bf16.xpose.msra.mxu0 %v818
      %836 = vmatprep.subr.bf16.mxu0 0
      %837 = vmatpush2.bf16.xpose.msra.mxu0 0
      %838 = vmatprep.subr.bf16.mxu0 0
      %839 = vmatpush2.bf16.xpose.msra.mxu0 0
      %840 = vmatprep.subr.bf16.mxu0 0
      %841 = vmatpush2.bf16.xpose.msra.mxu0 0
      %842 = vmatprep.subr.bf16.mxu0 0
      %843 = vmatpush2.bf16.xpose.msra.mxu0 0
      %844 = vmatprep.subr.bf16.mxu0 0
      %845 = vmatpush2.bf16.xpose.msra.mxu0 0
      %846 = vmatprep.subr.bf16.mxu0 0
      %847 = vmatpush2.bf16.xpose.msra.mxu0 0
      %848 = vmatprep.subr.bf16.mxu0 0
      %849 = vmatpush2.bf16.xpose.msra.mxu0 0
      %850 = vmatprep.subr.bf16.mxu0 0
      %851 = vmatpush2.bf16.xpose.msra.mxu0 0
      %852 = vmatprep.mubr.bf16.mxu0 0
      %853 = vmatmul.mubr.bf16.gmra.mxu0 %v815
      %v854 = vpop.f32.mrf.mxu0
      %v855 = vadd.f32 0.0, %v854
      %v856 = vpop.f32.mrf.mxu0
      %v857 = vpop.f32.mrf.mxu0
      %v858 = vadd.f32 0.0, %v857
      %v859 = vpop.f32.mrf.mxu0
      %860 = vdwg.mxu0
      %v861 = vmul.f32 %v855, 0.35355338
      %v862 = vmul.f32 %v858, 0.35355338
      %vm863 = vcmask 130048
      %v864 = vsel %vm863, %v861, -inf
      %865 = vmax.xlane.f32.xlu0 %v864
      %v866 = vpop.xlane.xlu0 %865
      %v867 = vsel %vm863, %v862, -inf
      %868 = vmax.xlane.f32.xlu0 %v867
      %v869 = vpop.xlane.xlu0 %868
      %v870 = vsub.f32 %v861, %v866
      %v871 = vsub.f32 %v862, %v869
      %v872 = vmul.f32 %v870, 1.442695
      %v873 = vpow.pop %v872
      %v874 = vmul.f32 %v871, 1.442695
      %v875 = vpow.pop %v874
      %v876 = vsel %vm863, %v873, 0.0
      %877 = vadd.xlane.f32.xlu0 %v876
      %v878 = vpop.xlane.xlu0 %877
      %v879 = vsel %vm863, %v875, 0.0
      %880 = vadd.xlane.f32.xlu0 %v879
      %v881 = vpop.xlane.xlu0 %880
      %v882 = vrcp.pop %v878
      %v883 = vrcp.pop %v881
      %v884 = vmul.f32 %v873, %v882
      %v885 = vmul.f32 %v875, %v883
      %v886 = vpack.c.bf16 %v885, %v884
      %v887 = vpack.c.bf16 %v808, %v805
      %v889 = vsel %vm863, %v886, 0
      %891 = vmatprep.subr.bf16.mxu0 0
      %892 = vmatpush1.bf16.msra.mxu0 0
      %893 = vmatprep.subr.bf16.mxu0 0
      %894 = vmatpush1.bf16.msra.mxu0 0
      %895 = vmatprep.subr.bf16.mxu0 0
      %896 = vmatpush1.bf16.msra.mxu0 0
      %897 = vmatprep.subr.bf16.mxu0 0
      %898 = vmatpush1.bf16.msra.mxu0 0
      %899 = vmatprep.subr.bf16.mxu0 0
      %900 = vmatpush1.bf16.msra.mxu0 0
      %901 = vmatprep.subr.bf16.mxu0 0
      %902 = vmatpush1.bf16.msra.mxu0 0
      %903 = vmatprep.subr.bf16.mxu0 0
      %904 = vmatpush1.bf16.msra.mxu0 0
      %905 = vmatprep.subr.bf16.mxu0 0
      %906 = vmatpush1.bf16.msra.mxu0 %v887
      %907 = vmatprep.subr.bf16.mxu0 0
      %908 = vmatpush2.bf16.msra.mxu0 0
      %909 = vmatprep.subr.bf16.mxu0 0
      %910 = vmatpush2.bf16.msra.mxu0 0
      %911 = vmatprep.subr.bf16.mxu0 0
      %912 = vmatpush2.bf16.msra.mxu0 0
      %913 = vmatprep.subr.bf16.mxu0 0
      %914 = vmatpush2.bf16.msra.mxu0 0
      %915 = vmatprep.subr.bf16.mxu0 0
      %916 = vmatpush2.bf16.msra.mxu0 0
      %917 = vmatprep.subr.bf16.mxu0 0
      %918 = vmatpush2.bf16.msra.mxu0 0
      %919 = vmatprep.subr.bf16.mxu0 0
      %920 = vmatpush2.bf16.msra.mxu0 0
      %921 = vmatprep.subr.bf16.mxu0 0
      %922 = vmatpush2.bf16.msra.mxu0 0
      %923 = vmatprep.mubr.bf16.mxu0 0
      %924 = vmatmul.mubr.bf16.gmra.mxu0 %v889
      %v925 = vpop.f32.mrf.mxu0
      %v926 = vadd.f32 0.0, %v925
      %v927 = vpop.f32.mrf.mxu0
      %v928 = vpop.f32.mrf.mxu0
      %v929 = vadd.f32 0.0, %v928
      %v930 = vpop.f32.mrf.mxu0
      %931 = vdwg.mxu0
      %v932 = vpack.c.bf16 %v929, %v926
      %v933 = vld [vmem:[%s6] sm:$0xf]
      %s934 = scalar_lea.vmem %s4, 16
      %v935 = vld [vmem:[%s934] sm:$0xf]
      %v936 = vld [vmem:[%s934 + $0x4] sm:$0xf]
      %v937 = vld [vmem:[%s934 + $0x8] sm:$0xf]
      %v938 = vld [vmem:[%s934 + $0xc] sm:$0xf]
      %s939 = scalar_lea.vmem %s5, 1
      %v940 = vld [vmem:[%s939] sm:$0x1]
      %v941 = vunpack.c.l.bf16 %v940
      %v942 = vlaneseq
      %v943 = vshrl.u32 %v942, 7
      %v944 = vsub.s32 0, %v943
      %v945 = vrot.slane %v941, %v944
      %v950 = vunpack.c.l.b16 %v935
      %v951 = vunpack.c.l.b16 %v936
      %v952 = vunpack.c.l.b16 %v937
      %v953 = vunpack.c.l.b16 %v938
      %v954 = vpack.c.b16 %v951, %v950
      %v955 = vpack.c.b16 %v953, %v952
      %958 = vmatprep.subr.bf16.mxu0 0
      %959 = vmatpush1.bf16.msra.mxu0 0
      %960 = vmatprep.subr.bf16.mxu0 0
      %961 = vmatpush1.bf16.msra.mxu0 0
      %962 = vmatprep.subr.bf16.mxu0 0
      %963 = vmatpush1.bf16.msra.mxu0 0
      %964 = vmatprep.subr.bf16.mxu0 0
      %965 = vmatpush1.bf16.msra.mxu0 0
      %966 = vmatprep.subr.bf16.mxu0 0
      %967 = vmatpush1.bf16.msra.mxu0 0
      %968 = vmatprep.subr.bf16.mxu0 0
      %969 = vmatpush1.bf16.msra.mxu0 0
      %970 = vmatprep.subr.bf16.mxu0 0
      %971 = vmatpush1.bf16.msra.mxu0 %v955
      %972 = vmatprep.subr.bf16.mxu0 0
      %973 = vmatpush1.bf16.msra.mxu0 %v954
      %974 = vmatprep.subr.bf16.mxu0 0
      %975 = vmatpush2.bf16.msra.mxu0 0
      %976 = vmatprep.subr.bf16.mxu0 0
      %977 = vmatpush2.bf16.msra.mxu0 0
      %978 = vmatprep.subr.bf16.mxu0 0
      %979 = vmatpush2.bf16.msra.mxu0 0
      %980 = vmatprep.subr.bf16.mxu0 0
      %981 = vmatpush2.bf16.msra.mxu0 0
      %982 = vmatprep.subr.bf16.mxu0 0
      %983 = vmatpush2.bf16.msra.mxu0 0
      %984 = vmatprep.subr.bf16.mxu0 0
      %985 = vmatpush2.bf16.msra.mxu0 0
      %986 = vmatprep.subr.bf16.mxu0 0
      %987 = vmatpush2.bf16.msra.mxu0 0
      %988 = vmatprep.subr.bf16.mxu0 0
      %989 = vmatpush2.bf16.msra.mxu0 0
      %990 = vmatprep.mubr.bf16.mxu0 0
      %991 = vmatmul.mubr.bf16.gmra.mxu0 %v635
      %v992 = vpop.f32.mrf.mxu0
      %v993 = vadd.f32 %v945, %v992
      %v994 = vpop.f32.mrf.mxu0
      %v995 = vpop.f32.mrf.mxu0
      %v996 = vadd.f32 %v945, %v995
      %v997 = vpop.f32.mrf.mxu0
      %998 = vdwg.mxu0
      %s999 = scalar_lea.vmem %s4, 80
      %v1000 = vld [vmem:[%s999] sm:$0xf]
      %v1001 = vld [vmem:[%s999 + $0x4] sm:$0xf]
      %v1002 = vld [vmem:[%s999 + $0x8] sm:$0xf]
      %v1003 = vld [vmem:[%s999 + $0xc] sm:$0xf]
      %s1004 = scalar_lea.vmem %s5, 5
      %v1005 = vld [vmem:[%s1004] sm:$0x1]
      %v1006 = vunpack.c.l.bf16 %v1005
      %v1007 = vlaneseq
      %v1008 = vshrl.u32 %v1007, 7
      %v1009 = vsub.s32 0, %v1008
      %v1010 = vrot.slane %v1006, %v1009
      %v1015 = vunpack.c.l.b16 %v1000
      %v1016 = vunpack.c.l.b16 %v1001
      %v1017 = vunpack.c.l.b16 %v1002
      %v1018 = vunpack.c.l.b16 %v1003
      %v1019 = vpack.c.b16 %v1016, %v1015
      %v1020 = vpack.c.b16 %v1018, %v1017
      %1023 = vmatprep.subr.bf16.mxu0 0
      %1024 = vmatpush1.bf16.msra.mxu0 0
      %1025 = vmatprep.subr.bf16.mxu0 0
      %1026 = vmatpush1.bf16.msra.mxu0 0
      %1027 = vmatprep.subr.bf16.mxu0 0
      %1028 = vmatpush1.bf16.msra.mxu0 0
      %1029 = vmatprep.subr.bf16.mxu0 0
      %1030 = vmatpush1.bf16.msra.mxu0 0
      %1031 = vmatprep.subr.bf16.mxu0 0
      %1032 = vmatpush1.bf16.msra.mxu0 0
      %1033 = vmatprep.subr.bf16.mxu0 0
      %1034 = vmatpush1.bf16.msra.mxu0 0
      %1035 = vmatprep.subr.bf16.mxu0 0
      %1036 = vmatpush1.bf16.msra.mxu0 %v1020
      %1037 = vmatprep.subr.bf16.mxu0 0
      %1038 = vmatpush1.bf16.msra.mxu0 %v1019
      %1039 = vmatprep.subr.bf16.mxu0 0
      %1040 = vmatpush2.bf16.msra.mxu0 0
      %1041 = vmatprep.subr.bf16.mxu0 0
      %1042 = vmatpush2.bf16.msra.mxu0 0
      %1043 = vmatprep.subr.bf16.mxu0 0
      %1044 = vmatpush2.bf16.msra.mxu0 0
      %1045 = vmatprep.subr.bf16.mxu0 0
      %1046 = vmatpush2.bf16.msra.mxu0 0
      %1047 = vmatprep.subr.bf16.mxu0 0
      %1048 = vmatpush2.bf16.msra.mxu0 0
      %1049 = vmatprep.subr.bf16.mxu0 0
      %1050 = vmatpush2.bf16.msra.mxu0 0
      %1051 = vmatprep.subr.bf16.mxu0 0
      %1052 = vmatpush2.bf16.msra.mxu0 0
      %1053 = vmatprep.subr.bf16.mxu0 0
      %1054 = vmatpush2.bf16.msra.mxu0 0
      %1055 = vmatprep.mubr.bf16.mxu0 0
      %1056 = vmatmul.mubr.bf16.gmra.mxu0 %v703
      %v1057 = vpop.f32.mrf.mxu0
      %v1058 = vadd.f32 %v1010, %v1057
      %v1059 = vpop.f32.mrf.mxu0
      %v1060 = vpop.f32.mrf.mxu0
      %v1061 = vadd.f32 %v1010, %v1060
      %v1062 = vpop.f32.mrf.mxu0
      %1063 = vdwg.mxu0
      %s1064 = scalar_lea.vmem %s4, 144
      %v1065 = vld [vmem:[%s1064] sm:$0xf]
      %v1066 = vld [vmem:[%s1064 + $0x4] sm:$0xf]
      %v1067 = vld [vmem:[%s1064 + $0x8] sm:$0xf]
      %v1068 = vld [vmem:[%s1064 + $0xc] sm:$0xf]
      %s1069 = scalar_lea.vmem %s5, 9
      %v1070 = vld [vmem:[%s1069] sm:$0x1]
      %v1071 = vunpack.c.l.bf16 %v1070
      %v1072 = vlaneseq
      %v1073 = vshrl.u32 %v1072, 7
      %v1074 = vsub.s32 0, %v1073
      %v1075 = vrot.slane %v1071, %v1074
      %v1080 = vunpack.c.l.b16 %v1065
      %v1081 = vunpack.c.l.b16 %v1066
      %v1082 = vunpack.c.l.b16 %v1067
      %v1083 = vunpack.c.l.b16 %v1068
      %v1084 = vpack.c.b16 %v1081, %v1080
      %v1085 = vpack.c.b16 %v1083, %v1082
      %1088 = vmatprep.subr.bf16.mxu0 0
      %1089 = vmatpush1.bf16.msra.mxu0 0
      %1090 = vmatprep.subr.bf16.mxu0 0
      %1091 = vmatpush1.bf16.msra.mxu0 0
      %1092 = vmatprep.subr.bf16.mxu0 0
      %1093 = vmatpush1.bf16.msra.mxu0 0
      %1094 = vmatprep.subr.bf16.mxu0 0
      %1095 = vmatpush1.bf16.msra.mxu0 0
      %1096 = vmatprep.subr.bf16.mxu0 0
      %1097 = vmatpush1.bf16.msra.mxu0 0
      %1098 = vmatprep.subr.bf16.mxu0 0
      %1099 = vmatpush1.bf16.msra.mxu0 0
      %1100 = vmatprep.subr.bf16.mxu0 0
      %1101 = vmatpush1.bf16.msra.mxu0 %v1085
      %1102 = vmatprep.subr.bf16.mxu0 0
      %1103 = vmatpush1.bf16.msra.mxu0 %v1084
      %1104 = vmatprep.subr.bf16.mxu0 0
      %1105 = vmatpush2.bf16.msra.mxu0 0
      %1106 = vmatprep.subr.bf16.mxu0 0
      %1107 = vmatpush2.bf16.msra.mxu0 0
      %1108 = vmatprep.subr.bf16.mxu0 0
      %1109 = vmatpush2.bf16.msra.mxu0 0
      %1110 = vmatprep.subr.bf16.mxu0 0
      %1111 = vmatpush2.bf16.msra.mxu0 0
      %1112 = vmatprep.subr.bf16.mxu0 0
      %1113 = vmatpush2.bf16.msra.mxu0 0
      %1114 = vmatprep.subr.bf16.mxu0 0
      %1115 = vmatpush2.bf16.msra.mxu0 0
      %1116 = vmatprep.subr.bf16.mxu0 0
      %1117 = vmatpush2.bf16.msra.mxu0 0
      %1118 = vmatprep.subr.bf16.mxu0 0
      %1119 = vmatpush2.bf16.msra.mxu0 0
      %1120 = vmatprep.mubr.bf16.mxu0 0
      %1121 = vmatmul.mubr.bf16.gmra.mxu0 %v703
      %v1122 = vpop.f32.mrf.mxu0
      %v1123 = vadd.f32 %v1075, %v1122
      %v1124 = vpop.f32.mrf.mxu0
      %v1125 = vpop.f32.mrf.mxu0
      %v1126 = vadd.f32 %v1075, %v1125
      %v1127 = vpop.f32.mrf.mxu0
      %1128 = vdwg.mxu0
      %v1129 = vpack.c.bf16 %v996, %v993
      %v1130 = vpack.c.bf16 %v1061, %v1058
      %v1132 = vsel %vm813, %v1129, 0
      %v1135 = vsel %vm813, %v1130, 0
      %1137 = vmatprep.subr.bf16.mxu0 0
      %1138 = vmatpush1.bf16.xpose.msra.mxu0 0
      %1139 = vmatprep.subr.bf16.mxu0 0
      %1140 = vmatpush1.bf16.xpose.msra.mxu0 0
      %1141 = vmatprep.subr.bf16.mxu0 0
      %1142 = vmatpush1.bf16.xpose.msra.mxu0 0
      %1143 = vmatprep.subr.bf16.mxu0 0
      %1144 = vmatpush1.bf16.xpose.msra.mxu0 0
      %1145 = vmatprep.subr.bf16.mxu0 0
      %1146 = vmatpush1.bf16.xpose.msra.mxu0 0
      %1147 = vmatprep.subr.bf16.mxu0 0
      %1148 = vmatpush1.bf16.xpose.msra.mxu0 0
      %1149 = vmatprep.subr.bf16.mxu0 0
      %1150 = vmatpush1.bf16.xpose.msra.mxu0 0
      %1151 = vmatprep.subr.bf16.mxu0 0
      %1152 = vmatpush1.bf16.xpose.msra.mxu0 %v1135
      %1153 = vmatprep.subr.bf16.mxu0 0
      %1154 = vmatpush2.bf16.xpose.msra.mxu0 0
      %1155 = vmatprep.subr.bf16.mxu0 0
      %1156 = vmatpush2.bf16.xpose.msra.mxu0 0
      %1157 = vmatprep.subr.bf16.mxu0 0
      %1158 = vmatpush2.bf16.xpose.msra.mxu0 0
      %1159 = vmatprep.subr.bf16.mxu0 0
      %1160 = vmatpush2.bf16.xpose.msra.mxu0 0
      %1161 = vmatprep.subr.bf16.mxu0 0
      %1162 = vmatpush2.bf16.xpose.msra.mxu0 0
      %1163 = vmatprep.subr.bf16.mxu0 0
      %1164 = vmatpush2.bf16.xpose.msra.mxu0 0
      %1165 = vmatprep.subr.bf16.mxu0 0
      %1166 = vmatpush2.bf16.xpose.msra.mxu0 0
      %1167 = vmatprep.subr.bf16.mxu0 0
      %1168 = vmatpush2.bf16.xpose.msra.mxu0 0
      %1169 = vmatprep.mubr.bf16.mxu0 0
      %1170 = vmatmul.mubr.bf16.gmra.mxu0 %v1132
      %v1171 = vpop.f32.mrf.mxu0
      %v1172 = vadd.f32 0.0, %v1171
      %v1173 = vpop.f32.mrf.mxu0
      %v1174 = vpop.f32.mrf.mxu0
      %v1175 = vadd.f32 0.0, %v1174
      %v1176 = vpop.f32.mrf.mxu0
      %1177 = vdwg.mxu0
      %v1178 = vmul.f32 %v1172, 0.35355338
      %v1179 = vmul.f32 %v1175, 0.35355338
      %v1180 = vsel %vm863, %v1178, -inf
      %1181 = vmax.xlane.f32.xlu0 %v1180
      %v1182 = vpop.xlane.xlu0 %1181
      %v1183 = vsel %vm863, %v1179, -inf
      %1184 = vmax.xlane.f32.xlu0 %v1183
      %v1185 = vpop.xlane.xlu0 %1184
      %v1186 = vsub.f32 %v1178, %v1182
      %v1187 = vsub.f32 %v1179, %v1185
      %v1188 = vmul.f32 %v1186, 1.442695
      %v1189 = vpow.pop %v1188
      %v1190 = vmul.f32 %v1187, 1.442695
      %v1191 = vpow.pop %v1190
      %v1192 = vsel %vm863, %v1189, 0.0
      %1193 = vadd.xlane.f32.xlu0 %v1192
      %v1194 = vpop.xlane.xlu0 %1193
      %v1195 = vsel %vm863, %v1191, 0.0
      %1196 = vadd.xlane.f32.xlu0 %v1195
      %v1197 = vpop.xlane.xlu0 %1196
      %v1198 = vrcp.pop %v1194
      %v1199 = vrcp.pop %v1197
      %v1200 = vmul.f32 %v1189, %v1198
      %v1201 = vmul.f32 %v1191, %v1199
      %v1202 = vpack.c.bf16 %v1201, %v1200
      %v1203 = vpack.c.bf16 %v1126, %v1123
      %v1205 = vsel %vm863, %v1202, 0
      %1207 = vmatprep.subr.bf16.mxu0 0
      %1208 = vmatpush1.bf16.msra.mxu0 0
      %1209 = vmatprep.subr.bf16.mxu0 0
      %1210 = vmatpush1.bf16.msra.mxu0 0
      %1211 = vmatprep.subr.bf16.mxu0 0
      %1212 = vmatpush1.bf16.msra.mxu0 0
      %1213 = vmatprep.subr.bf16.mxu0 0
      %1214 = vmatpush1.bf16.msra.mxu0 0
      %1215 = vmatprep.subr.bf16.mxu0 0
      %1216 = vmatpush1.bf16.msra.mxu0 0
      %1217 = vmatprep.subr.bf16.mxu0 0
      %1218 = vmatpush1.bf16.msra.mxu0 0
      %1219 = vmatprep.subr.bf16.mxu0 0
      %1220 = vmatpush1.bf16.msra.mxu0 0
      %1221 = vmatprep.subr.bf16.mxu0 0
      %1222 = vmatpush1.bf16.msra.mxu0 %v1203
      %1223 = vmatprep.subr.bf16.mxu0 0
      %1224 = vmatpush2.bf16.msra.mxu0 0
      %1225 = vmatprep.subr.bf16.mxu0 0
      %1226 = vmatpush2.bf16.msra.mxu0 0
      %1227 = vmatprep.subr.bf16.mxu0 0
      %1228 = vmatpush2.bf16.msra.mxu0 0
      %1229 = vmatprep.subr.bf16.mxu0 0
      %1230 = vmatpush2.bf16.msra.mxu0 0
      %1231 = vmatprep.subr.bf16.mxu0 0
      %1232 = vmatpush2.bf16.msra.mxu0 0
      %1233 = vmatprep.subr.bf16.mxu0 0
      %1234 = vmatpush2.bf16.msra.mxu0 0
      %1235 = vmatprep.subr.bf16.mxu0 0
      %1236 = vmatpush2.bf16.msra.mxu0 0
      %1237 = vmatprep.subr.bf16.mxu0 0
      %1238 = vmatpush2.bf16.msra.mxu0 0
      %1239 = vmatprep.mubr.bf16.mxu0 0
      %1240 = vmatmul.mubr.bf16.gmra.mxu0 %v1205
      %v1241 = vpop.f32.mrf.mxu0
      %v1242 = vadd.f32 0.0, %v1241
      %v1243 = vpop.f32.mrf.mxu0
      %v1244 = vpop.f32.mrf.mxu0
      %v1245 = vadd.f32 0.0, %v1244
      %v1246 = vpop.f32.mrf.mxu0
      %1247 = vdwg.mxu0
      %v1248 = vpack.c.bf16 %v1245, %v1242
      %s1249 = scalar_lea.vmem %s6, 4
      %v1250 = vld [vmem:[%s1249] sm:$0xf]
      %v1252 = vsel %vm813, %v1248, 0
      %vm1254 = vcmask 1043456
      %v1256 = vsel %vm1254, %v1250, 0
      %1258 = vmatprep.subr.bf16.mxu0 0
      %1259 = vmatpush1.bf16.msra.mxu0 0
      %1260 = vmatprep.subr.bf16.mxu0 0
      %1261 = vmatpush1.bf16.msra.mxu0 0
      %1262 = vmatprep.subr.bf16.mxu0 0
      %1263 = vmatpush1.bf16.msra.mxu0 0
      %1264 = vmatprep.subr.bf16.mxu0 0
      %1265 = vmatpush1.bf16.msra.mxu0 0
      %1266 = vmatprep.subr.bf16.mxu0 0
      %1267 = vmatpush1.bf16.msra.mxu0 0
      %1268 = vmatprep.subr.bf16.mxu0 0
      %1269 = vmatpush1.bf16.msra.mxu0 0
      %1270 = vmatprep.subr.bf16.mxu0 0
      %1271 = vmatpush1.bf16.msra.mxu0 0
      %1272 = vmatprep.subr.bf16.mxu0 0
      %1273 = vmatpush1.bf16.msra.mxu0 %v1256
      %1274 = vmatprep.subr.bf16.mxu0 0
      %1275 = vmatpush2.bf16.msra.mxu0 0
      %1276 = vmatprep.subr.bf16.mxu0 0
      %1277 = vmatpush2.bf16.msra.mxu0 0
      %1278 = vmatprep.subr.bf16.mxu0 0
      %1279 = vmatpush2.bf16.msra.mxu0 0
      %1280 = vmatprep.subr.bf16.mxu0 0
      %1281 = vmatpush2.bf16.msra.mxu0 0
      %1282 = vmatprep.subr.bf16.mxu0 0
      %1283 = vmatpush2.bf16.msra.mxu0 0
      %1284 = vmatprep.subr.bf16.mxu0 0
      %1285 = vmatpush2.bf16.msra.mxu0 0
      %1286 = vmatprep.subr.bf16.mxu0 0
      %1287 = vmatpush2.bf16.msra.mxu0 0
      %1288 = vmatprep.subr.bf16.mxu0 0
      %1289 = vmatpush2.bf16.msra.mxu0 0
      %1290 = vmatprep.mubr.bf16.mxu0 0
      %1291 = vmatmul.mubr.bf16.gmra.mxu0 %v1252
      %v1292 = vpop.f32.mrf.mxu0
      %v1293 = vadd.f32 0.0, %v1292
      %v1294 = vpop.f32.mrf.mxu0
      %v1295 = vpop.f32.mrf.mxu0
      %v1296 = vadd.f32 0.0, %v1295
      %v1297 = vpop.f32.mrf.mxu0
      %1298 = vdwg.mxu0
      %v1300 = vsel %vm813, %v932, 0
      %v1303 = vsel %vm1254, %v933, 0
      %1305 = vmatprep.subr.bf16.mxu0 0
      %1306 = vmatpush1.bf16.msra.mxu0 0
      %1307 = vmatprep.subr.bf16.mxu0 0
      %1308 = vmatpush1.bf16.msra.mxu0 0
      %1309 = vmatprep.subr.bf16.mxu0 0
      %1310 = vmatpush1.bf16.msra.mxu0 0
      %1311 = vmatprep.subr.bf16.mxu0 0
      %1312 = vmatpush1.bf16.msra.mxu0 0
      %1313 = vmatprep.subr.bf16.mxu0 0
      %1314 = vmatpush1.bf16.msra.mxu0 0
      %1315 = vmatprep.subr.bf16.mxu0 0
      %1316 = vmatpush1.bf16.msra.mxu0 0
      %1317 = vmatprep.subr.bf16.mxu0 0
      %1318 = vmatpush1.bf16.msra.mxu0 0
      %1319 = vmatprep.subr.bf16.mxu0 0
      %1320 = vmatpush1.bf16.msra.mxu0 %v1303
      %1321 = vmatprep.subr.bf16.mxu0 0
      %1322 = vmatpush2.bf16.msra.mxu0 0
      %1323 = vmatprep.subr.bf16.mxu0 0
      %1324 = vmatpush2.bf16.msra.mxu0 0
      %1325 = vmatprep.subr.bf16.mxu0 0
      %1326 = vmatpush2.bf16.msra.mxu0 0
      %1327 = vmatprep.subr.bf16.mxu0 0
      %1328 = vmatpush2.bf16.msra.mxu0 0
      %1329 = vmatprep.subr.bf16.mxu0 0
      %1330 = vmatpush2.bf16.msra.mxu0 0
      %1331 = vmatprep.subr.bf16.mxu0 0
      %1332 = vmatpush2.bf16.msra.mxu0 0
      %1333 = vmatprep.subr.bf16.mxu0 0
      %1334 = vmatpush2.bf16.msra.mxu0 0
      %1335 = vmatprep.subr.bf16.mxu0 0
      %1336 = vmatpush2.bf16.msra.mxu0 0
      %1337 = vmatprep.mubr.bf16.mxu0 0
      %1338 = vmatmul.mubr.bf16.gmra.mxu0 %v1300
      %v1339 = vpop.f32.mrf.mxu0
      %v1340 = vadd.f32 %v1293, %v1339
      %v1341 = vpop.f32.mrf.mxu0
      %v1342 = vpop.f32.mrf.mxu0
      %v1343 = vadd.f32 %v1296, %v1342
      %v1344 = vpop.f32.mrf.mxu0
      %1345 = vdwg.mxu0
      %s1346 = scalar_lea.vmem %s4, 32
      %v1347 = vld [vmem:[%s1346] sm:$0xf]
      %v1348 = vld [vmem:[%s1346 + $0x4] sm:$0xf]
      %v1349 = vld [vmem:[%s1346 + $0x8] sm:$0xf]
      %v1350 = vld [vmem:[%s1346 + $0xc] sm:$0xf]
      %s1351 = scalar_lea.vmem %s5, 2
      %v1352 = vld [vmem:[%s1351] sm:$0x1]
      %v1353 = vunpack.c.l.bf16 %v1352
      %v1354 = vlaneseq
      %v1355 = vshrl.u32 %v1354, 7
      %v1356 = vsub.s32 0, %v1355
      %v1357 = vrot.slane %v1353, %v1356
      %v1362 = vunpack.c.l.b16 %v1347
      %v1363 = vunpack.c.l.b16 %v1348
      %v1364 = vunpack.c.l.b16 %v1349
      %v1365 = vunpack.c.l.b16 %v1350
      %v1366 = vpack.c.b16 %v1363, %v1362
      %v1367 = vpack.c.b16 %v1365, %v1364
      %1370 = vmatprep.subr.bf16.mxu0 0
      %1371 = vmatpush1.bf16.msra.mxu0 0
      %1372 = vmatprep.subr.bf16.mxu0 0
      %1373 = vmatpush1.bf16.msra.mxu0 0
      %1374 = vmatprep.subr.bf16.mxu0 0
      %1375 = vmatpush1.bf16.msra.mxu0 0
      %1376 = vmatprep.subr.bf16.mxu0 0
      %1377 = vmatpush1.bf16.msra.mxu0 0
      %1378 = vmatprep.subr.bf16.mxu0 0
      %1379 = vmatpush1.bf16.msra.mxu0 0
      %1380 = vmatprep.subr.bf16.mxu0 0
      %1381 = vmatpush1.bf16.msra.mxu0 0
      %1382 = vmatprep.subr.bf16.mxu0 0
      %1383 = vmatpush1.bf16.msra.mxu0 %v1367
      %1384 = vmatprep.subr.bf16.mxu0 0
      %1385 = vmatpush1.bf16.msra.mxu0 %v1366
      %1386 = vmatprep.subr.bf16.mxu0 0
      %1387 = vmatpush2.bf16.msra.mxu0 0
      %1388 = vmatprep.subr.bf16.mxu0 0
      %1389 = vmatpush2.bf16.msra.mxu0 0
      %1390 = vmatprep.subr.bf16.mxu0 0
      %1391 = vmatpush2.bf16.msra.mxu0 0
      %1392 = vmatprep.subr.bf16.mxu0 0
      %1393 = vmatpush2.bf16.msra.mxu0 0
      %1394 = vmatprep.subr.bf16.mxu0 0
      %1395 = vmatpush2.bf16.msra.mxu0 0
      %1396 = vmatprep.subr.bf16.mxu0 0
      %1397 = vmatpush2.bf16.msra.mxu0 0
      %1398 = vmatprep.subr.bf16.mxu0 0
      %1399 = vmatpush2.bf16.msra.mxu0 0
      %1400 = vmatprep.subr.bf16.mxu0 0
      %1401 = vmatpush2.bf16.msra.mxu0 0
      %1402 = vmatprep.mubr.bf16.mxu0 0
      %1403 = vmatmul.mubr.bf16.gmra.mxu0 %v635
      %v1404 = vpop.f32.mrf.mxu0
      %v1405 = vadd.f32 %v1357, %v1404
      %v1406 = vpop.f32.mrf.mxu0
      %v1407 = vpop.f32.mrf.mxu0
      %v1408 = vadd.f32 %v1357, %v1407
      %v1409 = vpop.f32.mrf.mxu0
      %1410 = vdwg.mxu0
      %s1411 = scalar_lea.vmem %s4, 96
      %v1412 = vld [vmem:[%s1411] sm:$0xf]
      %v1413 = vld [vmem:[%s1411 + $0x4] sm:$0xf]
      %v1414 = vld [vmem:[%s1411 + $0x8] sm:$0xf]
      %v1415 = vld [vmem:[%s1411 + $0xc] sm:$0xf]
      %s1416 = scalar_lea.vmem %s5, 6
      %v1417 = vld [vmem:[%s1416] sm:$0x1]
      %v1418 = vunpack.c.l.bf16 %v1417
      %v1419 = vlaneseq
      %v1420 = vshrl.u32 %v1419, 7
      %v1421 = vsub.s32 0, %v1420
      %v1422 = vrot.slane %v1418, %v1421
      %v1427 = vunpack.c.l.b16 %v1412
      %v1428 = vunpack.c.l.b16 %v1413
      %v1429 = vunpack.c.l.b16 %v1414
      %v1430 = vunpack.c.l.b16 %v1415
      %v1431 = vpack.c.b16 %v1428, %v1427
      %v1432 = vpack.c.b16 %v1430, %v1429
      %1435 = vmatprep.subr.bf16.mxu0 0
      %1436 = vmatpush1.bf16.msra.mxu0 0
      %1437 = vmatprep.subr.bf16.mxu0 0
      %1438 = vmatpush1.bf16.msra.mxu0 0
      %1439 = vmatprep.subr.bf16.mxu0 0
      %1440 = vmatpush1.bf16.msra.mxu0 0
      %1441 = vmatprep.subr.bf16.mxu0 0
      %1442 = vmatpush1.bf16.msra.mxu0 0
      %1443 = vmatprep.subr.bf16.mxu0 0
      %1444 = vmatpush1.bf16.msra.mxu0 0
      %1445 = vmatprep.subr.bf16.mxu0 0
      %1446 = vmatpush1.bf16.msra.mxu0 0
      %1447 = vmatprep.subr.bf16.mxu0 0
      %1448 = vmatpush1.bf16.msra.mxu0 %v1432
      %1449 = vmatprep.subr.bf16.mxu0 0
      %1450 = vmatpush1.bf16.msra.mxu0 %v1431
      %1451 = vmatprep.subr.bf16.mxu0 0
      %1452 = vmatpush2.bf16.msra.mxu0 0
      %1453 = vmatprep.subr.bf16.mxu0 0
      %1454 = vmatpush2.bf16.msra.mxu0 0
      %1455 = vmatprep.subr.bf16.mxu0 0
      %1456 = vmatpush2.bf16.msra.mxu0 0
      %1457 = vmatprep.subr.bf16.mxu0 0
      %1458 = vmatpush2.bf16.msra.mxu0 0
      %1459 = vmatprep.subr.bf16.mxu0 0
      %1460 = vmatpush2.bf16.msra.mxu0 0
      %1461 = vmatprep.subr.bf16.mxu0 0
      %1462 = vmatpush2.bf16.msra.mxu0 0
      %1463 = vmatprep.subr.bf16.mxu0 0
      %1464 = vmatpush2.bf16.msra.mxu0 0
      %1465 = vmatprep.subr.bf16.mxu0 0
      %1466 = vmatpush2.bf16.msra.mxu0 0
      %1467 = vmatprep.mubr.bf16.mxu0 0
      %1468 = vmatmul.mubr.bf16.gmra.mxu0 %v703
      %v1469 = vpop.f32.mrf.mxu0
      %v1470 = vadd.f32 %v1422, %v1469
      %v1471 = vpop.f32.mrf.mxu0
      %v1472 = vpop.f32.mrf.mxu0
      %v1473 = vadd.f32 %v1422, %v1472
      %v1474 = vpop.f32.mrf.mxu0
      %1475 = vdwg.mxu0
      %s1476 = scalar_lea.vmem %s4, 160
      %v1477 = vld [vmem:[%s1476] sm:$0xf]
      %v1478 = vld [vmem:[%s1476 + $0x4] sm:$0xf]
      %v1479 = vld [vmem:[%s1476 + $0x8] sm:$0xf]
      %v1480 = vld [vmem:[%s1476 + $0xc] sm:$0xf]
      %s1481 = scalar_lea.vmem %s5, 10
      %v1482 = vld [vmem:[%s1481] sm:$0x1]
      %v1483 = vunpack.c.l.bf16 %v1482
      %v1484 = vlaneseq
      %v1485 = vshrl.u32 %v1484, 7
      %v1486 = vsub.s32 0, %v1485
      %v1487 = vrot.slane %v1483, %v1486
      %v1492 = vunpack.c.l.b16 %v1477
      %v1493 = vunpack.c.l.b16 %v1478
      %v1494 = vunpack.c.l.b16 %v1479
      %v1495 = vunpack.c.l.b16 %v1480
      %v1496 = vpack.c.b16 %v1493, %v1492
      %v1497 = vpack.c.b16 %v1495, %v1494
      %1500 = vmatprep.subr.bf16.mxu0 0
      %1501 = vmatpush1.bf16.msra.mxu0 0
      %1502 = vmatprep.subr.bf16.mxu0 0
      %1503 = vmatpush1.bf16.msra.mxu0 0
      %1504 = vmatprep.subr.bf16.mxu0 0
      %1505 = vmatpush1.bf16.msra.mxu0 0
      %1506 = vmatprep.subr.bf16.mxu0 0
      %1507 = vmatpush1.bf16.msra.mxu0 0
      %1508 = vmatprep.subr.bf16.mxu0 0
      %1509 = vmatpush1.bf16.msra.mxu0 0
      %1510 = vmatprep.subr.bf16.mxu0 0
      %1511 = vmatpush1.bf16.msra.mxu0 0
      %1512 = vmatprep.subr.bf16.mxu0 0
      %1513 = vmatpush1.bf16.msra.mxu0 %v1497
      %1514 = vmatprep.subr.bf16.mxu0 0
      %1515 = vmatpush1.bf16.msra.mxu0 %v1496
      %1516 = vmatprep.subr.bf16.mxu0 0
      %1517 = vmatpush2.bf16.msra.mxu0 0
      %1518 = vmatprep.subr.bf16.mxu0 0
      %1519 = vmatpush2.bf16.msra.mxu0 0
      %1520 = vmatprep.subr.bf16.mxu0 0
      %1521 = vmatpush2.bf16.msra.mxu0 0
      %1522 = vmatprep.subr.bf16.mxu0 0
      %1523 = vmatpush2.bf16.msra.mxu0 0
      %1524 = vmatprep.subr.bf16.mxu0 0
      %1525 = vmatpush2.bf16.msra.mxu0 0
      %1526 = vmatprep.subr.bf16.mxu0 0
      %1527 = vmatpush2.bf16.msra.mxu0 0
      %1528 = vmatprep.subr.bf16.mxu0 0
      %1529 = vmatpush2.bf16.msra.mxu0 0
      %1530 = vmatprep.subr.bf16.mxu0 0
      %1531 = vmatpush2.bf16.msra.mxu0 0
      %1532 = vmatprep.mubr.bf16.mxu0 0
      %1533 = vmatmul.mubr.bf16.gmra.mxu0 %v703
      %v1534 = vpop.f32.mrf.mxu0
      %v1535 = vadd.f32 %v1487, %v1534
      %v1536 = vpop.f32.mrf.mxu0
      %v1537 = vpop.f32.mrf.mxu0
      %v1538 = vadd.f32 %v1487, %v1537
      %v1539 = vpop.f32.mrf.mxu0
      %1540 = vdwg.mxu0
      %v1541 = vpack.c.bf16 %v1408, %v1405
      %v1542 = vpack.c.bf16 %v1473, %v1470
      %v1544 = vsel %vm813, %v1541, 0
      %v1547 = vsel %vm813, %v1542, 0
      %1549 = vmatprep.subr.bf16.mxu0 0
      %1550 = vmatpush1.bf16.xpose.msra.mxu0 0
      %1551 = vmatprep.subr.bf16.mxu0 0
      %1552 = vmatpush1.bf16.xpose.msra.mxu0 0
      %1553 = vmatprep.subr.bf16.mxu0 0
      %1554 = vmatpush1.bf16.xpose.msra.mxu0 0
      %1555 = vmatprep.subr.bf16.mxu0 0
      %1556 = vmatpush1.bf16.xpose.msra.mxu0 0
      %1557 = vmatprep.subr.bf16.mxu0 0
      %1558 = vmatpush1.bf16.xpose.msra.mxu0 0
      %1559 = vmatprep.subr.bf16.mxu0 0
      %1560 = vmatpush1.bf16.xpose.msra.mxu0 0
      %1561 = vmatprep.subr.bf16.mxu0 0
      %1562 = vmatpush1.bf16.xpose.msra.mxu0 0
      %1563 = vmatprep.subr.bf16.mxu0 0
      %1564 = vmatpush1.bf16.xpose.msra.mxu0 %v1547
      %1565 = vmatprep.subr.bf16.mxu0 0
      %1566 = vmatpush2.bf16.xpose.msra.mxu0 0
      %1567 = vmatprep.subr.bf16.mxu0 0
      %1568 = vmatpush2.bf16.xpose.msra.mxu0 0
      %1569 = vmatprep.subr.bf16.mxu0 0
      %1570 = vmatpush2.bf16.xpose.msra.mxu0 0
      %1571 = vmatprep.subr.bf16.mxu0 0
      %1572 = vmatpush2.bf16.xpose.msra.mxu0 0
      %1573 = vmatprep.subr.bf16.mxu0 0
      %1574 = vmatpush2.bf16.xpose.msra.mxu0 0
      %1575 = vmatprep.subr.bf16.mxu0 0
      %1576 = vmatpush2.bf16.xpose.msra.mxu0 0
      %1577 = vmatprep.subr.bf16.mxu0 0
      %1578 = vmatpush2.bf16.xpose.msra.mxu0 0
      %1579 = vmatprep.subr.bf16.mxu0 0
      %1580 = vmatpush2.bf16.xpose.msra.mxu0 0
      %1581 = vmatprep.mubr.bf16.mxu0 0
      %1582 = vmatmul.mubr.bf16.gmra.mxu0 %v1544
      %v1583 = vpop.f32.mrf.mxu0
      %v1584 = vadd.f32 0.0, %v1583
      %v1585 = vpop.f32.mrf.mxu0
      %v1586 = vpop.f32.mrf.mxu0
      %v1587 = vadd.f32 0.0, %v1586
      %v1588 = vpop.f32.mrf.mxu0
      %1589 = vdwg.mxu0
      %v1590 = vmul.f32 %v1584, 0.35355338
      %v1591 = vmul.f32 %v1587, 0.35355338
      %v1592 = vsel %vm863, %v1590, -inf
      %1593 = vmax.xlane.f32.xlu0 %v1592
      %v1594 = vpop.xlane.xlu0 %1593
      %v1595 = vsel %vm863, %v1591, -inf
      %1596 = vmax.xlane.f32.xlu0 %v1595
      %v1597 = vpop.xlane.xlu0 %1596
      %v1598 = vsub.f32 %v1590, %v1594
      %v1599 = vsub.f32 %v1591, %v1597
      %v1600 = vmul.f32 %v1598, 1.442695
      %v1601 = vpow.pop %v1600
      %v1602 = vmul.f32 %v1599, 1.442695
      %v1603 = vpow.pop %v1602
      %v1604 = vsel %vm863, %v1601, 0.0
      %1605 = vadd.xlane.f32.xlu0 %v1604
      %v1606 = vpop.xlane.xlu0 %1605
      %v1607 = vsel %vm863, %v1603, 0.0
      %1608 = vadd.xlane.f32.xlu0 %v1607
      %v1609 = vpop.xlane.xlu0 %1608
      %v1610 = vrcp.pop %v1606
      %v1611 = vrcp.pop %v1609
      %v1612 = vmul.f32 %v1601, %v1610
      %v1613 = vmul.f32 %v1603, %v1611
      %v1614 = vpack.c.bf16 %v1613, %v1612
      %v1615 = vpack.c.bf16 %v1538, %v1535
      %v1617 = vsel %vm863, %v1614, 0
      %1619 = vmatprep.subr.bf16.mxu0 0
      %1620 = vmatpush1.bf16.msra.mxu0 0
      %1621 = vmatprep.subr.bf16.mxu0 0
      %1622 = vmatpush1.bf16.msra.mxu0 0
      %1623 = vmatprep.subr.bf16.mxu0 0
      %1624 = vmatpush1.bf16.msra.mxu0 0
      %1625 = vmatprep.subr.bf16.mxu0 0
      %1626 = vmatpush1.bf16.msra.mxu0 0
      %1627 = vmatprep.subr.bf16.mxu0 0
      %1628 = vmatpush1.bf16.msra.mxu0 0
      %1629 = vmatprep.subr.bf16.mxu0 0
      %1630 = vmatpush1.bf16.msra.mxu0 0
      %1631 = vmatprep.subr.bf16.mxu0 0
      %1632 = vmatpush1.bf16.msra.mxu0 0
      %1633 = vmatprep.subr.bf16.mxu0 0
      %1634 = vmatpush1.bf16.msra.mxu0 %v1615
      %1635 = vmatprep.subr.bf16.mxu0 0
      %1636 = vmatpush2.bf16.msra.mxu0 0
      %1637 = vmatprep.subr.bf16.mxu0 0
      %1638 = vmatpush2.bf16.msra.mxu0 0
      %1639 = vmatprep.subr.bf16.mxu0 0
      %1640 = vmatpush2.bf16.msra.mxu0 0
      %1641 = vmatprep.subr.bf16.mxu0 0
      %1642 = vmatpush2.bf16.msra.mxu0 0
      %1643 = vmatprep.subr.bf16.mxu0 0
      %1644 = vmatpush2.bf16.msra.mxu0 0
      %1645 = vmatprep.subr.bf16.mxu0 0
      %1646 = vmatpush2.bf16.msra.mxu0 0
      %1647 = vmatprep.subr.bf16.mxu0 0
      %1648 = vmatpush2.bf16.msra.mxu0 0
      %1649 = vmatprep.subr.bf16.mxu0 0
      %1650 = vmatpush2.bf16.msra.mxu0 0
      %1651 = vmatprep.mubr.bf16.mxu0 0
      %1652 = vmatmul.mubr.bf16.gmra.mxu0 %v1617
      %v1653 = vpop.f32.mrf.mxu0
      %v1654 = vadd.f32 0.0, %v1653
      %v1655 = vpop.f32.mrf.mxu0
      %v1656 = vpop.f32.mrf.mxu0
      %v1657 = vadd.f32 0.0, %v1656
      %v1658 = vpop.f32.mrf.mxu0
      %1659 = vdwg.mxu0
      %v1660 = vpack.c.bf16 %v1657, %v1654
      %s1661 = scalar_lea.vmem %s6, 8
      %v1662 = vld [vmem:[%s1661] sm:$0xf]
      %v1664 = vsel %vm813, %v1660, 0
      %v1667 = vsel %vm1254, %v1662, 0
      %1669 = vmatprep.subr.bf16.mxu0 0
      %1670 = vmatpush1.bf16.msra.mxu0 0
      %1671 = vmatprep.subr.bf16.mxu0 0
      %1672 = vmatpush1.bf16.msra.mxu0 0
      %1673 = vmatprep.subr.bf16.mxu0 0
      %1674 = vmatpush1.bf16.msra.mxu0 0
      %1675 = vmatprep.subr.bf16.mxu0 0
      %1676 = vmatpush1.bf16.msra.mxu0 0
      %1677 = vmatprep.subr.bf16.mxu0 0
      %1678 = vmatpush1.bf16.msra.mxu0 0
      %1679 = vmatprep.subr.bf16.mxu0 0
      %1680 = vmatpush1.bf16.msra.mxu0 0
      %1681 = vmatprep.subr.bf16.mxu0 0
      %1682 = vmatpush1.bf16.msra.mxu0 0
      %1683 = vmatprep.subr.bf16.mxu0 0
      %1684 = vmatpush1.bf16.msra.mxu0 %v1667
      %1685 = vmatprep.subr.bf16.mxu0 0
      %1686 = vmatpush2.bf16.msra.mxu0 0
      %1687 = vmatprep.subr.bf16.mxu0 0
      %1688 = vmatpush2.bf16.msra.mxu0 0
      %1689 = vmatprep.subr.bf16.mxu0 0
      %1690 = vmatpush2.bf16.msra.mxu0 0
      %1691 = vmatprep.subr.bf16.mxu0 0
      %1692 = vmatpush2.bf16.msra.mxu0 0
      %1693 = vmatprep.subr.bf16.mxu0 0
      %1694 = vmatpush2.bf16.msra.mxu0 0
      %1695 = vmatprep.subr.bf16.mxu0 0
      %1696 = vmatpush2.bf16.msra.mxu0 0
      %1697 = vmatprep.subr.bf16.mxu0 0
      %1698 = vmatpush2.bf16.msra.mxu0 0
      %1699 = vmatprep.subr.bf16.mxu0 0
      %1700 = vmatpush2.bf16.msra.mxu0 0
      %1701 = vmatprep.mubr.bf16.mxu0 0
      %1702 = vmatmul.mubr.bf16.gmra.mxu0 %v1664
      %v1703 = vpop.f32.mrf.mxu0
      %v1704 = vadd.f32 0.0, %v1703
      %v1705 = vpop.f32.mrf.mxu0
      %v1706 = vpop.f32.mrf.mxu0
      %v1707 = vadd.f32 0.0, %v1706
      %v1708 = vpop.f32.mrf.mxu0
      %1709 = vdwg.mxu0
      %v1710 = vadd.f32 %v1340, %v1704
      %v1711 = vadd.f32 %v1343, %v1707
      %s1712 = scalar_lea.vmem %s4, 48
      %v1713 = vld [vmem:[%s1712] sm:$0xf]
      %v1714 = vld [vmem:[%s1712 + $0x4] sm:$0xf]
      %v1715 = vld [vmem:[%s1712 + $0x8] sm:$0xf]
      %v1716 = vld [vmem:[%s1712 + $0xc] sm:$0xf]
      %s1717 = scalar_lea.vmem %s5, 3
      %v1718 = vld [vmem:[%s1717] sm:$0x1]
      %v1719 = vunpack.c.l.bf16 %v1718
      %v1720 = vlaneseq
      %v1721 = vshrl.u32 %v1720, 7
      %v1722 = vsub.s32 0, %v1721
      %v1723 = vrot.slane %v1719, %v1722
      %v1728 = vunpack.c.l.b16 %v1713
      %v1729 = vunpack.c.l.b16 %v1714
      %v1730 = vunpack.c.l.b16 %v1715
      %v1731 = vunpack.c.l.b16 %v1716
      %v1732 = vpack.c.b16 %v1729, %v1728
      %v1733 = vpack.c.b16 %v1731, %v1730
      %1736 = vmatprep.subr.bf16.mxu0 0
      %1737 = vmatpush1.bf16.msra.mxu0 0
      %1738 = vmatprep.subr.bf16.mxu0 0
      %1739 = vmatpush1.bf16.msra.mxu0 0
      %1740 = vmatprep.subr.bf16.mxu0 0
      %1741 = vmatpush1.bf16.msra.mxu0 0
      %1742 = vmatprep.subr.bf16.mxu0 0
      %1743 = vmatpush1.bf16.msra.mxu0 0
      %1744 = vmatprep.subr.bf16.mxu0 0
      %1745 = vmatpush1.bf16.msra.mxu0 0
      %1746 = vmatprep.subr.bf16.mxu0 0
      %1747 = vmatpush1.bf16.msra.mxu0 0
      %1748 = vmatprep.subr.bf16.mxu0 0
      %1749 = vmatpush1.bf16.msra.mxu0 %v1733
      %1750 = vmatprep.subr.bf16.mxu0 0
      %1751 = vmatpush1.bf16.msra.mxu0 %v1732
      %1752 = vmatprep.subr.bf16.mxu0 0
      %1753 = vmatpush2.bf16.msra.mxu0 0
      %1754 = vmatprep.subr.bf16.mxu0 0
      %1755 = vmatpush2.bf16.msra.mxu0 0
      %1756 = vmatprep.subr.bf16.mxu0 0
      %1757 = vmatpush2.bf16.msra.mxu0 0
      %1758 = vmatprep.subr.bf16.mxu0 0
      %1759 = vmatpush2.bf16.msra.mxu0 0
      %1760 = vmatprep.subr.bf16.mxu0 0
      %1761 = vmatpush2.bf16.msra.mxu0 0
      %1762 = vmatprep.subr.bf16.mxu0 0
      %1763 = vmatpush2.bf16.msra.mxu0 0
      %1764 = vmatprep.subr.bf16.mxu0 0
      %1765 = vmatpush2.bf16.msra.mxu0 0
      %1766 = vmatprep.subr.bf16.mxu0 0
      %1767 = vmatpush2.bf16.msra.mxu0 0
      %1768 = vmatprep.mubr.bf16.mxu0 0
      %1769 = vmatmul.mubr.bf16.gmra.mxu0 %v635
      %v1770 = vpop.f32.mrf.mxu0
      %v1771 = vadd.f32 %v1723, %v1770
      %v1772 = vpop.f32.mrf.mxu0
      %v1773 = vpop.f32.mrf.mxu0
      %v1774 = vadd.f32 %v1723, %v1773
      %v1775 = vpop.f32.mrf.mxu0
      %1776 = vdwg.mxu0
      %s1777 = scalar_lea.vmem %s4, 112
      %v1778 = vld [vmem:[%s1777] sm:$0xf]
      %v1779 = vld [vmem:[%s1777 + $0x4] sm:$0xf]
      %v1780 = vld [vmem:[%s1777 + $0x8] sm:$0xf]
      %v1781 = vld [vmem:[%s1777 + $0xc] sm:$0xf]
      %s1782 = scalar_lea.vmem %s5, 7
      %v1783 = vld [vmem:[%s1782] sm:$0x1]
      %v1784 = vunpack.c.l.bf16 %v1783
      %v1785 = vlaneseq
      %v1786 = vshrl.u32 %v1785, 7
      %v1787 = vsub.s32 0, %v1786
      %v1788 = vrot.slane %v1784, %v1787
      %v1793 = vunpack.c.l.b16 %v1778
      %v1794 = vunpack.c.l.b16 %v1779
      %v1795 = vunpack.c.l.b16 %v1780
      %v1796 = vunpack.c.l.b16 %v1781
      %v1797 = vpack.c.b16 %v1794, %v1793
      %v1798 = vpack.c.b16 %v1796, %v1795
      %1801 = vmatprep.subr.bf16.mxu0 0
      %1802 = vmatpush1.bf16.msra.mxu0 0
      %1803 = vmatprep.subr.bf16.mxu0 0
      %1804 = vmatpush1.bf16.msra.mxu0 0
      %1805 = vmatprep.subr.bf16.mxu0 0
      %1806 = vmatpush1.bf16.msra.mxu0 0
      %1807 = vmatprep.subr.bf16.mxu0 0
      %1808 = vmatpush1.bf16.msra.mxu0 0
      %1809 = vmatprep.subr.bf16.mxu0 0
      %1810 = vmatpush1.bf16.msra.mxu0 0
      %1811 = vmatprep.subr.bf16.mxu0 0
      %1812 = vmatpush1.bf16.msra.mxu0 0
      %1813 = vmatprep.subr.bf16.mxu0 0
      %1814 = vmatpush1.bf16.msra.mxu0 %v1798
      %1815 = vmatprep.subr.bf16.mxu0 0
      %1816 = vmatpush1.bf16.msra.mxu0 %v1797
      %1817 = vmatprep.subr.bf16.mxu0 0
      %1818 = vmatpush2.bf16.msra.mxu0 0
      %1819 = vmatprep.subr.bf16.mxu0 0
      %1820 = vmatpush2.bf16.msra.mxu0 0
      %1821 = vmatprep.subr.bf16.mxu0 0
      %1822 = vmatpush2.bf16.msra.mxu0 0
      %1823 = vmatprep.subr.bf16.mxu0 0
      %1824 = vmatpush2.bf16.msra.mxu0 0
      %1825 = vmatprep.subr.bf16.mxu0 0
      %1826 = vmatpush2.bf16.msra.mxu0 0
      %1827 = vmatprep.subr.bf16.mxu0 0
      %1828 = vmatpush2.bf16.msra.mxu0 0
      %1829 = vmatprep.subr.bf16.mxu0 0
      %1830 = vmatpush2.bf16.msra.mxu0 0
      %1831 = vmatprep.subr.bf16.mxu0 0
      %1832 = vmatpush2.bf16.msra.mxu0 0
      %1833 = vmatprep.mubr.bf16.mxu0 0
      %1834 = vmatmul.mubr.bf16.gmra.mxu0 %v703
      %v1835 = vpop.f32.mrf.mxu0
      %v1836 = vadd.f32 %v1788, %v1835
      %v1837 = vpop.f32.mrf.mxu0
      %v1838 = vpop.f32.mrf.mxu0
      %v1839 = vadd.f32 %v1788, %v1838
      %v1840 = vpop.f32.mrf.mxu0
      %1841 = vdwg.mxu0
      %s1842 = scalar_lea.vmem %s4, 176
      %v1843 = vld [vmem:[%s1842] sm:$0xf]
      %v1844 = vld [vmem:[%s1842 + $0x4] sm:$0xf]
      %v1845 = vld [vmem:[%s1842 + $0x8] sm:$0xf]
      %v1846 = vld [vmem:[%s1842 + $0xc] sm:$0xf]
      %s1847 = scalar_lea.vmem %s5, 11
      %v1848 = vld [vmem:[%s1847] sm:$0x1]
      %v1849 = vunpack.c.l.bf16 %v1848
      %v1850 = vlaneseq
      %v1851 = vshrl.u32 %v1850, 7
      %v1852 = vsub.s32 0, %v1851
      %v1853 = vrot.slane %v1849, %v1852
      %v1858 = vunpack.c.l.b16 %v1843
      %v1859 = vunpack.c.l.b16 %v1844
      %v1860 = vunpack.c.l.b16 %v1845
      %v1861 = vunpack.c.l.b16 %v1846
      %v1862 = vpack.c.b16 %v1859, %v1858
      %v1863 = vpack.c.b16 %v1861, %v1860
      %1866 = vmatprep.subr.bf16.mxu0 0
      %1867 = vmatpush1.bf16.msra.mxu0 0
      %1868 = vmatprep.subr.bf16.mxu0 0
      %1869 = vmatpush1.bf16.msra.mxu0 0
      %1870 = vmatprep.subr.bf16.mxu0 0
      %1871 = vmatpush1.bf16.msra.mxu0 0
      %1872 = vmatprep.subr.bf16.mxu0 0
      %1873 = vmatpush1.bf16.msra.mxu0 0
      %1874 = vmatprep.subr.bf16.mxu0 0
      %1875 = vmatpush1.bf16.msra.mxu0 0
      %1876 = vmatprep.subr.bf16.mxu0 0
      %1877 = vmatpush1.bf16.msra.mxu0 0
      %1878 = vmatprep.subr.bf16.mxu0 0
      %1879 = vmatpush1.bf16.msra.mxu0 %v1863
      %1880 = vmatprep.subr.bf16.mxu0 0
      %1881 = vmatpush1.bf16.msra.mxu0 %v1862
      %1882 = vmatprep.subr.bf16.mxu0 0
      %1883 = vmatpush2.bf16.msra.mxu0 0
      %1884 = vmatprep.subr.bf16.mxu0 0
      %1885 = vmatpush2.bf16.msra.mxu0 0
      %1886 = vmatprep.subr.bf16.mxu0 0
      %1887 = vmatpush2.bf16.msra.mxu0 0
      %1888 = vmatprep.subr.bf16.mxu0 0
      %1889 = vmatpush2.bf16.msra.mxu0 0
      %1890 = vmatprep.subr.bf16.mxu0 0
      %1891 = vmatpush2.bf16.msra.mxu0 0
      %1892 = vmatprep.subr.bf16.mxu0 0
      %1893 = vmatpush2.bf16.msra.mxu0 0
      %1894 = vmatprep.subr.bf16.mxu0 0
      %1895 = vmatpush2.bf16.msra.mxu0 0
      %1896 = vmatprep.subr.bf16.mxu0 0
      %1897 = vmatpush2.bf16.msra.mxu0 0
      %1898 = vmatprep.mubr.bf16.mxu0 0
      %1899 = vmatmul.mubr.bf16.gmra.mxu0 %v703
      %v1900 = vpop.f32.mrf.mxu0
      %v1901 = vadd.f32 %v1853, %v1900
      %v1902 = vpop.f32.mrf.mxu0
      %v1903 = vpop.f32.mrf.mxu0
      %v1904 = vadd.f32 %v1853, %v1903
      %v1905 = vpop.f32.mrf.mxu0
      %1906 = vdwg.mxu0
      %v1907 = vpack.c.bf16 %v1774, %v1771
      %v1908 = vpack.c.bf16 %v1839, %v1836
      %v1910 = vsel %vm813, %v1907, 0
      %v1913 = vsel %vm813, %v1908, 0
      %1915 = vmatprep.subr.bf16.mxu0 0
      %1916 = vmatpush1.bf16.xpose.msra.mxu0 0
      %1917 = vmatprep.subr.bf16.mxu0 0
      %1918 = vmatpush1.bf16.xpose.msra.mxu0 0
      %1919 = vmatprep.subr.bf16.mxu0 0
      %1920 = vmatpush1.bf16.xpose.msra.mxu0 0
      %1921 = vmatprep.subr.bf16.mxu0 0
      %1922 = vmatpush1.bf16.xpose.msra.mxu0 0
      %1923 = vmatprep.subr.bf16.mxu0 0
      %1924 = vmatpush1.bf16.xpose.msra.mxu0 0
      %1925 = vmatprep.subr.bf16.mxu0 0
      %1926 = vmatpush1.bf16.xpose.msra.mxu0 0
      %1927 = vmatprep.subr.bf16.mxu0 0
      %1928 = vmatpush1.bf16.xpose.msra.mxu0 0
      %1929 = vmatprep.subr.bf16.mxu0 0
      %1930 = vmatpush1.bf16.xpose.msra.mxu0 %v1913
      %1931 = vmatprep.subr.bf16.mxu0 0
      %1932 = vmatpush2.bf16.xpose.msra.mxu0 0
      %1933 = vmatprep.subr.bf16.mxu0 0
      %1934 = vmatpush2.bf16.xpose.msra.mxu0 0
      %1935 = vmatprep.subr.bf16.mxu0 0
      %1936 = vmatpush2.bf16.xpose.msra.mxu0 0
      %1937 = vmatprep.subr.bf16.mxu0 0
      %1938 = vmatpush2.bf16.xpose.msra.mxu0 0
      %1939 = vmatprep.subr.bf16.mxu0 0
      %1940 = vmatpush2.bf16.xpose.msra.mxu0 0
      %1941 = vmatprep.subr.bf16.mxu0 0
      %1942 = vmatpush2.bf16.xpose.msra.mxu0 0
      %1943 = vmatprep.subr.bf16.mxu0 0
      %1944 = vmatpush2.bf16.xpose.msra.mxu0 0
      %1945 = vmatprep.subr.bf16.mxu0 0
      %1946 = vmatpush2.bf16.xpose.msra.mxu0 0
      %1947 = vmatprep.mubr.bf16.mxu0 0
      %1948 = vmatmul.mubr.bf16.gmra.mxu0 %v1910
      %v1949 = vpop.f32.mrf.mxu0
      %v1950 = vadd.f32 0.0, %v1949
      %v1951 = vpop.f32.mrf.mxu0
      %v1952 = vpop.f32.mrf.mxu0
      %v1953 = vadd.f32 0.0, %v1952
      %v1954 = vpop.f32.mrf.mxu0
      %1955 = vdwg.mxu0
      %v1956 = vmul.f32 %v1950, 0.35355338
      %v1957 = vmul.f32 %v1953, 0.35355338
      %v1958 = vsel %vm863, %v1956, -inf
      %1959 = vmax.xlane.f32.xlu0 %v1958
      %v1960 = vpop.xlane.xlu0 %1959
      %v1961 = vsel %vm863, %v1957, -inf
      %1962 = vmax.xlane.f32.xlu0 %v1961
      %v1963 = vpop.xlane.xlu0 %1962
      %v1964 = vsub.f32 %v1956, %v1960
      %v1965 = vsub.f32 %v1957, %v1963
      %v1966 = vmul.f32 %v1964, 1.442695
      %v1967 = vpow.pop %v1966
      %v1968 = vmul.f32 %v1965, 1.442695
      %v1969 = vpow.pop %v1968
      %v1970 = vsel %vm863, %v1967, 0.0
      %1971 = vadd.xlane.f32.xlu0 %v1970
      %v1972 = vpop.xlane.xlu0 %1971
      %v1973 = vsel %vm863, %v1969, 0.0
      %1974 = vadd.xlane.f32.xlu0 %v1973
      %v1975 = vpop.xlane.xlu0 %1974
      %v1976 = vrcp.pop %v1972
      %v1977 = vrcp.pop %v1975
      %v1978 = vmul.f32 %v1967, %v1976
      %v1979 = vmul.f32 %v1969, %v1977
      %v1980 = vpack.c.bf16 %v1979, %v1978
      %v1981 = vpack.c.bf16 %v1904, %v1901
      %v1983 = vsel %vm863, %v1980, 0
      %1985 = vmatprep.subr.bf16.mxu0 0
      %1986 = vmatpush1.bf16.msra.mxu0 0
      %1987 = vmatprep.subr.bf16.mxu0 0
      %1988 = vmatpush1.bf16.msra.mxu0 0
      %1989 = vmatprep.subr.bf16.mxu0 0
      %1990 = vmatpush1.bf16.msra.mxu0 0
      %1991 = vmatprep.subr.bf16.mxu0 0
      %1992 = vmatpush1.bf16.msra.mxu0 0
      %1993 = vmatprep.subr.bf16.mxu0 0
      %1994 = vmatpush1.bf16.msra.mxu0 0
      %1995 = vmatprep.subr.bf16.mxu0 0
      %1996 = vmatpush1.bf16.msra.mxu0 0
      %1997 = vmatprep.subr.bf16.mxu0 0
      %1998 = vmatpush1.bf16.msra.mxu0 0
      %1999 = vmatprep.subr.bf16.mxu0 0
      %2000 = vmatpush1.bf16.msra.mxu0 %v1981
      %2001 = vmatprep.subr.bf16.mxu0 0
      %2002 = vmatpush2.bf16.msra.mxu0 0
      %2003 = vmatprep.subr.bf16.mxu0 0
      %2004 = vmatpush2.bf16.msra.mxu0 0
      %2005 = vmatprep.subr.bf16.mxu0 0
      %2006 = vmatpush2.bf16.msra.mxu0 0
      %2007 = vmatprep.subr.bf16.mxu0 0
      %2008 = vmatpush2.bf16.msra.mxu0 0
      %2009 = vmatprep.subr.bf16.mxu0 0
      %2010 = vmatpush2.bf16.msra.mxu0 0
      %2011 = vmatprep.subr.bf16.mxu0 0
      %2012 = vmatpush2.bf16.msra.mxu0 0
      %2013 = vmatprep.subr.bf16.mxu0 0
      %2014 = vmatpush2.bf16.msra.mxu0 0
      %2015 = vmatprep.subr.bf16.mxu0 0
      %2016 = vmatpush2.bf16.msra.mxu0 0
      %2017 = vmatprep.mubr.bf16.mxu0 0
      %2018 = vmatmul.mubr.bf16.gmra.mxu0 %v1983
      %v2019 = vpop.f32.mrf.mxu0
      %v2020 = vadd.f32 0.0, %v2019
      %v2021 = vpop.f32.mrf.mxu0
      %v2022 = vpop.f32.mrf.mxu0
      %v2023 = vadd.f32 0.0, %v2022
      %v2024 = vpop.f32.mrf.mxu0
      %2025 = vdwg.mxu0
      %v2026 = vpack.c.bf16 %v2023, %v2020
      %s2027 = scalar_lea.vmem %s6, 12
      %v2028 = vld [vmem:[%s2027] sm:$0xf]
      %v2030 = vsel %vm813, %v2026, 0
      %v2033 = vsel %vm1254, %v2028, 0
      %2035 = vmatprep.subr.bf16.mxu0 0
      %2036 = vmatpush1.bf16.msra.mxu0 0
      %2037 = vmatprep.subr.bf16.mxu0 0
      %2038 = vmatpush1.bf16.msra.mxu0 0
      %2039 = vmatprep.subr.bf16.mxu0 0
      %2040 = vmatpush1.bf16.msra.mxu0 0
      %2041 = vmatprep.subr.bf16.mxu0 0
      %2042 = vmatpush1.bf16.msra.mxu0 0
      %2043 = vmatprep.subr.bf16.mxu0 0
      %2044 = vmatpush1.bf16.msra.mxu0 0
      %2045 = vmatprep.subr.bf16.mxu0 0
      %2046 = vmatpush1.bf16.msra.mxu0 0
      %2047 = vmatprep.subr.bf16.mxu0 0
      %2048 = vmatpush1.bf16.msra.mxu0 0
      %2049 = vmatprep.subr.bf16.mxu0 0
      %2050 = vmatpush1.bf16.msra.mxu0 %v2033
      %2051 = vmatprep.subr.bf16.mxu0 0
      %2052 = vmatpush2.bf16.msra.mxu0 0
      %2053 = vmatprep.subr.bf16.mxu0 0
      %2054 = vmatpush2.bf16.msra.mxu0 0
      %2055 = vmatprep.subr.bf16.mxu0 0
      %2056 = vmatpush2.bf16.msra.mxu0 0
      %2057 = vmatprep.subr.bf16.mxu0 0
      %2058 = vmatpush2.bf16.msra.mxu0 0
      %2059 = vmatprep.subr.bf16.mxu0 0
      %2060 = vmatpush2.bf16.msra.mxu0 0
      %2061 = vmatprep.subr.bf16.mxu0 0
      %2062 = vmatpush2.bf16.msra.mxu0 0
      %2063 = vmatprep.subr.bf16.mxu0 0
      %2064 = vmatpush2.bf16.msra.mxu0 0
      %2065 = vmatprep.subr.bf16.mxu0 0
      %2066 = vmatpush2.bf16.msra.mxu0 0
      %2067 = vmatprep.mubr.bf16.mxu0 0
      %2068 = vmatmul.mubr.bf16.gmra.mxu0 %v2030
      %v2069 = vpop.f32.mrf.mxu0
      %v2070 = vadd.f32 0.0, %v2069
      %v2071 = vpop.f32.mrf.mxu0
      %v2072 = vpop.f32.mrf.mxu0
      %v2073 = vadd.f32 0.0, %v2072
      %v2074 = vpop.f32.mrf.mxu0
      %2075 = vdwg.mxu0
      %v2076 = vadd.f32 %v1710, %v2070
      %v2077 = vadd.f32 %v1711, %v2073
      %v2078 = vadd.f32 %v530, %v2076
      %v2079 = vadd.f32 %v531, %v2077
      %v2080 = vld [vmem:[%s7] sm:$0x1]
      %v2081 = vunpack.c.l.bf16 %v2080
      %v2082 = vlaneseq
      %v2083 = vshrl.u32 %v2082, 7
      %v2084 = vsub.s32 0, %v2083
      %v2085 = vrot.slane %v2081, %v2084
      %v2086 = vadd.f32 %v2078, %v2085
      %v2087 = vadd.f32 %v2079, %v2085
      %v2088 = vsel %vm536, %v2086, 0.0
      %2089 = vadd.xlane.f32.xlu0 %v2088
      %v2090 = vpop.xlane.xlu0 %2089
      %v2091 = vsel %vm536, %v2087, 0.0
      %2092 = vadd.xlane.f32.xlu0 %v2091
      %v2093 = vpop.xlane.xlu0 %2092
      %v2094 = vmul.f32 %v2090, %v543
      %v2095 = vmul.f32 %v2093, %v543
      %v2096 = vsub.f32 %v2086, %v2094
      %v2097 = vsub.f32 %v2087, %v2095
      %v2098 = vmul.f32 %v2096, %v2096
      %v2099 = vmul.f32 %v2097, %v2097
      %v2100 = vsel %vm536, %v2098, 0.0
      %2101 = vadd.xlane.f32.xlu0 %v2100
      %v2102 = vpop.xlane.xlu0 %2101
      %v2103 = vsel %vm536, %v2099, 0.0
      %2104 = vadd.xlane.f32.xlu0 %v2103
      %v2105 = vpop.xlane.xlu0 %2104
      %v2106 = vmul.f32 %v2102, %v543
      %v2107 = vmul.f32 %v2105, %v543
      %v2108 = vadd.f32 %v2106, 1e-05
      %v2109 = vadd.f32 %v2107, 1e-05
      %v2110 = vrsqrt.pop %v2108
      %v2111 = vrsqrt.pop %v2109
      %v2112 = vmul.f32 %v2096, %v2110
      %v2113 = vmul.f32 %v2097, %v2111
      %v2114 = vld [vmem:[%s8] sm:$0x1]
      %v2115 = vunpack.c.l.bf16 %v2114
      %v2116 = vlaneseq
      %v2117 = vshrl.u32 %v2116, 7
      %v2118 = vsub.s32 0, %v2117
      %v2119 = vrot.slane %v2115, %v2118
      %v2120 = vmul.f32 %v2112, %v2119
      %v2121 = vmul.f32 %v2113, %v2119
      %v2122 = vld [vmem:[%s9] sm:$0x1]
      %v2123 = vunpack.c.l.bf16 %v2122
      %v2124 = vlaneseq
      %v2125 = vshrl.u32 %v2124, 7
      %v2126 = vsub.s32 0, %v2125
      %v2127 = vrot.slane %v2123, %v2126
      %v2128 = vadd.f32 %v2120, %v2127
      %v2129 = vadd.f32 %v2121, %v2127
      %v2130 = vpack.c.bf16 %v2129, %v2128
      %v2131 = vld [vmem:[%s10] sm:$0xf]
      %v2132 = vld [vmem:[%s10 + $0x4] sm:$0xf]
      %v2133 = vld [vmem:[%s10 + $0x8] sm:$0xf]
      %v2134 = vld [vmem:[%s10 + $0xc] sm:$0xf]
      %v2135 = vld [vmem:[%s11] sm:$0x1]
      %v2136 = vunpack.c.l.bf16 %v2135
      %v2137 = vlaneseq
      %v2138 = vshrl.u32 %v2137, 7
      %v2139 = vsub.s32 0, %v2138
      %v2140 = vrot.slane %v2136, %v2139
      %v2145 = vunpack.c.l.b16 %v2131
      %v2146 = vunpack.c.l.b16 %v2132
      %v2147 = vunpack.c.l.b16 %v2133
      %v2148 = vunpack.c.l.b16 %v2134
      %v2149 = vpack.c.b16 %v2146, %v2145
      %v2150 = vpack.c.b16 %v2148, %v2147
      %v2154 = vsel %vm536, %v2130, 0
      %2156 = vmatprep.subr.bf16.mxu0 0
      %2157 = vmatpush1.bf16.msra.mxu0 0
      %2158 = vmatprep.subr.bf16.mxu0 0
      %2159 = vmatpush1.bf16.msra.mxu0 0
      %2160 = vmatprep.subr.bf16.mxu0 0
      %2161 = vmatpush1.bf16.msra.mxu0 0
      %2162 = vmatprep.subr.bf16.mxu0 0
      %2163 = vmatpush1.bf16.msra.mxu0 0
      %2164 = vmatprep.subr.bf16.mxu0 0
      %2165 = vmatpush1.bf16.msra.mxu0 0
      %2166 = vmatprep.subr.bf16.mxu0 0
      %2167 = vmatpush1.bf16.msra.mxu0 0
      %2168 = vmatprep.subr.bf16.mxu0 0
      %2169 = vmatpush1.bf16.msra.mxu0 %v2150
      %2170 = vmatprep.subr.bf16.mxu0 0
      %2171 = vmatpush1.bf16.msra.mxu0 %v2149
      %2172 = vmatprep.subr.bf16.mxu0 0
      %2173 = vmatpush2.bf16.msra.mxu0 0
      %2174 = vmatprep.subr.bf16.mxu0 0
      %2175 = vmatpush2.bf16.msra.mxu0 0
      %2176 = vmatprep.subr.bf16.mxu0 0
      %2177 = vmatpush2.bf16.msra.mxu0 0
      %2178 = vmatprep.subr.bf16.mxu0 0
      %2179 = vmatpush2.bf16.msra.mxu0 0
      %2180 = vmatprep.subr.bf16.mxu0 0
      %2181 = vmatpush2.bf16.msra.mxu0 0
      %2182 = vmatprep.subr.bf16.mxu0 0
      %2183 = vmatpush2.bf16.msra.mxu0 0
      %2184 = vmatprep.subr.bf16.mxu0 0
      %2185 = vmatpush2.bf16.msra.mxu0 0
      %2186 = vmatprep.subr.bf16.mxu0 0
      %2187 = vmatpush2.bf16.msra.mxu0 0
      %2188 = vmatprep.mubr.bf16.mxu0 0
      %2189 = vmatmul.mubr.bf16.gmra.mxu0 %v2154
      %v2190 = vpop.f32.mrf.mxu0
      %v2191 = vadd.f32 %v2140, %v2190
      %v2192 = vpop.f32.mrf.mxu0
      %v2193 = vpop.f32.mrf.mxu0
      %v2194 = vadd.f32 %v2140, %v2193
      %v2195 = vpop.f32.mrf.mxu0
      %2196 = vdwg.mxu0
      %v2197 = vmul.f32 %v2191, 0.5
      %v2198 = vmul.f32 %v2194, 0.5
      %v2199 = vmul.f32 %v2191, 0.044715
      %v2200 = vmul.f32 %v2194, 0.044715
      %v2201 = vmul.f32 %v2199, %v2191
      %v2202 = vmul.f32 %v2200, %v2194
      %v2203 = vmul.f32 %v2201, %v2191
      %v2204 = vmul.f32 %v2202, %v2194
      %v2205 = vadd.f32 %v2191, %v2203
      %v2206 = vadd.f32 %v2194, %v2204
      %v2207 = vmul.f32 %v2205, 0.7978846
      %v2208 = vmul.f32 %v2206, 0.7978846
      %v2209 = vtanh.pop %v2207
      %v2210 = vtanh.pop %v2208
      %v2211 = vadd.f32 %v2209, 1.0
      %v2212 = vadd.f32 %v2210, 1.0
      %v2213 = vmul.f32 %v2197, %v2211
      %v2214 = vmul.f32 %v2198, %v2212
      %v2215 = vpack.c.bf16 %v2214, %v2213
      %v2216 = vld [vmem:[%s12] sm:$0xf]
      %v2217 = vld [vmem:[%s12 + $0x4] sm:$0xf]
      %v2218 = vld [vmem:[%s12 + $0x8] sm:$0xf]
      %v2219 = vld [vmem:[%s12 + $0xc] sm:$0xf]
      %v2220 = vld [vmem:[%s12 + $0x10] sm:$0xf]
      %v2221 = vld [vmem:[%s12 + $0x14] sm:$0xf]
      %v2222 = vld [vmem:[%s12 + $0x18] sm:$0xf]
      %v2223 = vld [vmem:[%s12 + $0x1c] sm:$0xf]
      %v2224 = vld [vmem:[%s13] sm:$0x1]
      %v2225 = vunpack.c.l.bf16 %v2224
      %v2226 = vlaneseq
      %v2227 = vshrl.u32 %v2226, 7
      %v2228 = vsub.s32 0, %v2227
      %v2229 = vrot.slane %v2225, %v2228
      %v2238 = vunpack.c.l.b16 %v2216
      %v2239 = vunpack.c.l.b16 %v2217
      %v2240 = vunpack.c.l.b16 %v2218
      %v2241 = vunpack.c.l.b16 %v2219
      %v2242 = vunpack.c.l.b16 %v2220
      %v2243 = vunpack.c.l.b16 %v2221
      %v2244 = vunpack.c.l.b16 %v2222
      %v2245 = vunpack.c.l.b16 %v2223
      %v2246 = vpack.c.b16 %v2239, %v2238
      %v2247 = vpack.c.b16 %v2241, %v2240
      %v2248 = vpack.c.b16 %v2243, %v2242
      %v2249 = vpack.c.b16 %v2245, %v2244
      %vm2254 = vcmask 523264
      %v2256 = vsel %vm2254, %v2215, 0
      %2258 = vmatprep.subr.bf16.mxu0 0
      %2259 = vmatpush1.bf16.msra.mxu0 0
      %2260 = vmatprep.subr.bf16.mxu0 0
      %2261 = vmatpush1.bf16.msra.mxu0 0
      %2262 = vmatprep.subr.bf16.mxu0 0
      %2263 = vmatpush1.bf16.msra.mxu0 0
      %2264 = vmatprep.subr.bf16.mxu0 0
      %2265 = vmatpush1.bf16.msra.mxu0 0
      %2266 = vmatprep.subr.bf16.mxu0 0
      %2267 = vmatpush1.bf16.msra.mxu0 %v2249
      %2268 = vmatprep.subr.bf16.mxu0 0
      %2269 = vmatpush1.bf16.msra.mxu0 %v2248
      %2270 = vmatprep.subr.bf16.mxu0 0
      %2271 = vmatpush1.bf16.msra.mxu0 %v2247
      %2272 = vmatprep.subr.bf16.mxu0 0
      %2273 = vmatpush1.bf16.msra.mxu0 %v2246
      %2274 = vmatprep.subr.bf16.mxu0 0
      %2275 = vmatpush2.bf16.msra.mxu0 0
      %2276 = vmatprep.subr.bf16.mxu0 0
      %2277 = vmatpush2.bf16.msra.mxu0 0
      %2278 = vmatprep.subr.bf16.mxu0 0
      %2279 = vmatpush2.bf16.msra.mxu0 0
      %2280 = vmatprep.subr.bf16.mxu0 0
      %2281 = vmatpush2.bf16.msra.mxu0 0
      %2282 = vmatprep.subr.bf16.mxu0 0
      %2283 = vmatpush2.bf16.msra.mxu0 0
      %2284 = vmatprep.subr.bf16.mxu0 0
      %2285 = vmatpush2.bf16.msra.mxu0 0
      %2286 = vmatprep.subr.bf16.mxu0 0
      %2287 = vmatpush2.bf16.msra.mxu0 0
      %2288 = vmatprep.subr.bf16.mxu0 0
      %2289 = vmatpush2.bf16.msra.mxu0 0
      %2290 = vmatprep.mubr.bf16.mxu0 0
      %2291 = vmatmul.mubr.bf16.gmra.mxu0 %v2256
      %v2292 = vpop.f32.mrf.mxu0
      %v2293 = vadd.f32 %v2229, %v2292
      %v2294 = vpop.f32.mrf.mxu0
      %v2295 = vpop.f32.mrf.mxu0
      %v2296 = vadd.f32 %v2229, %v2295
      %v2297 = vpop.f32.mrf.mxu0
      %2298 = vdwg.mxu0
      %v2299 = vadd.f32 %v2086, %v2293
      %v2300 = vadd.f32 %v2087, %v2296
      %v2301 = vpack.c.bf16 %v2300, %v2299
      %v2303 = vunpack.c.l.b16 %v2301
      %v2304 = vunpack.c.h.b16 %v2301
      %v2305 = vpack.c.b16 %v2303, %v2303
      %v2306 = vpack.c.b16 %v2304, %v2304
      %vm2309 = vcmask 257024
      %2310 = vst.msk [vmem:[%s525] sm:$0xf] %vm2309, %v2305
      %2311 = vst.msk [vmem:[%s525 + $0x4] sm:$0xf] %vm2309, %v2306
      %s2312 = smul.u32 2, %s30
      %p2313 = scmp.lt.s32.totalorder %s29, 1
      %s2314 = scalar_select %p2313, %s29, 1
      %p2315 = scmp.lt.s32.totalorder %s2312, 1
      %s2316 = scalar_select %p2315, %s2312, 1
      %s2317 = smul.addr %s2314, 2
      %s2318 = sadd.s32 %s2316, %s2317
      %s2319 = smul.addr %s2318, 4
      %s2320 = scalar_lea.vmem %s14, %s2319
      // Predicated region
      $region77: #{vit_forward.5} parent=75 // pred_check
        %p2321 = pneg %p363
      $region78: #{vit_forward.5} parent=75 // pred_check_branch
        %2323 = sbr.rel (%p2321) target = $region80
      $region79: #{vit_forward.5} parent=75 // pred_region
        %s2324 = smul.u32 2, %s30
      $region80: #{vit_forward.5} parent=75 // pred_fallthru
        _
    $region76: #{vit_forward.5} parent=5 // pred_fallthru
      _
    %p2325 = scmp.le.s32.totalorder 2, %s20
    // Predicated region
    $region81: #{vit_forward.5} parent=5 // pred_check
      %p2326 = pneg %p2325
    $region82: #{vit_forward.5} parent=5 // pred_check_branch
      %2328 = sbr.rel (%p2326) target = $region84
    $region83: #{vit_forward.5} parent=5 // pred_region
      %s2329 = ssub.s32 %s20, 2
      // Predicated region
      $region85: #{vit_forward.5} parent=83 // pred_check
        %p2330 = pneg %p369
      $region86: #{vit_forward.5} parent=83 // pred_check_branch
        %2332 = sbr.rel (%p2330) target = $region88
      $region87: #{vit_forward.5} parent=83 // pred_region
        %s2333 = smul.u32 2, %s32
        %p2334 = scmp.lt.s32.totalorder %s31, 1
        %s2335 = scalar_select %p2334, %s31, 1
        %p2336 = scmp.lt.s32.totalorder %s2333, 1
        %s2337 = scalar_select %p2336, %s2333, 1
        %s2338 = smul.addr %s2335, 2
        %s2339 = sadd.s32 %s2337, %s2338
        %s2340 = smul.addr %s2339, 4
        %s2341 = scalar_lea.vmem %s14, %s2340
      $region88: #{vit_forward.5} parent=83 // pred_fallthru
        _
    $region84: #{vit_forward.5} parent=5 // pred_fallthru
      _
  $region6: #{vit_forward.5} parent=0 // loop_footer
    %s24 = sadd.s32 1, %s20
  $region7: #{vit_forward.5} parent=0 // loop_footer_branch
    %19 = sbr.rel target = $region3
  $region8: #{vit_forward.5} parent=0 // loop_exit
    _

</llo_original>
